<compile_context>
chip_gen: v6e
topology: v6e:2x2x1
jax: 0.10.0
libtpu: 0.0.40
codegen_flags: <defaults>
</compile_context>

<pallas_src>
import functools

import jax
import jax.numpy as jnp
from jax import lax
from jax.experimental import pallas as pl
from jax.experimental.pallas import tpu as pltpu


def _round_up(x, m):
    return -(-x // m) * m


def _pick_row_tile(H, W):
    """Largest divisor of H such that the 4 live f32 accumulators
    (4 * TH * W * 4 B) stay <= ~128 KiB (<= 32 vregs)."""
    cap = max(8, (128 * 1024) // (4 * 4 * max(W, 1)))
    if H <= cap:
        return H
    for th in range(cap, 7, -1):            # prefer sublane-aligned tiles
        if H % th == 0 and th % 8 == 0:
            return th
    for th in range(cap, 0, -1):            # fallback: any divisor
        if H % th == 0:
            return th
    return H


def _upsample_kernel(w_ref, ce_ref, co_ref, x_ref, o_ref, xpad_ref,
                     *, H, W, CI, CO, TH):
    """One (batch, row-tile) step: padded 3x3 conv + fused PixelShuffle(2).

    w_ref   : (CO*CI*9,) f32 SMEM       -- PyTorch OIHW weight, flattened.
    ce_ref  : (W, 2W) f32 VMEM          -- even-column interleave matrix (const).
    co_ref  : (W, 2W) f32 VMEM          -- odd-column interleave matrix (const).
    x_ref   : (1, CI, H, W) VMEM        -- full input image for this batch elem.
    o_ref   : (1, CO//4, TH, 2, 2W)     -- output tile; dim 3 is the row parity
                                           (merged into 2H by a free contiguous
                                           reshape in the wrapper).
    xpad_ref: (CI, TH+2, W+2) f32 VMEM  -- halo'd, zero-padded row tile.
    """
    h = pl.program_id(1)
    n_h = pl.num_programs(1)
    c_out = CO // 4
    f32 = jnp.float32

    row0 = pl.multiple_of(h * TH, TH)

    # ---- fused 'same' zero padding: write only halo + center (no full memset)
    xpad_ref[:, :, 0:1] = jnp.zeros((CI, TH + 2, 1), f32)
    xpad_ref[:, :, W + 1:W + 2] = jnp.zeros((CI, TH + 2, 1), f32)

    # center rows (always in bounds)
    xpad_ref[:, 1:TH + 1, 1:W + 1] = x_ref[0, :, pl.ds(row0, TH), :].astype(f32)

    # top halo row (zero at the image top edge)
    top_src = jnp.maximum(row0 - 1, 0)
    top_row = x_ref[0, :, pl.ds(top_src, 1), :].astype(f32)
    top_row = jnp.where(h == 0, jnp.zeros_like(top_row), top_row)
    xpad_ref[:, 0:1, 1:W + 1] = top_row

    # bottom halo row (zero at the image bottom edge)
    bot_src = jnp.minimum(row0 + TH, H - 1)
    bot_row = x_ref[0, :, pl.ds(bot_src, 1), :].astype(f32)
    bot_row = jnp.where(h == n_h - 1, jnp.zeros_like(bot_row), bot_row)
    xpad_ref[:, TH + 1:TH + 2, 1:W + 1] = bot_row

    # ---- per-PixelShuffle-group conv + epilogue (only 4 accumulators live) ---
    # 3x3 conv: shifted-slice VPU FMAs, scalar weights from SMEM.
    for c in range(c_out):
        acc = [jnp.zeros((TH, W), f32) for _ in range(4)]
        for ci in range(CI):
            for kh in range(3):
                for kw in range(3):
                    shifted = xpad_ref[ci, kh:kh + TH, kw:kw + W]      # (TH, W)
                    tap = ci * 9 + kh * 3 + kw
                    for r in range(4):
                        acc[r] = acc[r] + w_ref[(4 * c + r) * CI * 9 + tap] * shifted

        # PyTorch PixelShuffle(2): out[c, 2i+r1, 2j+r2] = y[4c + 2*r1 + r2, i, j]
        # Column interleave on the MXU with the constant 0/1 matrices; the row
        # interleave is free via the size-2 parity dim of o_ref.
        top = (jnp.dot(acc[0], ce_ref[...], preferred_element_type=f32)
               + jnp.dot(acc[1], co_ref[...], preferred_element_type=f32))
        bot = (jnp.dot(acc[2], ce_ref[...], preferred_element_type=f32)
               + jnp.dot(acc[3], co_ref[...], preferred_element_type=f32))
        o_ref[0, c, :, 0:1, :] = top[:, None, :].astype(o_ref.dtype)
        o_ref[0, c, :, 1:2, :] = bot[:, None, :].astype(o_ref.dtype)


def upsample_forward(x_nchw, weight_oihw):
    """Equivalent of Upsample(n_feat).forward(x) for NCHW input."""
    B, CI, H, W = x_nchw.shape
    CO = weight_oihw.shape[0]                     # 2 * n_feat
    assert weight_oihw.shape == (CO, CI, 3, 3)
    assert CO % 4 == 0, "PixelShuffle(2) needs conv output channels % 4 == 0"
    c_out = CO // 4

    TH = _pick_row_tile(H, W)
    n_h = H // TH

    w_flat = weight_oihw.reshape(-1).astype(jnp.float32)   # (CO*CI*9,) for SMEM

    # Constant 0/1 column-interleave matrices (built once, resident in VMEM):
    # col_even maps src col j -> dst col 2j, col_odd maps j -> 2j+1.
    src = jnp.arange(W)[:, None]
    dst = jnp.arange(2 * W)[None, :]
    col_even = (dst == 2 * src).astype(jnp.float32)
    col_odd = (dst == 2 * src + 1).astype(jnp.float32)

    kernel = functools.partial(_upsample_kernel, H=H, W=W, CI=CI, CO=CO, TH=TH)

    itemsize = x_nchw.dtype.itemsize
    out_bytes = B * c_out * (2 * H) * (2 * W) * itemsize
    in_bytes = x_nchw.size * itemsize + w_flat.size * 4 + 2 * (W * 2 * W) * 4
    conv_flops = 2 * B * H * W * 9 * CI * CO
    epi_flops = 16 * B * c_out * H * W * W        # column-interleave dots

    # VMEM budget from actual (8,128)-padded block sizes (double-buffered).
    in_blk = CI * _round_up(H, 8) * _round_up(W, 128) * itemsize
    out_blk = c_out * TH * _round_up(2, 8) * _round_up(2 * W, 128) * itemsize
    xpad_blk = CI * _round_up(TH + 2, 8) * _round_up(W + 2, 128) * 4
    const_blk = _round_up(W, 8) * _round_up(2 * W, 128) * 4
    vmem_bytes = 2 * in_blk + 2 * out_blk + xpad_blk + 2 * 2 * const_blk
    vmem_bytes = int(min(max(vmem_bytes + (8 << 20), 16 << 20), 64 << 20))

    out5 = pl.pallas_call(
        kernel,
        out_shape=jax.ShapeDtypeStruct((B, c_out, H, 2, 2 * W), x_nchw.dtype),
        grid_spec=pltpu.PrefetchScalarGridSpec(
            num_scalar_prefetch=0,
            grid=(B, n_h),
            in_specs=[
                # tiny weight lives in SMEM; read as scalars inside the kernel
                pl.BlockSpec(memory_space=pltpu.MemorySpace.SMEM),
                # constant interleave matrices: index_map ignores the grid
                pl.BlockSpec((W, 2 * W), lambda b, h: (0, 0)),
                pl.BlockSpec((W, 2 * W), lambda b, h: (0, 0)),
                # full image per batch elem; index_map ignores the row-tile
                # index so Pallas keeps the block resident (no re-DMA per tile).
                # TODO(synk): pipeline_mode=pl.Buffered(1) would halve this
                # block's VMEM footprint on v7x (it is never re-fetched).
                pl.BlockSpec((1, CI, H, W), lambda b, h: (b, 0, 0, 0)),
            ],
            out_specs=pl.BlockSpec(
                (1, c_out, TH, 2, 2 * W), lambda b, h: (b, 0, h, 0, 0)
            ),
            scratch_shapes=[pltpu.VMEM((CI, TH + 2, W + 2), jnp.float32)],
        ),
        compiler_params=pltpu.CompilerParams(
            dimension_semantics=("parallel", "parallel"),
            vmem_limit_bytes=vmem_bytes,
        ),
        cost_estimate=pl.CostEstimate(
            flops=conv_flops + epi_flops,
            transcendentals=0,
            bytes_accessed=in_bytes + out_bytes,
        ),
    )(w_flat, col_even, col_odd, x_nchw)

    # (B, c_out, H, 2, 2W) -> (B, c_out, 2H, 2W): contiguous merge, free.
    return out5.reshape(B, c_out, 2 * H, 2 * W)


def _reference_forward(x_nchw, weight_oihw):
    """Pure-JAX reference (lax conv + pixel shuffle) for verification."""
    y = lax.conv_general_dilated(
        x_nchw, weight_oihw,
        window_strides=(1, 1), padding=((1, 1), (1, 1)),
        dimension_numbers=("NCHW", "OIHW", "NCHW"),
    )
    B, CO, H, W = y.shape
    r = 2
    c_out = CO // (r * r)
    y = y.reshape(B, c_out, r, r, H, W)
    y = jnp.transpose(y, (0, 1, 4, 2, 5, 3))
    return y.reshape(B, c_out, H * r, W * r)


if __name__ == "__main__":
    key = jax.random.PRNGKey(0)
    k_x, k_w = jax.random.split(key)

    # Small shapes consistent with the module (n_feat even so PixelShuffle(2)
    # divides the 2*n_feat conv channels).
    B, n_feat, H, W = 2, 4, 16, 16

    x = jax.random.normal(k_x, (B, n_feat, H, W), dtype=jnp.float32)

    # PyTorch Conv2d default init style: uniform(-1/sqrt(fan_in), 1/sqrt(fan_in))
    fan_in = n_feat * 3 * 3
    bound = 1.0 / jnp.sqrt(jnp.float32(fan_in))
    weight = jax.random.uniform(
        k_w, (2 * n_feat, n_feat, 3, 3), dtype=jnp.float32,
        minval=-bound, maxval=bound,
    )

    out = jax.block_until_ready(upsample_forward(x, weight))
    ref = jax.block_until_ready(_reference_forward(x, weight))

    assert out.shape == (B, n_feat // 2, 2 * H, 2 * W), out.shape
    assert jnp.allclose(out, ref, rtol=1e-5, atol=1e-5), "mismatch vs reference"

    print("KERNEL_OK")
</pallas_src>

<mosaic_0001>
module attributes {stable_mosaic.version = 11 : i64} {
  func.func @_upsample_kernel(%arg0: i32, %arg1: i32, %arg2: memref<288xf32, #tpu.memory_space<smem>>, %arg3: memref<16x32xf32, #tpu.memory_space<vmem>>, %arg4: memref<16x32xf32, #tpu.memory_space<vmem>>, %arg5: memref<1x4x16x16xf32, #tpu.memory_space<vmem>>, %arg6: memref<1x2x16x2x32xf32, #tpu.memory_space<vmem>>, %arg7: memref<4x18x18xf32, #tpu.memory_space<vmem>>) attributes {dimension_semantics = [#tpu.dimension_semantics<parallel>, #tpu.dimension_semantics<parallel>], iteration_bounds = array<i64: 2, 1>, scalar_prefetch = 0 : i64, scratch_operands = 1 : i64, tpu.core_type = #tpu.core_type<tc>, window_params = [{transform_indices = @transform_0, window_bounds = array<i64: 288>}, {pipeline_mode = #tpu.pipeline_mode<synchronous>, transform_indices = @transform_1, window_bounds = array<i64: 16, 32>}, {pipeline_mode = #tpu.pipeline_mode<synchronous>, transform_indices = @transform_2, window_bounds = array<i64: 16, 32>}, {transform_indices = @transform_3, window_bounds = array<i64: 1, 4, 16, 16>}, {transform_indices = @transform_4, window_bounds = array<i64: 1, 2, 16, 2, 32>}]} {
    %c16_i32 = arith.constant 16 : i32
    %0 = arith.muli %arg1, %c16_i32 : i32
    %1 = tpu.assume_multiple %0, 16 : i32
    %cst = arith.constant 0.000000e+00 : f32
    %2 = vector.broadcast %cst : f32 to vector<4x18x1xf32>
    %c0 = arith.constant 0 : index
    %c0_0 = arith.constant 0 : index
    %c0_1 = arith.constant 0 : index
    %3 = vector.load %arg7[%c0, %c0_0, %c0_1] : memref<4x18x18xf32, #tpu.memory_space<vmem>>, vector<4x18x1xf32>
    tpu.vector_store %arg7[%c0, %c0_0, %c0_1], %2 {strides = array<i32>} : memref<4x18x18xf32, #tpu.memory_space<vmem>>, vector<4x18x1xf32>,
    %cst_2 = arith.constant 0.000000e+00 : f32
    %4 = vector.broadcast %cst_2 : f32 to vector<4x18x1xf32>
    %c0_3 = arith.constant 0 : index
    %c0_4 = arith.constant 0 : index
    %c17 = arith.constant 17 : index
    %5 = vector.load %arg7[%c0_3, %c0_4, %c17] : memref<4x18x18xf32, #tpu.memory_space<vmem>>, vector<4x18x1xf32>
    tpu.vector_store %arg7[%c0_3, %c0_4, %c17], %4 {strides = array<i32>} : memref<4x18x18xf32, #tpu.memory_space<vmem>>, vector<4x18x1xf32>,
    %c0_5 = arith.constant 0 : index
    %c0_6 = arith.constant 0 : index
    %6 = arith.index_cast %1 : i32 to index
    %c0_7 = arith.constant 0 : index
    %7 = vector.load %arg5[%c0_5, %c0_6, %6, %c0_7] : memref<1x4x16x16xf32, #tpu.memory_space<vmem>>, vector<1x4x16x16xf32>
    %8 = vector.shape_cast %7 : vector<1x4x16x16xf32> to vector<4x16x16xf32>
    %c0_8 = arith.constant 0 : index
    %c1 = arith.constant 1 : index
    %c1_9 = arith.constant 1 : index
    %9 = vector.load %arg7[%c0_8, %c1, %c1_9] : memref<4x18x18xf32, #tpu.memory_space<vmem>>, vector<4x16x16xf32>
    tpu.vector_store %arg7[%c0_8, %c1, %c1_9], %8 {strides = array<i32>} : memref<4x18x18xf32, #tpu.memory_space<vmem>>, vector<4x16x16xf32>,
    %c1_i32 = arith.constant 1 : i32
    %10 = arith.subi %1, %c1_i32 : i32
    %c0_i32 = arith.constant 0 : i32
    %11 = arith.maxsi %10, %c0_i32 : i32
    %c0_10 = arith.constant 0 : index
    %c0_11 = arith.constant 0 : index
    %12 = arith.index_cast %11 : i32 to index
    %c0_12 = arith.constant 0 : index
    %13 = vector.load %arg5[%c0_10, %c0_11, %12, %c0_12] : memref<1x4x16x16xf32, #tpu.memory_space<vmem>>, vector<1x4x1x16xf32>
    %14 = vector.shape_cast %13 : vector<1x4x1x16xf32> to vector<4x1x16xf32>
    %c0_i32_13 = arith.constant 0 : i32
    %15 = arith.cmpi eq, %arg1, %c0_i32_13 : i32
    %cst_14 = arith.constant 0.000000e+00 : f32
    %16 = vector.broadcast %cst_14 : f32 to vector<4x1x16xf32>
    %17 = arith.select %15, %16, %14 : vector<4x1x16xf32>
    %c0_15 = arith.constant 0 : index
    %c0_16 = arith.constant 0 : index
    %c1_17 = arith.constant 1 : index
    %18 = vector.load %arg7[%c0_15, %c0_16, %c1_17] : memref<4x18x18xf32, #tpu.memory_space<vmem>>, vector<4x1x16xf32>
    tpu.vector_store %arg7[%c0_15, %c0_16, %c1_17], %17 {strides = array<i32>} : memref<4x18x18xf32, #tpu.memory_space<vmem>>, vector<4x1x16xf32>,
    %c16_i32_18 = arith.constant 16 : i32
    %19 = arith.addi %1, %c16_i32_18 : i32
    %c15_i32 = arith.constant 15 : i32
    %20 = arith.minsi %19, %c15_i32 : i32
    %c0_19 = arith.constant 0 : index
    %c0_20 = arith.constant 0 : index
    %21 = arith.index_cast %20 : i32 to index
    %c0_21 = arith.constant 0 : index
    %22 = vector.load %arg5[%c0_19, %c0_20, %21, %c0_21] : memref<1x4x16x16xf32, #tpu.memory_space<vmem>>, vector<1x4x1x16xf32>
    %23 = vector.shape_cast %22 : vector<1x4x1x16xf32> to vector<4x1x16xf32>
    %c0_i32_22 = arith.constant 0 : i32
    %24 = arith.cmpi eq, %arg1, %c0_i32_22 : i32
    %cst_23 = arith.constant 0.000000e+00 : f32
    %25 = vector.broadcast %cst_23 : f32 to vector<4x1x16xf32>
    %26 = arith.select %24, %25, %23 : vector<4x1x16xf32>
    %c0_24 = arith.constant 0 : index
    %c17_25 = arith.constant 17 : index
    %c1_26 = arith.constant 1 : index
    %27 = vector.load %arg7[%c0_24, %c17_25, %c1_26] : memref<4x18x18xf32, #tpu.memory_space<vmem>>, vector<4x1x16xf32>
    tpu.vector_store %arg7[%c0_24, %c17_25, %c1_26], %26 {strides = array<i32>} : memref<4x18x18xf32, #tpu.memory_space<vmem>>, vector<4x1x16xf32>,
    %cst_27 = arith.constant 0.000000e+00 : f32
    %28 = vector.broadcast %cst_27 : f32 to vector<16x16xf32>
    %cst_28 = arith.constant 0.000000e+00 : f32
    %29 = vector.broadcast %cst_28 : f32 to vector<16x16xf32>
    %cst_29 = arith.constant 0.000000e+00 : f32
    %30 = vector.broadcast %cst_29 : f32 to vector<16x16xf32>
    %cst_30 = arith.constant 0.000000e+00 : f32
    %31 = vector.broadcast %cst_30 : f32 to vector<16x16xf32>
    %c0_31 = arith.constant 0 : index
    %c0_32 = arith.constant 0 : index
    %c0_33 = arith.constant 0 : index
    %32 = vector.load %arg7[%c0_31, %c0_32, %c0_33] : memref<4x18x18xf32, #tpu.memory_space<vmem>>, vector<1x16x16xf32>
    %33 = vector.shape_cast %32 : vector<1x16x16xf32> to vector<16x16xf32>
    %c0_34 = arith.constant 0 : index
    %34 = memref.load %arg2[%c0_34] : memref<288xf32, #tpu.memory_space<smem>>
    %35 = vector.broadcast %34 : f32 to vector<16x16xf32>
    %36 = arith.mulf %35, %33 : vector<16x16xf32>
    %37 = arith.addf %28, %36 : vector<16x16xf32>
    %c36 = arith.constant 36 : index
    %38 = memref.load %arg2[%c36] : memref<288xf32, #tpu.memory_space<smem>>
    %39 = vector.broadcast %38 : f32 to vector<16x16xf32>
    %40 = arith.mulf %39, %33 : vector<16x16xf32>
    %41 = arith.addf %29, %40 : vector<16x16xf32>
    %c72 = arith.constant 72 : index
    %42 = memref.load %arg2[%c72] : memref<288xf32, #tpu.memory_space<smem>>
    %43 = vector.broadcast %42 : f32 to vector<16x16xf32>
    %44 = arith.mulf %43, %33 : vector<16x16xf32>
    %45 = arith.addf %30, %44 : vector<16x16xf32>
    %c108 = arith.constant 108 : index
    %46 = memref.load %arg2[%c108] : memref<288xf32, #tpu.memory_space<smem>>
    %47 = vector.broadcast %46 : f32 to vector<16x16xf32>
    %48 = arith.mulf %47, %33 : vector<16x16xf32>
    %49 = arith.addf %31, %48 : vector<16x16xf32>
    %c0_35 = arith.constant 0 : index
    %c0_36 = arith.constant 0 : index
    %c1_37 = arith.constant 1 : index
    %50 = vector.load %arg7[%c0_35, %c0_36, %c1_37] : memref<4x18x18xf32, #tpu.memory_space<vmem>>, vector<1x16x16xf32>
    %51 = vector.shape_cast %50 : vector<1x16x16xf32> to vector<16x16xf32>
    %c1_38 = arith.constant 1 : index
    %52 = memref.load %arg2[%c1_38] : memref<288xf32, #tpu.memory_space<smem>>
    %53 = vector.broadcast %52 : f32 to vector<16x16xf32>
    %54 = arith.mulf %53, %51 : vector<16x16xf32>
    %55 = arith.addf %37, %54 : vector<16x16xf32>
    %c37 = arith.constant 37 : index
    %56 = memref.load %arg2[%c37] : memref<288xf32, #tpu.memory_space<smem>>
    %57 = vector.broadcast %56 : f32 to vector<16x16xf32>
    %58 = arith.mulf %57, %51 : vector<16x16xf32>
    %59 = arith.addf %41, %58 : vector<16x16xf32>
    %c73 = arith.constant 73 : index
    %60 = memref.load %arg2[%c73] : memref<288xf32, #tpu.memory_space<smem>>
    %61 = vector.broadcast %60 : f32 to vector<16x16xf32>
    %62 = arith.mulf %61, %51 : vector<16x16xf32>
    %63 = arith.addf %45, %62 : vector<16x16xf32>
    %c109 = arith.constant 109 : index
    %64 = memref.load %arg2[%c109] : memref<288xf32, #tpu.memory_space<smem>>
    %65 = vector.broadcast %64 : f32 to vector<16x16xf32>
    %66 = arith.mulf %65, %51 : vector<16x16xf32>
    %67 = arith.addf %49, %66 : vector<16x16xf32>
    %c0_39 = arith.constant 0 : index
    %c0_40 = arith.constant 0 : index
    %c2 = arith.constant 2 : index
    %68 = vector.load %arg7[%c0_39, %c0_40, %c2] : memref<4x18x18xf32, #tpu.memory_space<vmem>>, vector<1x16x16xf32>
    %69 = vector.shape_cast %68 : vector<1x16x16xf32> to vector<16x16xf32>
    %c2_41 = arith.constant 2 : index
    %70 = memref.load %arg2[%c2_41] : memref<288xf32, #tpu.memory_space<smem>>
    %71 = vector.broadcast %70 : f32 to vector<16x16xf32>
    %72 = arith.mulf %71, %69 : vector<16x16xf32>
    %73 = arith.addf %55, %72 : vector<16x16xf32>
    %c38 = arith.constant 38 : index
    %74 = memref.load %arg2[%c38] : memref<288xf32, #tpu.memory_space<smem>>
    %75 = vector.broadcast %74 : f32 to vector<16x16xf32>
    %76 = arith.mulf %75, %69 : vector<16x16xf32>
    %77 = arith.addf %59, %76 : vector<16x16xf32>
    %c74 = arith.constant 74 : index
    %78 = memref.load %arg2[%c74] : memref<288xf32, #tpu.memory_space<smem>>
    %79 = vector.broadcast %78 : f32 to vector<16x16xf32>
    %80 = arith.mulf %79, %69 : vector<16x16xf32>
    %81 = arith.addf %63, %80 : vector<16x16xf32>
    %c110 = arith.constant 110 : index
    %82 = memref.load %arg2[%c110] : memref<288xf32, #tpu.memory_space<smem>>
    %83 = vector.broadcast %82 : f32 to vector<16x16xf32>
    %84 = arith.mulf %83, %69 : vector<16x16xf32>
    %85 = arith.addf %67, %84 : vector<16x16xf32>
    %c0_42 = arith.constant 0 : index
    %c1_43 = arith.constant 1 : index
    %c0_44 = arith.constant 0 : index
    %86 = vector.load %arg7[%c0_42, %c1_43, %c0_44] : memref<4x18x18xf32, #tpu.memory_space<vmem>>, vector<1x16x16xf32>
    %87 = vector.shape_cast %86 : vector<1x16x16xf32> to vector<16x16xf32>
    %c3 = arith.constant 3 : index
    %88 = memref.load %arg2[%c3] : memref<288xf32, #tpu.memory_space<smem>>
    %89 = vector.broadcast %88 : f32 to vector<16x16xf32>
    %90 = arith.mulf %89, %87 : vector<16x16xf32>
    %91 = arith.addf %73, %90 : vector<16x16xf32>
    %c39 = arith.constant 39 : index
    %92 = memref.load %arg2[%c39] : memref<288xf32, #tpu.memory_space<smem>>
    %93 = vector.broadcast %92 : f32 to vector<16x16xf32>
    %94 = arith.mulf %93, %87 : vector<16x16xf32>
    %95 = arith.addf %77, %94 : vector<16x16xf32>
    %c75 = arith.constant 75 : index
    %96 = memref.load %arg2[%c75] : memref<288xf32, #tpu.memory_space<smem>>
    %97 = vector.broadcast %96 : f32 to vector<16x16xf32>
    %98 = arith.mulf %97, %87 : vector<16x16xf32>
    %99 = arith.addf %81, %98 : vector<16x16xf32>
    %c111 = arith.constant 111 : index
    %100 = memref.load %arg2[%c111] : memref<288xf32, #tpu.memory_space<smem>>
    %101 = vector.broadcast %100 : f32 to vector<16x16xf32>
    %102 = arith.mulf %101, %87 : vector<16x16xf32>
    %103 = arith.addf %85, %102 : vector<16x16xf32>
    %c0_45 = arith.constant 0 : index
    %c1_46 = arith.constant 1 : index
    %c1_47 = arith.constant 1 : index
    %104 = vector.load %arg7[%c0_45, %c1_46, %c1_47] : memref<4x18x18xf32, #tpu.memory_space<vmem>>, vector<1x16x16xf32>
    %105 = vector.shape_cast %104 : vector<1x16x16xf32> to vector<16x16xf32>
    %c4 = arith.constant 4 : index
    %106 = memref.load %arg2[%c4] : memref<288xf32, #tpu.memory_space<smem>>
    %107 = vector.broadcast %106 : f32 to vector<16x16xf32>
    %108 = arith.mulf %107, %105 : vector<16x16xf32>
    %109 = arith.addf %91, %108 : vector<16x16xf32>
    %c40 = arith.constant 40 : index
    %110 = memref.load %arg2[%c40] : memref<288xf32, #tpu.memory_space<smem>>
    %111 = vector.broadcast %110 : f32 to vector<16x16xf32>
    %112 = arith.mulf %111, %105 : vector<16x16xf32>
    %113 = arith.addf %95, %112 : vector<16x16xf32>
    %c76 = arith.constant 76 : index
    %114 = memref.load %arg2[%c76] : memref<288xf32, #tpu.memory_space<smem>>
    %115 = vector.broadcast %114 : f32 to vector<16x16xf32>
    %116 = arith.mulf %115, %105 : vector<16x16xf32>
    %117 = arith.addf %99, %116 : vector<16x16xf32>
    %c112 = arith.constant 112 : index
    %118 = memref.load %arg2[%c112] : memref<288xf32, #tpu.memory_space<smem>>
    %119 = vector.broadcast %118 : f32 to vector<16x16xf32>
    %120 = arith.mulf %119, %105 : vector<16x16xf32>
    %121 = arith.addf %103, %120 : vector<16x16xf32>
    %c0_48 = arith.constant 0 : index
    %c1_49 = arith.constant 1 : index
    %c2_50 = arith.constant 2 : index
    %122 = vector.load %arg7[%c0_48, %c1_49, %c2_50] : memref<4x18x18xf32, #tpu.memory_space<vmem>>, vector<1x16x16xf32>
    %123 = vector.shape_cast %122 : vector<1x16x16xf32> to vector<16x16xf32>
    %c5 = arith.constant 5 : index
    %124 = memref.load %arg2[%c5] : memref<288xf32, #tpu.memory_space<smem>>
    %125 = vector.broadcast %124 : f32 to vector<16x16xf32>
    %126 = arith.mulf %125, %123 : vector<16x16xf32>
    %127 = arith.addf %109, %126 : vector<16x16xf32>
    %c41 = arith.constant 41 : index
    %128 = memref.load %arg2[%c41] : memref<288xf32, #tpu.memory_space<smem>>
    %129 = vector.broadcast %128 : f32 to vector<16x16xf32>
    %130 = arith.mulf %129, %123 : vector<16x16xf32>
    %131 = arith.addf %113, %130 : vector<16x16xf32>
    %c77 = arith.constant 77 : index
    %132 = memref.load %arg2[%c77] : memref<288xf32, #tpu.memory_space<smem>>
    %133 = vector.broadcast %132 : f32 to vector<16x16xf32>
    %134 = arith.mulf %133, %123 : vector<16x16xf32>
    %135 = arith.addf %117, %134 : vector<16x16xf32>
    %c113 = arith.constant 113 : index
    %136 = memref.load %arg2[%c113] : memref<288xf32, #tpu.memory_space<smem>>
    %137 = vector.broadcast %136 : f32 to vector<16x16xf32>
    %138 = arith.mulf %137, %123 : vector<16x16xf32>
    %139 = arith.addf %121, %138 : vector<16x16xf32>
    %c0_51 = arith.constant 0 : index
    %c2_52 = arith.constant 2 : index
    %c0_53 = arith.constant 0 : index
    %140 = vector.load %arg7[%c0_51, %c2_52, %c0_53] : memref<4x18x18xf32, #tpu.memory_space<vmem>>, vector<1x16x16xf32>
    %141 = vector.shape_cast %140 : vector<1x16x16xf32> to vector<16x16xf32>
    %c6 = arith.constant 6 : index
    %142 = memref.load %arg2[%c6] : memref<288xf32, #tpu.memory_space<smem>>
    %143 = vector.broadcast %142 : f32 to vector<16x16xf32>
    %144 = arith.mulf %143, %141 : vector<16x16xf32>
    %145 = arith.addf %127, %144 : vector<16x16xf32>
    %c42 = arith.constant 42 : index
    %146 = memref.load %arg2[%c42] : memref<288xf32, #tpu.memory_space<smem>>
    %147 = vector.broadcast %146 : f32 to vector<16x16xf32>
    %148 = arith.mulf %147, %141 : vector<16x16xf32>
    %149 = arith.addf %131, %148 : vector<16x16xf32>
    %c78 = arith.constant 78 : index
    %150 = memref.load %arg2[%c78] : memref<288xf32, #tpu.memory_space<smem>>
    %151 = vector.broadcast %150 : f32 to vector<16x16xf32>
    %152 = arith.mulf %151, %141 : vector<16x16xf32>
    %153 = arith.addf %135, %152 : vector<16x16xf32>
    %c114 = arith.constant 114 : index
    %154 = memref.load %arg2[%c114] : memref<288xf32, #tpu.memory_space<smem>>
    %155 = vector.broadcast %154 : f32 to vector<16x16xf32>
    %156 = arith.mulf %155, %141 : vector<16x16xf32>
    %157 = arith.addf %139, %156 : vector<16x16xf32>
    %c0_54 = arith.constant 0 : index
    %c2_55 = arith.constant 2 : index
    %c1_56 = arith.constant 1 : index
    %158 = vector.load %arg7[%c0_54, %c2_55, %c1_56] : memref<4x18x18xf32, #tpu.memory_space<vmem>>, vector<1x16x16xf32>
    %159 = vector.shape_cast %158 : vector<1x16x16xf32> to vector<16x16xf32>
    %c7 = arith.constant 7 : index
    %160 = memref.load %arg2[%c7] : memref<288xf32, #tpu.memory_space<smem>>
    %161 = vector.broadcast %160 : f32 to vector<16x16xf32>
    %162 = arith.mulf %161, %159 : vector<16x16xf32>
    %163 = arith.addf %145, %162 : vector<16x16xf32>
    %c43 = arith.constant 43 : index
    %164 = memref.load %arg2[%c43] : memref<288xf32, #tpu.memory_space<smem>>
    %165 = vector.broadcast %164 : f32 to vector<16x16xf32>
    %166 = arith.mulf %165, %159 : vector<16x16xf32>
    %167 = arith.addf %149, %166 : vector<16x16xf32>
    %c79 = arith.constant 79 : index
    %168 = memref.load %arg2[%c79] : memref<288xf32, #tpu.memory_space<smem>>
    %169 = vector.broadcast %168 : f32 to vector<16x16xf32>
    %170 = arith.mulf %169, %159 : vector<16x16xf32>
    %171 = arith.addf %153, %170 : vector<16x16xf32>
    %c115 = arith.constant 115 : index
    %172 = memref.load %arg2[%c115] : memref<288xf32, #tpu.memory_space<smem>>
    %173 = vector.broadcast %172 : f32 to vector<16x16xf32>
    %174 = arith.mulf %173, %159 : vector<16x16xf32>
    %175 = arith.addf %157, %174 : vector<16x16xf32>
    %c0_57 = arith.constant 0 : index
    %c2_58 = arith.constant 2 : index
    %c2_59 = arith.constant 2 : index
    %176 = vector.load %arg7[%c0_57, %c2_58, %c2_59] : memref<4x18x18xf32, #tpu.memory_space<vmem>>, vector<1x16x16xf32>
    %177 = vector.shape_cast %176 : vector<1x16x16xf32> to vector<16x16xf32>
    %c8 = arith.constant 8 : index
    %178 = memref.load %arg2[%c8] : memref<288xf32, #tpu.memory_space<smem>>
    %179 = vector.broadcast %178 : f32 to vector<16x16xf32>
    %180 = arith.mulf %179, %177 : vector<16x16xf32>
    %181 = arith.addf %163, %180 : vector<16x16xf32>
    %c44 = arith.constant 44 : index
    %182 = memref.load %arg2[%c44] : memref<288xf32, #tpu.memory_space<smem>>
    %183 = vector.broadcast %182 : f32 to vector<16x16xf32>
    %184 = arith.mulf %183, %177 : vector<16x16xf32>
    %185 = arith.addf %167, %184 : vector<16x16xf32>
    %c80 = arith.constant 80 : index
    %186 = memref.load %arg2[%c80] : memref<288xf32, #tpu.memory_space<smem>>
    %187 = vector.broadcast %186 : f32 to vector<16x16xf32>
    %188 = arith.mulf %187, %177 : vector<16x16xf32>
    %189 = arith.addf %171, %188 : vector<16x16xf32>
    %c116 = arith.constant 116 : index
    %190 = memref.load %arg2[%c116] : memref<288xf32, #tpu.memory_space<smem>>
    %191 = vector.broadcast %190 : f32 to vector<16x16xf32>
    %192 = arith.mulf %191, %177 : vector<16x16xf32>
    %193 = arith.addf %175, %192 : vector<16x16xf32>
    %c1_60 = arith.constant 1 : index
    %c0_61 = arith.constant 0 : index
    %c0_62 = arith.constant 0 : index
    %194 = vector.load %arg7[%c1_60, %c0_61, %c0_62] : memref<4x18x18xf32, #tpu.memory_space<vmem>>, vector<1x16x16xf32>
    %195 = vector.shape_cast %194 : vector<1x16x16xf32> to vector<16x16xf32>
    %c9 = arith.constant 9 : index
    %196 = memref.load %arg2[%c9] : memref<288xf32, #tpu.memory_space<smem>>
    %197 = vector.broadcast %196 : f32 to vector<16x16xf32>
    %198 = arith.mulf %197, %195 : vector<16x16xf32>
    %199 = arith.addf %181, %198 : vector<16x16xf32>
    %c45 = arith.constant 45 : index
    %200 = memref.load %arg2[%c45] : memref<288xf32, #tpu.memory_space<smem>>
    %201 = vector.broadcast %200 : f32 to vector<16x16xf32>
    %202 = arith.mulf %201, %195 : vector<16x16xf32>
    %203 = arith.addf %185, %202 : vector<16x16xf32>
    %c81 = arith.constant 81 : index
    %204 = memref.load %arg2[%c81] : memref<288xf32, #tpu.memory_space<smem>>
    %205 = vector.broadcast %204 : f32 to vector<16x16xf32>
    %206 = arith.mulf %205, %195 : vector<16x16xf32>
    %207 = arith.addf %189, %206 : vector<16x16xf32>
    %c117 = arith.constant 117 : index
    %208 = memref.load %arg2[%c117] : memref<288xf32, #tpu.memory_space<smem>>
    %209 = vector.broadcast %208 : f32 to vector<16x16xf32>
    %210 = arith.mulf %209, %195 : vector<16x16xf32>
    %211 = arith.addf %193, %210 : vector<16x16xf32>
    %c1_63 = arith.constant 1 : index
    %c0_64 = arith.constant 0 : index
    %c1_65 = arith.constant 1 : index
    %212 = vector.load %arg7[%c1_63, %c0_64, %c1_65] : memref<4x18x18xf32, #tpu.memory_space<vmem>>, vector<1x16x16xf32>
    %213 = vector.shape_cast %212 : vector<1x16x16xf32> to vector<16x16xf32>
    %c10 = arith.constant 10 : index
    %214 = memref.load %arg2[%c10] : memref<288xf32, #tpu.memory_space<smem>>
    %215 = vector.broadcast %214 : f32 to vector<16x16xf32>
    %216 = arith.mulf %215, %213 : vector<16x16xf32>
    %217 = arith.addf %199, %216 : vector<16x16xf32>
    %c46 = arith.constant 46 : index
    %218 = memref.load %arg2[%c46] : memref<288xf32, #tpu.memory_space<smem>>
    %219 = vector.broadcast %218 : f32 to vector<16x16xf32>
    %220 = arith.mulf %219, %213 : vector<16x16xf32>
    %221 = arith.addf %203, %220 : vector<16x16xf32>
    %c82 = arith.constant 82 : index
    %222 = memref.load %arg2[%c82] : memref<288xf32, #tpu.memory_space<smem>>
    %223 = vector.broadcast %222 : f32 to vector<16x16xf32>
    %224 = arith.mulf %223, %213 : vector<16x16xf32>
    %225 = arith.addf %207, %224 : vector<16x16xf32>
    %c118 = arith.constant 118 : index
    %226 = memref.load %arg2[%c118] : memref<288xf32, #tpu.memory_space<smem>>
    %227 = vector.broadcast %226 : f32 to vector<16x16xf32>
    %228 = arith.mulf %227, %213 : vector<16x16xf32>
    %229 = arith.addf %211, %228 : vector<16x16xf32>
    %c1_66 = arith.constant 1 : index
    %c0_67 = arith.constant 0 : index
    %c2_68 = arith.constant 2 : index
    %230 = vector.load %arg7[%c1_66, %c0_67, %c2_68] : memref<4x18x18xf32, #tpu.memory_space<vmem>>, vector<1x16x16xf32>
    %231 = vector.shape_cast %230 : vector<1x16x16xf32> to vector<16x16xf32>
    %c11 = arith.constant 11 : index
    %232 = memref.load %arg2[%c11] : memref<288xf32, #tpu.memory_space<smem>>
    %233 = vector.broadcast %232 : f32 to vector<16x16xf32>
    %234 = arith.mulf %233, %231 : vector<16x16xf32>
    %235 = arith.addf %217, %234 : vector<16x16xf32>
    %c47 = arith.constant 47 : index
    %236 = memref.load %arg2[%c47] : memref<288xf32, #tpu.memory_space<smem>>
    %237 = vector.broadcast %236 : f32 to vector<16x16xf32>
    %238 = arith.mulf %237, %231 : vector<16x16xf32>
    %239 = arith.addf %221, %238 : vector<16x16xf32>
    %c83 = arith.constant 83 : index
    %240 = memref.load %arg2[%c83] : memref<288xf32, #tpu.memory_space<smem>>
    %241 = vector.broadcast %240 : f32 to vector<16x16xf32>
    %242 = arith.mulf %241, %231 : vector<16x16xf32>
    %243 = arith.addf %225, %242 : vector<16x16xf32>
    %c119 = arith.constant 119 : index
    %244 = memref.load %arg2[%c119] : memref<288xf32, #tpu.memory_space<smem>>
    %245 = vector.broadcast %244 : f32 to vector<16x16xf32>
    %246 = arith.mulf %245, %231 : vector<16x16xf32>
    %247 = arith.addf %229, %246 : vector<16x16xf32>
    %c1_69 = arith.constant 1 : index
    %c1_70 = arith.constant 1 : index
    %c0_71 = arith.constant 0 : index
    %248 = vector.load %arg7[%c1_69, %c1_70, %c0_71] : memref<4x18x18xf32, #tpu.memory_space<vmem>>, vector<1x16x16xf32>
    %249 = vector.shape_cast %248 : vector<1x16x16xf32> to vector<16x16xf32>
    %c12 = arith.constant 12 : index
    %250 = memref.load %arg2[%c12] : memref<288xf32, #tpu.memory_space<smem>>
    %251 = vector.broadcast %250 : f32 to vector<16x16xf32>
    %252 = arith.mulf %251, %249 : vector<16x16xf32>
    %253 = arith.addf %235, %252 : vector<16x16xf32>
    %c48 = arith.constant 48 : index
    %254 = memref.load %arg2[%c48] : memref<288xf32, #tpu.memory_space<smem>>
    %255 = vector.broadcast %254 : f32 to vector<16x16xf32>
    %256 = arith.mulf %255, %249 : vector<16x16xf32>
    %257 = arith.addf %239, %256 : vector<16x16xf32>
    %c84 = arith.constant 84 : index
    %258 = memref.load %arg2[%c84] : memref<288xf32, #tpu.memory_space<smem>>
    %259 = vector.broadcast %258 : f32 to vector<16x16xf32>
    %260 = arith.mulf %259, %249 : vector<16x16xf32>
    %261 = arith.addf %243, %260 : vector<16x16xf32>
    %c120 = arith.constant 120 : index
    %262 = memref.load %arg2[%c120] : memref<288xf32, #tpu.memory_space<smem>>
    %263 = vector.broadcast %262 : f32 to vector<16x16xf32>
    %264 = arith.mulf %263, %249 : vector<16x16xf32>
    %265 = arith.addf %247, %264 : vector<16x16xf32>
    %c1_72 = arith.constant 1 : index
    %c1_73 = arith.constant 1 : index
    %c1_74 = arith.constant 1 : index
    %266 = vector.load %arg7[%c1_72, %c1_73, %c1_74] : memref<4x18x18xf32, #tpu.memory_space<vmem>>, vector<1x16x16xf32>
    %267 = vector.shape_cast %266 : vector<1x16x16xf32> to vector<16x16xf32>
    %c13 = arith.constant 13 : index
    %268 = memref.load %arg2[%c13] : memref<288xf32, #tpu.memory_space<smem>>
    %269 = vector.broadcast %268 : f32 to vector<16x16xf32>
    %270 = arith.mulf %269, %267 : vector<16x16xf32>
    %271 = arith.addf %253, %270 : vector<16x16xf32>
    %c49 = arith.constant 49 : index
    %272 = memref.load %arg2[%c49] : memref<288xf32, #tpu.memory_space<smem>>
    %273 = vector.broadcast %272 : f32 to vector<16x16xf32>
    %274 = arith.mulf %273, %267 : vector<16x16xf32>
    %275 = arith.addf %257, %274 : vector<16x16xf32>
    %c85 = arith.constant 85 : index
    %276 = memref.load %arg2[%c85] : memref<288xf32, #tpu.memory_space<smem>>
    %277 = vector.broadcast %276 : f32 to vector<16x16xf32>
    %278 = arith.mulf %277, %267 : vector<16x16xf32>
    %279 = arith.addf %261, %278 : vector<16x16xf32>
    %c121 = arith.constant 121 : index
    %280 = memref.load %arg2[%c121] : memref<288xf32, #tpu.memory_space<smem>>
    %281 = vector.broadcast %280 : f32 to vector<16x16xf32>
    %282 = arith.mulf %281, %267 : vector<16x16xf32>
    %283 = arith.addf %265, %282 : vector<16x16xf32>
    %c1_75 = arith.constant 1 : index
    %c1_76 = arith.constant 1 : index
    %c2_77 = arith.constant 2 : index
    %284 = vector.load %arg7[%c1_75, %c1_76, %c2_77] : memref<4x18x18xf32, #tpu.memory_space<vmem>>, vector<1x16x16xf32>
    %285 = vector.shape_cast %284 : vector<1x16x16xf32> to vector<16x16xf32>
    %c14 = arith.constant 14 : index
    %286 = memref.load %arg2[%c14] : memref<288xf32, #tpu.memory_space<smem>>
    %287 = vector.broadcast %286 : f32 to vector<16x16xf32>
    %288 = arith.mulf %287, %285 : vector<16x16xf32>
    %289 = arith.addf %271, %288 : vector<16x16xf32>
    %c50 = arith.constant 50 : index
    %290 = memref.load %arg2[%c50] : memref<288xf32, #tpu.memory_space<smem>>
    %291 = vector.broadcast %290 : f32 to vector<16x16xf32>
    %292 = arith.mulf %291, %285 : vector<16x16xf32>
    %293 = arith.addf %275, %292 : vector<16x16xf32>
    %c86 = arith.constant 86 : index
    %294 = memref.load %arg2[%c86] : memref<288xf32, #tpu.memory_space<smem>>
    %295 = vector.broadcast %294 : f32 to vector<16x16xf32>
    %296 = arith.mulf %295, %285 : vector<16x16xf32>
    %297 = arith.addf %279, %296 : vector<16x16xf32>
    %c122 = arith.constant 122 : index
    %298 = memref.load %arg2[%c122] : memref<288xf32, #tpu.memory_space<smem>>
    %299 = vector.broadcast %298 : f32 to vector<16x16xf32>
    %300 = arith.mulf %299, %285 : vector<16x16xf32>
    %301 = arith.addf %283, %300 : vector<16x16xf32>
    %c1_78 = arith.constant 1 : index
    %c2_79 = arith.constant 2 : index
    %c0_80 = arith.constant 0 : index
    %302 = vector.load %arg7[%c1_78, %c2_79, %c0_80] : memref<4x18x18xf32, #tpu.memory_space<vmem>>, vector<1x16x16xf32>
    %303 = vector.shape_cast %302 : vector<1x16x16xf32> to vector<16x16xf32>
    %c15 = arith.constant 15 : index
    %304 = memref.load %arg2[%c15] : memref<288xf32, #tpu.memory_space<smem>>
    %305 = vector.broadcast %304 : f32 to vector<16x16xf32>
    %306 = arith.mulf %305, %303 : vector<16x16xf32>
    %307 = arith.addf %289, %306 : vector<16x16xf32>
    %c51 = arith.constant 51 : index
    %308 = memref.load %arg2[%c51] : memref<288xf32, #tpu.memory_space<smem>>
    %309 = vector.broadcast %308 : f32 to vector<16x16xf32>
    %310 = arith.mulf %309, %303 : vector<16x16xf32>
    %311 = arith.addf %293, %310 : vector<16x16xf32>
    %c87 = arith.constant 87 : index
    %312 = memref.load %arg2[%c87] : memref<288xf32, #tpu.memory_space<smem>>
    %313 = vector.broadcast %312 : f32 to vector<16x16xf32>
    %314 = arith.mulf %313, %303 : vector<16x16xf32>
    %315 = arith.addf %297, %314 : vector<16x16xf32>
    %c123 = arith.constant 123 : index
    %316 = memref.load %arg2[%c123] : memref<288xf32, #tpu.memory_space<smem>>
    %317 = vector.broadcast %316 : f32 to vector<16x16xf32>
    %318 = arith.mulf %317, %303 : vector<16x16xf32>
    %319 = arith.addf %301, %318 : vector<16x16xf32>
    %c1_81 = arith.constant 1 : index
    %c2_82 = arith.constant 2 : index
    %c1_83 = arith.constant 1 : index
    %320 = vector.load %arg7[%c1_81, %c2_82, %c1_83] : memref<4x18x18xf32, #tpu.memory_space<vmem>>, vector<1x16x16xf32>
    %321 = vector.shape_cast %320 : vector<1x16x16xf32> to vector<16x16xf32>
    %c16 = arith.constant 16 : index
    %322 = memref.load %arg2[%c16] : memref<288xf32, #tpu.memory_space<smem>>
    %323 = vector.broadcast %322 : f32 to vector<16x16xf32>
    %324 = arith.mulf %323, %321 : vector<16x16xf32>
    %325 = arith.addf %307, %324 : vector<16x16xf32>
    %c52 = arith.constant 52 : index
    %326 = memref.load %arg2[%c52] : memref<288xf32, #tpu.memory_space<smem>>
    %327 = vector.broadcast %326 : f32 to vector<16x16xf32>
    %328 = arith.mulf %327, %321 : vector<16x16xf32>
    %329 = arith.addf %311, %328 : vector<16x16xf32>
    %c88 = arith.constant 88 : index
    %330 = memref.load %arg2[%c88] : memref<288xf32, #tpu.memory_space<smem>>
    %331 = vector.broadcast %330 : f32 to vector<16x16xf32>
    %332 = arith.mulf %331, %321 : vector<16x16xf32>
    %333 = arith.addf %315, %332 : vector<16x16xf32>
    %c124 = arith.constant 124 : index
    %334 = memref.load %arg2[%c124] : memref<288xf32, #tpu.memory_space<smem>>
    %335 = vector.broadcast %334 : f32 to vector<16x16xf32>
    %336 = arith.mulf %335, %321 : vector<16x16xf32>
    %337 = arith.addf %319, %336 : vector<16x16xf32>
    %c1_84 = arith.constant 1 : index
    %c2_85 = arith.constant 2 : index
    %c2_86 = arith.constant 2 : index
    %338 = vector.load %arg7[%c1_84, %c2_85, %c2_86] : memref<4x18x18xf32, #tpu.memory_space<vmem>>, vector<1x16x16xf32>
    %339 = vector.shape_cast %338 : vector<1x16x16xf32> to vector<16x16xf32>
    %c17_87 = arith.constant 17 : index
    %340 = memref.load %arg2[%c17_87] : memref<288xf32, #tpu.memory_space<smem>>
    %341 = vector.broadcast %340 : f32 to vector<16x16xf32>
    %342 = arith.mulf %341, %339 : vector<16x16xf32>
    %343 = arith.addf %325, %342 : vector<16x16xf32>
    %c53 = arith.constant 53 : index
    %344 = memref.load %arg2[%c53] : memref<288xf32, #tpu.memory_space<smem>>
    %345 = vector.broadcast %344 : f32 to vector<16x16xf32>
    %346 = arith.mulf %345, %339 : vector<16x16xf32>
    %347 = arith.addf %329, %346 : vector<16x16xf32>
    %c89 = arith.constant 89 : index
    %348 = memref.load %arg2[%c89] : memref<288xf32, #tpu.memory_space<smem>>
    %349 = vector.broadcast %348 : f32 to vector<16x16xf32>
    %350 = arith.mulf %349, %339 : vector<16x16xf32>
    %351 = arith.addf %333, %350 : vector<16x16xf32>
    %c125 = arith.constant 125 : index
    %352 = memref.load %arg2[%c125] : memref<288xf32, #tpu.memory_space<smem>>
    %353 = vector.broadcast %352 : f32 to vector<16x16xf32>
    %354 = arith.mulf %353, %339 : vector<16x16xf32>
    %355 = arith.addf %337, %354 : vector<16x16xf32>
    %c2_88 = arith.constant 2 : index
    %c0_89 = arith.constant 0 : index
    %c0_90 = arith.constant 0 : index
    %356 = vector.load %arg7[%c2_88, %c0_89, %c0_90] : memref<4x18x18xf32, #tpu.memory_space<vmem>>, vector<1x16x16xf32>
    %357 = vector.shape_cast %356 : vector<1x16x16xf32> to vector<16x16xf32>
    %c18 = arith.constant 18 : index
    %358 = memref.load %arg2[%c18] : memref<288xf32, #tpu.memory_space<smem>>
    %359 = vector.broadcast %358 : f32 to vector<16x16xf32>
    %360 = arith.mulf %359, %357 : vector<16x16xf32>
    %361 = arith.addf %343, %360 : vector<16x16xf32>
    %c54 = arith.constant 54 : index
    %362 = memref.load %arg2[%c54] : memref<288xf32, #tpu.memory_space<smem>>
    %363 = vector.broadcast %362 : f32 to vector<16x16xf32>
    %364 = arith.mulf %363, %357 : vector<16x16xf32>
    %365 = arith.addf %347, %364 : vector<16x16xf32>
    %c90 = arith.constant 90 : index
    %366 = memref.load %arg2[%c90] : memref<288xf32, #tpu.memory_space<smem>>
    %367 = vector.broadcast %366 : f32 to vector<16x16xf32>
    %368 = arith.mulf %367, %357 : vector<16x16xf32>
    %369 = arith.addf %351, %368 : vector<16x16xf32>
    %c126 = arith.constant 126 : index
    %370 = memref.load %arg2[%c126] : memref<288xf32, #tpu.memory_space<smem>>
    %371 = vector.broadcast %370 : f32 to vector<16x16xf32>
    %372 = arith.mulf %371, %357 : vector<16x16xf32>
    %373 = arith.addf %355, %372 : vector<16x16xf32>
    %c2_91 = arith.constant 2 : index
    %c0_92 = arith.constant 0 : index
    %c1_93 = arith.constant 1 : index
    %374 = vector.load %arg7[%c2_91, %c0_92, %c1_93] : memref<4x18x18xf32, #tpu.memory_space<vmem>>, vector<1x16x16xf32>
    %375 = vector.shape_cast %374 : vector<1x16x16xf32> to vector<16x16xf32>
    %c19 = arith.constant 19 : index
    %376 = memref.load %arg2[%c19] : memref<288xf32, #tpu.memory_space<smem>>
    %377 = vector.broadcast %376 : f32 to vector<16x16xf32>
    %378 = arith.mulf %377, %375 : vector<16x16xf32>
    %379 = arith.addf %361, %378 : vector<16x16xf32>
    %c55 = arith.constant 55 : index
    %380 = memref.load %arg2[%c55] : memref<288xf32, #tpu.memory_space<smem>>
    %381 = vector.broadcast %380 : f32 to vector<16x16xf32>
    %382 = arith.mulf %381, %375 : vector<16x16xf32>
    %383 = arith.addf %365, %382 : vector<16x16xf32>
    %c91 = arith.constant 91 : index
    %384 = memref.load %arg2[%c91] : memref<288xf32, #tpu.memory_space<smem>>
    %385 = vector.broadcast %384 : f32 to vector<16x16xf32>
    %386 = arith.mulf %385, %375 : vector<16x16xf32>
    %387 = arith.addf %369, %386 : vector<16x16xf32>
    %c127 = arith.constant 127 : index
    %388 = memref.load %arg2[%c127] : memref<288xf32, #tpu.memory_space<smem>>
    %389 = vector.broadcast %388 : f32 to vector<16x16xf32>
    %390 = arith.mulf %389, %375 : vector<16x16xf32>
    %391 = arith.addf %373, %390 : vector<16x16xf32>
    %c2_94 = arith.constant 2 : index
    %c0_95 = arith.constant 0 : index
    %c2_96 = arith.constant 2 : index
    %392 = vector.load %arg7[%c2_94, %c0_95, %c2_96] : memref<4x18x18xf32, #tpu.memory_space<vmem>>, vector<1x16x16xf32>
    %393 = vector.shape_cast %392 : vector<1x16x16xf32> to vector<16x16xf32>
    %c20 = arith.constant 20 : index
    %394 = memref.load %arg2[%c20] : memref<288xf32, #tpu.memory_space<smem>>
    %395 = vector.broadcast %394 : f32 to vector<16x16xf32>
    %396 = arith.mulf %395, %393 : vector<16x16xf32>
    %397 = arith.addf %379, %396 : vector<16x16xf32>
    %c56 = arith.constant 56 : index
    %398 = memref.load %arg2[%c56] : memref<288xf32, #tpu.memory_space<smem>>
    %399 = vector.broadcast %398 : f32 to vector<16x16xf32>
    %400 = arith.mulf %399, %393 : vector<16x16xf32>
    %401 = arith.addf %383, %400 : vector<16x16xf32>
    %c92 = arith.constant 92 : index
    %402 = memref.load %arg2[%c92] : memref<288xf32, #tpu.memory_space<smem>>
    %403 = vector.broadcast %402 : f32 to vector<16x16xf32>
    %404 = arith.mulf %403, %393 : vector<16x16xf32>
    %405 = arith.addf %387, %404 : vector<16x16xf32>
    %c128 = arith.constant 128 : index
    %406 = memref.load %arg2[%c128] : memref<288xf32, #tpu.memory_space<smem>>
    %407 = vector.broadcast %406 : f32 to vector<16x16xf32>
    %408 = arith.mulf %407, %393 : vector<16x16xf32>
    %409 = arith.addf %391, %408 : vector<16x16xf32>
    %c2_97 = arith.constant 2 : index
    %c1_98 = arith.constant 1 : index
    %c0_99 = arith.constant 0 : index
    %410 = vector.load %arg7[%c2_97, %c1_98, %c0_99] : memref<4x18x18xf32, #tpu.memory_space<vmem>>, vector<1x16x16xf32>
    %411 = vector.shape_cast %410 : vector<1x16x16xf32> to vector<16x16xf32>
    %c21 = arith.constant 21 : index
    %412 = memref.load %arg2[%c21] : memref<288xf32, #tpu.memory_space<smem>>
    %413 = vector.broadcast %412 : f32 to vector<16x16xf32>
    %414 = arith.mulf %413, %411 : vector<16x16xf32>
    %415 = arith.addf %397, %414 : vector<16x16xf32>
    %c57 = arith.constant 57 : index
    %416 = memref.load %arg2[%c57] : memref<288xf32, #tpu.memory_space<smem>>
    %417 = vector.broadcast %416 : f32 to vector<16x16xf32>
    %418 = arith.mulf %417, %411 : vector<16x16xf32>
    %419 = arith.addf %401, %418 : vector<16x16xf32>
    %c93 = arith.constant 93 : index
    %420 = memref.load %arg2[%c93] : memref<288xf32, #tpu.memory_space<smem>>
    %421 = vector.broadcast %420 : f32 to vector<16x16xf32>
    %422 = arith.mulf %421, %411 : vector<16x16xf32>
    %423 = arith.addf %405, %422 : vector<16x16xf32>
    %c129 = arith.constant 129 : index
    %424 = memref.load %arg2[%c129] : memref<288xf32, #tpu.memory_space<smem>>
    %425 = vector.broadcast %424 : f32 to vector<16x16xf32>
    %426 = arith.mulf %425, %411 : vector<16x16xf32>
    %427 = arith.addf %409, %426 : vector<16x16xf32>
    %c2_100 = arith.constant 2 : index
    %c1_101 = arith.constant 1 : index
    %c1_102 = arith.constant 1 : index
    %428 = vector.load %arg7[%c2_100, %c1_101, %c1_102] : memref<4x18x18xf32, #tpu.memory_space<vmem>>, vector<1x16x16xf32>
    %429 = vector.shape_cast %428 : vector<1x16x16xf32> to vector<16x16xf32>
    %c22 = arith.constant 22 : index
    %430 = memref.load %arg2[%c22] : memref<288xf32, #tpu.memory_space<smem>>
    %431 = vector.broadcast %430 : f32 to vector<16x16xf32>
    %432 = arith.mulf %431, %429 : vector<16x16xf32>
    %433 = arith.addf %415, %432 : vector<16x16xf32>
    %c58 = arith.constant 58 : index
    %434 = memref.load %arg2[%c58] : memref<288xf32, #tpu.memory_space<smem>>
    %435 = vector.broadcast %434 : f32 to vector<16x16xf32>
    %436 = arith.mulf %435, %429 : vector<16x16xf32>
    %437 = arith.addf %419, %436 : vector<16x16xf32>
    %c94 = arith.constant 94 : index
    %438 = memref.load %arg2[%c94] : memref<288xf32, #tpu.memory_space<smem>>
    %439 = vector.broadcast %438 : f32 to vector<16x16xf32>
    %440 = arith.mulf %439, %429 : vector<16x16xf32>
    %441 = arith.addf %423, %440 : vector<16x16xf32>
    %c130 = arith.constant 130 : index
    %442 = memref.load %arg2[%c130] : memref<288xf32, #tpu.memory_space<smem>>
    %443 = vector.broadcast %442 : f32 to vector<16x16xf32>
    %444 = arith.mulf %443, %429 : vector<16x16xf32>
    %445 = arith.addf %427, %444 : vector<16x16xf32>
    %c2_103 = arith.constant 2 : index
    %c1_104 = arith.constant 1 : index
    %c2_105 = arith.constant 2 : index
    %446 = vector.load %arg7[%c2_103, %c1_104, %c2_105] : memref<4x18x18xf32, #tpu.memory_space<vmem>>, vector<1x16x16xf32>
    %447 = vector.shape_cast %446 : vector<1x16x16xf32> to vector<16x16xf32>
    %c23 = arith.constant 23 : index
    %448 = memref.load %arg2[%c23] : memref<288xf32, #tpu.memory_space<smem>>
    %449 = vector.broadcast %448 : f32 to vector<16x16xf32>
    %450 = arith.mulf %449, %447 : vector<16x16xf32>
    %451 = arith.addf %433, %450 : vector<16x16xf32>
    %c59 = arith.constant 59 : index
    %452 = memref.load %arg2[%c59] : memref<288xf32, #tpu.memory_space<smem>>
    %453 = vector.broadcast %452 : f32 to vector<16x16xf32>
    %454 = arith.mulf %453, %447 : vector<16x16xf32>
    %455 = arith.addf %437, %454 : vector<16x16xf32>
    %c95 = arith.constant 95 : index
    %456 = memref.load %arg2[%c95] : memref<288xf32, #tpu.memory_space<smem>>
    %457 = vector.broadcast %456 : f32 to vector<16x16xf32>
    %458 = arith.mulf %457, %447 : vector<16x16xf32>
    %459 = arith.addf %441, %458 : vector<16x16xf32>
    %c131 = arith.constant 131 : index
    %460 = memref.load %arg2[%c131] : memref<288xf32, #tpu.memory_space<smem>>
    %461 = vector.broadcast %460 : f32 to vector<16x16xf32>
    %462 = arith.mulf %461, %447 : vector<16x16xf32>
    %463 = arith.addf %445, %462 : vector<16x16xf32>
    %c2_106 = arith.constant 2 : index
    %c2_107 = arith.constant 2 : index
    %c0_108 = arith.constant 0 : index
    %464 = vector.load %arg7[%c2_106, %c2_107, %c0_108] : memref<4x18x18xf32, #tpu.memory_space<vmem>>, vector<1x16x16xf32>
    %465 = vector.shape_cast %464 : vector<1x16x16xf32> to vector<16x16xf32>
    %c24 = arith.constant 24 : index
    %466 = memref.load %arg2[%c24] : memref<288xf32, #tpu.memory_space<smem>>
    %467 = vector.broadcast %466 : f32 to vector<16x16xf32>
    %468 = arith.mulf %467, %465 : vector<16x16xf32>
    %469 = arith.addf %451, %468 : vector<16x16xf32>
    %c60 = arith.constant 60 : index
    %470 = memref.load %arg2[%c60] : memref<288xf32, #tpu.memory_space<smem>>
    %471 = vector.broadcast %470 : f32 to vector<16x16xf32>
    %472 = arith.mulf %471, %465 : vector<16x16xf32>
    %473 = arith.addf %455, %472 : vector<16x16xf32>
    %c96 = arith.constant 96 : index
    %474 = memref.load %arg2[%c96] : memref<288xf32, #tpu.memory_space<smem>>
    %475 = vector.broadcast %474 : f32 to vector<16x16xf32>
    %476 = arith.mulf %475, %465 : vector<16x16xf32>
    %477 = arith.addf %459, %476 : vector<16x16xf32>
    %c132 = arith.constant 132 : index
    %478 = memref.load %arg2[%c132] : memref<288xf32, #tpu.memory_space<smem>>
    %479 = vector.broadcast %478 : f32 to vector<16x16xf32>
    %480 = arith.mulf %479, %465 : vector<16x16xf32>
    %481 = arith.addf %463, %480 : vector<16x16xf32>
    %c2_109 = arith.constant 2 : index
    %c2_110 = arith.constant 2 : index
    %c1_111 = arith.constant 1 : index
    %482 = vector.load %arg7[%c2_109, %c2_110, %c1_111] : memref<4x18x18xf32, #tpu.memory_space<vmem>>, vector<1x16x16xf32>
    %483 = vector.shape_cast %482 : vector<1x16x16xf32> to vector<16x16xf32>
    %c25 = arith.constant 25 : index
    %484 = memref.load %arg2[%c25] : memref<288xf32, #tpu.memory_space<smem>>
    %485 = vector.broadcast %484 : f32 to vector<16x16xf32>
    %486 = arith.mulf %485, %483 : vector<16x16xf32>
    %487 = arith.addf %469, %486 : vector<16x16xf32>
    %c61 = arith.constant 61 : index
    %488 = memref.load %arg2[%c61] : memref<288xf32, #tpu.memory_space<smem>>
    %489 = vector.broadcast %488 : f32 to vector<16x16xf32>
    %490 = arith.mulf %489, %483 : vector<16x16xf32>
    %491 = arith.addf %473, %490 : vector<16x16xf32>
    %c97 = arith.constant 97 : index
    %492 = memref.load %arg2[%c97] : memref<288xf32, #tpu.memory_space<smem>>
    %493 = vector.broadcast %492 : f32 to vector<16x16xf32>
    %494 = arith.mulf %493, %483 : vector<16x16xf32>
    %495 = arith.addf %477, %494 : vector<16x16xf32>
    %c133 = arith.constant 133 : index
    %496 = memref.load %arg2[%c133] : memref<288xf32, #tpu.memory_space<smem>>
    %497 = vector.broadcast %496 : f32 to vector<16x16xf32>
    %498 = arith.mulf %497, %483 : vector<16x16xf32>
    %499 = arith.addf %481, %498 : vector<16x16xf32>
    %c2_112 = arith.constant 2 : index
    %c2_113 = arith.constant 2 : index
    %c2_114 = arith.constant 2 : index
    %500 = vector.load %arg7[%c2_112, %c2_113, %c2_114] : memref<4x18x18xf32, #tpu.memory_space<vmem>>, vector<1x16x16xf32>
    %501 = vector.shape_cast %500 : vector<1x16x16xf32> to vector<16x16xf32>
    %c26 = arith.constant 26 : index
    %502 = memref.load %arg2[%c26] : memref<288xf32, #tpu.memory_space<smem>>
    %503 = vector.broadcast %502 : f32 to vector<16x16xf32>
    %504 = arith.mulf %503, %501 : vector<16x16xf32>
    %505 = arith.addf %487, %504 : vector<16x16xf32>
    %c62 = arith.constant 62 : index
    %506 = memref.load %arg2[%c62] : memref<288xf32, #tpu.memory_space<smem>>
    %507 = vector.broadcast %506 : f32 to vector<16x16xf32>
    %508 = arith.mulf %507, %501 : vector<16x16xf32>
    %509 = arith.addf %491, %508 : vector<16x16xf32>
    %c98 = arith.constant 98 : index
    %510 = memref.load %arg2[%c98] : memref<288xf32, #tpu.memory_space<smem>>
    %511 = vector.broadcast %510 : f32 to vector<16x16xf32>
    %512 = arith.mulf %511, %501 : vector<16x16xf32>
    %513 = arith.addf %495, %512 : vector<16x16xf32>
    %c134 = arith.constant 134 : index
    %514 = memref.load %arg2[%c134] : memref<288xf32, #tpu.memory_space<smem>>
    %515 = vector.broadcast %514 : f32 to vector<16x16xf32>
    %516 = arith.mulf %515, %501 : vector<16x16xf32>
    %517 = arith.addf %499, %516 : vector<16x16xf32>
    %c3_115 = arith.constant 3 : index
    %c0_116 = arith.constant 0 : index
    %c0_117 = arith.constant 0 : index
    %518 = vector.load %arg7[%c3_115, %c0_116, %c0_117] : memref<4x18x18xf32, #tpu.memory_space<vmem>>, vector<1x16x16xf32>
    %519 = vector.shape_cast %518 : vector<1x16x16xf32> to vector<16x16xf32>
    %c27 = arith.constant 27 : index
    %520 = memref.load %arg2[%c27] : memref<288xf32, #tpu.memory_space<smem>>
    %521 = vector.broadcast %520 : f32 to vector<16x16xf32>
    %522 = arith.mulf %521, %519 : vector<16x16xf32>
    %523 = arith.addf %505, %522 : vector<16x16xf32>
    %c63 = arith.constant 63 : index
    %524 = memref.load %arg2[%c63] : memref<288xf32, #tpu.memory_space<smem>>
    %525 = vector.broadcast %524 : f32 to vector<16x16xf32>
    %526 = arith.mulf %525, %519 : vector<16x16xf32>
    %527 = arith.addf %509, %526 : vector<16x16xf32>
    %c99 = arith.constant 99 : index
    %528 = memref.load %arg2[%c99] : memref<288xf32, #tpu.memory_space<smem>>
    %529 = vector.broadcast %528 : f32 to vector<16x16xf32>
    %530 = arith.mulf %529, %519 : vector<16x16xf32>
    %531 = arith.addf %513, %530 : vector<16x16xf32>
    %c135 = arith.constant 135 : index
    %532 = memref.load %arg2[%c135] : memref<288xf32, #tpu.memory_space<smem>>
    %533 = vector.broadcast %532 : f32 to vector<16x16xf32>
    %534 = arith.mulf %533, %519 : vector<16x16xf32>
    %535 = arith.addf %517, %534 : vector<16x16xf32>
    %c3_118 = arith.constant 3 : index
    %c0_119 = arith.constant 0 : index
    %c1_120 = arith.constant 1 : index
    %536 = vector.load %arg7[%c3_118, %c0_119, %c1_120] : memref<4x18x18xf32, #tpu.memory_space<vmem>>, vector<1x16x16xf32>
    %537 = vector.shape_cast %536 : vector<1x16x16xf32> to vector<16x16xf32>
    %c28 = arith.constant 28 : index
    %538 = memref.load %arg2[%c28] : memref<288xf32, #tpu.memory_space<smem>>
    %539 = vector.broadcast %538 : f32 to vector<16x16xf32>
    %540 = arith.mulf %539, %537 : vector<16x16xf32>
    %541 = arith.addf %523, %540 : vector<16x16xf32>
    %c64 = arith.constant 64 : index
    %542 = memref.load %arg2[%c64] : memref<288xf32, #tpu.memory_space<smem>>
    %543 = vector.broadcast %542 : f32 to vector<16x16xf32>
    %544 = arith.mulf %543, %537 : vector<16x16xf32>
    %545 = arith.addf %527, %544 : vector<16x16xf32>
    %c100 = arith.constant 100 : index
    %546 = memref.load %arg2[%c100] : memref<288xf32, #tpu.memory_space<smem>>
    %547 = vector.broadcast %546 : f32 to vector<16x16xf32>
    %548 = arith.mulf %547, %537 : vector<16x16xf32>
    %549 = arith.addf %531, %548 : vector<16x16xf32>
    %c136 = arith.constant 136 : index
    %550 = memref.load %arg2[%c136] : memref<288xf32, #tpu.memory_space<smem>>
    %551 = vector.broadcast %550 : f32 to vector<16x16xf32>
    %552 = arith.mulf %551, %537 : vector<16x16xf32>
    %553 = arith.addf %535, %552 : vector<16x16xf32>
    %c3_121 = arith.constant 3 : index
    %c0_122 = arith.constant 0 : index
    %c2_123 = arith.constant 2 : index
    %554 = vector.load %arg7[%c3_121, %c0_122, %c2_123] : memref<4x18x18xf32, #tpu.memory_space<vmem>>, vector<1x16x16xf32>
    %555 = vector.shape_cast %554 : vector<1x16x16xf32> to vector<16x16xf32>
    %c29 = arith.constant 29 : index
    %556 = memref.load %arg2[%c29] : memref<288xf32, #tpu.memory_space<smem>>
    %557 = vector.broadcast %556 : f32 to vector<16x16xf32>
    %558 = arith.mulf %557, %555 : vector<16x16xf32>
    %559 = arith.addf %541, %558 : vector<16x16xf32>
    %c65 = arith.constant 65 : index
    %560 = memref.load %arg2[%c65] : memref<288xf32, #tpu.memory_space<smem>>
    %561 = vector.broadcast %560 : f32 to vector<16x16xf32>
    %562 = arith.mulf %561, %555 : vector<16x16xf32>
    %563 = arith.addf %545, %562 : vector<16x16xf32>
    %c101 = arith.constant 101 : index
    %564 = memref.load %arg2[%c101] : memref<288xf32, #tpu.memory_space<smem>>
    %565 = vector.broadcast %564 : f32 to vector<16x16xf32>
    %566 = arith.mulf %565, %555 : vector<16x16xf32>
    %567 = arith.addf %549, %566 : vector<16x16xf32>
    %c137 = arith.constant 137 : index
    %568 = memref.load %arg2[%c137] : memref<288xf32, #tpu.memory_space<smem>>
    %569 = vector.broadcast %568 : f32 to vector<16x16xf32>
    %570 = arith.mulf %569, %555 : vector<16x16xf32>
    %571 = arith.addf %553, %570 : vector<16x16xf32>
    %c3_124 = arith.constant 3 : index
    %c1_125 = arith.constant 1 : index
    %c0_126 = arith.constant 0 : index
    %572 = vector.load %arg7[%c3_124, %c1_125, %c0_126] : memref<4x18x18xf32, #tpu.memory_space<vmem>>, vector<1x16x16xf32>
    %573 = vector.shape_cast %572 : vector<1x16x16xf32> to vector<16x16xf32>
    %c30 = arith.constant 30 : index
    %574 = memref.load %arg2[%c30] : memref<288xf32, #tpu.memory_space<smem>>
    %575 = vector.broadcast %574 : f32 to vector<16x16xf32>
    %576 = arith.mulf %575, %573 : vector<16x16xf32>
    %577 = arith.addf %559, %576 : vector<16x16xf32>
    %c66 = arith.constant 66 : index
    %578 = memref.load %arg2[%c66] : memref<288xf32, #tpu.memory_space<smem>>
    %579 = vector.broadcast %578 : f32 to vector<16x16xf32>
    %580 = arith.mulf %579, %573 : vector<16x16xf32>
    %581 = arith.addf %563, %580 : vector<16x16xf32>
    %c102 = arith.constant 102 : index
    %582 = memref.load %arg2[%c102] : memref<288xf32, #tpu.memory_space<smem>>
    %583 = vector.broadcast %582 : f32 to vector<16x16xf32>
    %584 = arith.mulf %583, %573 : vector<16x16xf32>
    %585 = arith.addf %567, %584 : vector<16x16xf32>
    %c138 = arith.constant 138 : index
    %586 = memref.load %arg2[%c138] : memref<288xf32, #tpu.memory_space<smem>>
    %587 = vector.broadcast %586 : f32 to vector<16x16xf32>
    %588 = arith.mulf %587, %573 : vector<16x16xf32>
    %589 = arith.addf %571, %588 : vector<16x16xf32>
    %c3_127 = arith.constant 3 : index
    %c1_128 = arith.constant 1 : index
    %c1_129 = arith.constant 1 : index
    %590 = vector.load %arg7[%c3_127, %c1_128, %c1_129] : memref<4x18x18xf32, #tpu.memory_space<vmem>>, vector<1x16x16xf32>
    %591 = vector.shape_cast %590 : vector<1x16x16xf32> to vector<16x16xf32>
    %c31 = arith.constant 31 : index
    %592 = memref.load %arg2[%c31] : memref<288xf32, #tpu.memory_space<smem>>
    %593 = vector.broadcast %592 : f32 to vector<16x16xf32>
    %594 = arith.mulf %593, %591 : vector<16x16xf32>
    %595 = arith.addf %577, %594 : vector<16x16xf32>
    %c67 = arith.constant 67 : index
    %596 = memref.load %arg2[%c67] : memref<288xf32, #tpu.memory_space<smem>>
    %597 = vector.broadcast %596 : f32 to vector<16x16xf32>
    %598 = arith.mulf %597, %591 : vector<16x16xf32>
    %599 = arith.addf %581, %598 : vector<16x16xf32>
    %c103 = arith.constant 103 : index
    %600 = memref.load %arg2[%c103] : memref<288xf32, #tpu.memory_space<smem>>
    %601 = vector.broadcast %600 : f32 to vector<16x16xf32>
    %602 = arith.mulf %601, %591 : vector<16x16xf32>
    %603 = arith.addf %585, %602 : vector<16x16xf32>
    %c139 = arith.constant 139 : index
    %604 = memref.load %arg2[%c139] : memref<288xf32, #tpu.memory_space<smem>>
    %605 = vector.broadcast %604 : f32 to vector<16x16xf32>
    %606 = arith.mulf %605, %591 : vector<16x16xf32>
    %607 = arith.addf %589, %606 : vector<16x16xf32>
    %c3_130 = arith.constant 3 : index
    %c1_131 = arith.constant 1 : index
    %c2_132 = arith.constant 2 : index
    %608 = vector.load %arg7[%c3_130, %c1_131, %c2_132] : memref<4x18x18xf32, #tpu.memory_space<vmem>>, vector<1x16x16xf32>
    %609 = vector.shape_cast %608 : vector<1x16x16xf32> to vector<16x16xf32>
    %c32 = arith.constant 32 : index
    %610 = memref.load %arg2[%c32] : memref<288xf32, #tpu.memory_space<smem>>
    %611 = vector.broadcast %610 : f32 to vector<16x16xf32>
    %612 = arith.mulf %611, %609 : vector<16x16xf32>
    %613 = arith.addf %595, %612 : vector<16x16xf32>
    %c68 = arith.constant 68 : index
    %614 = memref.load %arg2[%c68] : memref<288xf32, #tpu.memory_space<smem>>
    %615 = vector.broadcast %614 : f32 to vector<16x16xf32>
    %616 = arith.mulf %615, %609 : vector<16x16xf32>
    %617 = arith.addf %599, %616 : vector<16x16xf32>
    %c104 = arith.constant 104 : index
    %618 = memref.load %arg2[%c104] : memref<288xf32, #tpu.memory_space<smem>>
    %619 = vector.broadcast %618 : f32 to vector<16x16xf32>
    %620 = arith.mulf %619, %609 : vector<16x16xf32>
    %621 = arith.addf %603, %620 : vector<16x16xf32>
    %c140 = arith.constant 140 : index
    %622 = memref.load %arg2[%c140] : memref<288xf32, #tpu.memory_space<smem>>
    %623 = vector.broadcast %622 : f32 to vector<16x16xf32>
    %624 = arith.mulf %623, %609 : vector<16x16xf32>
    %625 = arith.addf %607, %624 : vector<16x16xf32>
    %c3_133 = arith.constant 3 : index
    %c2_134 = arith.constant 2 : index
    %c0_135 = arith.constant 0 : index
    %626 = vector.load %arg7[%c3_133, %c2_134, %c0_135] : memref<4x18x18xf32, #tpu.memory_space<vmem>>, vector<1x16x16xf32>
    %627 = vector.shape_cast %626 : vector<1x16x16xf32> to vector<16x16xf32>
    %c33 = arith.constant 33 : index
    %628 = memref.load %arg2[%c33] : memref<288xf32, #tpu.memory_space<smem>>
    %629 = vector.broadcast %628 : f32 to vector<16x16xf32>
    %630 = arith.mulf %629, %627 : vector<16x16xf32>
    %631 = arith.addf %613, %630 : vector<16x16xf32>
    %c69 = arith.constant 69 : index
    %632 = memref.load %arg2[%c69] : memref<288xf32, #tpu.memory_space<smem>>
    %633 = vector.broadcast %632 : f32 to vector<16x16xf32>
    %634 = arith.mulf %633, %627 : vector<16x16xf32>
    %635 = arith.addf %617, %634 : vector<16x16xf32>
    %c105 = arith.constant 105 : index
    %636 = memref.load %arg2[%c105] : memref<288xf32, #tpu.memory_space<smem>>
    %637 = vector.broadcast %636 : f32 to vector<16x16xf32>
    %638 = arith.mulf %637, %627 : vector<16x16xf32>
    %639 = arith.addf %621, %638 : vector<16x16xf32>
    %c141 = arith.constant 141 : index
    %640 = memref.load %arg2[%c141] : memref<288xf32, #tpu.memory_space<smem>>
    %641 = vector.broadcast %640 : f32 to vector<16x16xf32>
    %642 = arith.mulf %641, %627 : vector<16x16xf32>
    %643 = arith.addf %625, %642 : vector<16x16xf32>
    %c3_136 = arith.constant 3 : index
    %c2_137 = arith.constant 2 : index
    %c1_138 = arith.constant 1 : index
    %644 = vector.load %arg7[%c3_136, %c2_137, %c1_138] : memref<4x18x18xf32, #tpu.memory_space<vmem>>, vector<1x16x16xf32>
    %645 = vector.shape_cast %644 : vector<1x16x16xf32> to vector<16x16xf32>
    %c34 = arith.constant 34 : index
    %646 = memref.load %arg2[%c34] : memref<288xf32, #tpu.memory_space<smem>>
    %647 = vector.broadcast %646 : f32 to vector<16x16xf32>
    %648 = arith.mulf %647, %645 : vector<16x16xf32>
    %649 = arith.addf %631, %648 : vector<16x16xf32>
    %c70 = arith.constant 70 : index
    %650 = memref.load %arg2[%c70] : memref<288xf32, #tpu.memory_space<smem>>
    %651 = vector.broadcast %650 : f32 to vector<16x16xf32>
    %652 = arith.mulf %651, %645 : vector<16x16xf32>
    %653 = arith.addf %635, %652 : vector<16x16xf32>
    %c106 = arith.constant 106 : index
    %654 = memref.load %arg2[%c106] : memref<288xf32, #tpu.memory_space<smem>>
    %655 = vector.broadcast %654 : f32 to vector<16x16xf32>
    %656 = arith.mulf %655, %645 : vector<16x16xf32>
    %657 = arith.addf %639, %656 : vector<16x16xf32>
    %c142 = arith.constant 142 : index
    %658 = memref.load %arg2[%c142] : memref<288xf32, #tpu.memory_space<smem>>
    %659 = vector.broadcast %658 : f32 to vector<16x16xf32>
    %660 = arith.mulf %659, %645 : vector<16x16xf32>
    %661 = arith.addf %643, %660 : vector<16x16xf32>
    %c3_139 = arith.constant 3 : index
    %c2_140 = arith.constant 2 : index
    %c2_141 = arith.constant 2 : index
    %662 = vector.load %arg7[%c3_139, %c2_140, %c2_141] : memref<4x18x18xf32, #tpu.memory_space<vmem>>, vector<1x16x16xf32>
    %663 = vector.shape_cast %662 : vector<1x16x16xf32> to vector<16x16xf32>
    %c35 = arith.constant 35 : index
    %664 = memref.load %arg2[%c35] : memref<288xf32, #tpu.memory_space<smem>>
    %665 = vector.broadcast %664 : f32 to vector<16x16xf32>
    %666 = arith.mulf %665, %663 : vector<16x16xf32>
    %667 = arith.addf %649, %666 : vector<16x16xf32>
    %c71 = arith.constant 71 : index
    %668 = memref.load %arg2[%c71] : memref<288xf32, #tpu.memory_space<smem>>
    %669 = vector.broadcast %668 : f32 to vector<16x16xf32>
    %670 = arith.mulf %669, %663 : vector<16x16xf32>
    %671 = arith.addf %653, %670 : vector<16x16xf32>
    %c107 = arith.constant 107 : index
    %672 = memref.load %arg2[%c107] : memref<288xf32, #tpu.memory_space<smem>>
    %673 = vector.broadcast %672 : f32 to vector<16x16xf32>
    %674 = arith.mulf %673, %663 : vector<16x16xf32>
    %675 = arith.addf %657, %674 : vector<16x16xf32>
    %c143 = arith.constant 143 : index
    %676 = memref.load %arg2[%c143] : memref<288xf32, #tpu.memory_space<smem>>
    %677 = vector.broadcast %676 : f32 to vector<16x16xf32>
    %678 = arith.mulf %677, %663 : vector<16x16xf32>
    %679 = arith.addf %661, %678 : vector<16x16xf32>
    %c0_142 = arith.constant 0 : index
    %c0_143 = arith.constant 0 : index
    %680 = vector.load %arg3[%c0_142, %c0_143] : memref<16x32xf32, #tpu.memory_space<vmem>>, vector<16x32xf32>
    %cst_144 = arith.constant dense<0.000000e+00> : vector<16x32xf32>
    %681 = tpu.matmul %667, %680, %cst_144 {dimension_numbers = #tpu.dot_dimension_numbers<[1], [0], [0], [1], [0, 0, 1, 1], [], []>} : vector<16x16xf32>, vector<16x32xf32>, vector<16x32xf32> -> vector<16x32xf32>
    %c0_145 = arith.constant 0 : index
    %c0_146 = arith.constant 0 : index
    %682 = vector.load %arg4[%c0_145, %c0_146] : memref<16x32xf32, #tpu.memory_space<vmem>>, vector<16x32xf32>
    %cst_147 = arith.constant dense<0.000000e+00> : vector<16x32xf32>
    %683 = tpu.matmul %671, %682, %cst_147 {dimension_numbers = #tpu.dot_dimension_numbers<[1], [0], [0], [1], [0, 0, 1, 1], [], []>} : vector<16x16xf32>, vector<16x32xf32>, vector<16x32xf32> -> vector<16x32xf32>
    %684 = arith.addf %681, %683 : vector<16x32xf32>
    %c0_148 = arith.constant 0 : index
    %c0_149 = arith.constant 0 : index
    %685 = vector.load %arg3[%c0_148, %c0_149] : memref<16x32xf32, #tpu.memory_space<vmem>>, vector<16x32xf32>
    %cst_150 = arith.constant dense<0.000000e+00> : vector<16x32xf32>
    %686 = tpu.matmul %675, %685, %cst_150 {dimension_numbers = #tpu.dot_dimension_numbers<[1], [0], [0], [1], [0, 0, 1, 1], [], []>} : vector<16x16xf32>, vector<16x32xf32>, vector<16x32xf32> -> vector<16x32xf32>
    %c0_151 = arith.constant 0 : index
    %c0_152 = arith.constant 0 : index
    %687 = vector.load %arg4[%c0_151, %c0_152] : memref<16x32xf32, #tpu.memory_space<vmem>>, vector<16x32xf32>
    %cst_153 = arith.constant dense<0.000000e+00> : vector<16x32xf32>
    %688 = tpu.matmul %679, %687, %cst_153 {dimension_numbers = #tpu.dot_dimension_numbers<[1], [0], [0], [1], [0, 0, 1, 1], [], []>} : vector<16x16xf32>, vector<16x32xf32>, vector<16x32xf32> -> vector<16x32xf32>
    %689 = arith.addf %686, %688 : vector<16x32xf32>
    %690 = vector.shape_cast %684 : vector<16x32xf32> to vector<16x1x32xf32>
    %c0_154 = arith.constant 0 : index
    %c0_155 = arith.constant 0 : index
    %c0_156 = arith.constant 0 : index
    %c0_157 = arith.constant 0 : index
    %c0_158 = arith.constant 0 : index
    %691 = vector.load %arg6[%c0_154, %c0_155, %c0_156, %c0_157, %c0_158] : memref<1x2x16x2x32xf32, #tpu.memory_space<vmem>>, vector<1x1x16x1x32xf32>
    %692 = vector.shape_cast %691 : vector<1x1x16x1x32xf32> to vector<16x1x32xf32>
    %693 = vector.shape_cast %690 : vector<16x1x32xf32> to vector<1x1x16x1x32xf32>
    tpu.vector_store %arg6[%c0_154, %c0_155, %c0_156, %c0_157, %c0_158], %693 {strides = array<i32>} : memref<1x2x16x2x32xf32, #tpu.memory_space<vmem>>, vector<1x1x16x1x32xf32>,
    %694 = vector.shape_cast %689 : vector<16x32xf32> to vector<16x1x32xf32>
    %c0_159 = arith.constant 0 : index
    %c0_160 = arith.constant 0 : index
    %c0_161 = arith.constant 0 : index
    %c1_162 = arith.constant 1 : index
    %c0_163 = arith.constant 0 : index
    %695 = vector.load %arg6[%c0_159, %c0_160, %c0_161, %c1_162, %c0_163] : memref<1x2x16x2x32xf32, #tpu.memory_space<vmem>>, vector<1x1x16x1x32xf32>
    %696 = vector.shape_cast %695 : vector<1x1x16x1x32xf32> to vector<16x1x32xf32>
    %697 = vector.shape_cast %694 : vector<16x1x32xf32> to vector<1x1x16x1x32xf32>
    tpu.vector_store %arg6[%c0_159, %c0_160, %c0_161, %c1_162, %c0_163], %697 {strides = array<i32>} : memref<1x2x16x2x32xf32, #tpu.memory_space<vmem>>, vector<1x1x16x1x32xf32>,
    %cst_164 = arith.constant 0.000000e+00 : f32
    %698 = vector.broadcast %cst_164 : f32 to vector<16x16xf32>
    %cst_165 = arith.constant 0.000000e+00 : f32
    %699 = vector.broadcast %cst_165 : f32 to vector<16x16xf32>
    %cst_166 = arith.constant 0.000000e+00 : f32
    %700 = vector.broadcast %cst_166 : f32 to vector<16x16xf32>
    %cst_167 = arith.constant 0.000000e+00 : f32
    %701 = vector.broadcast %cst_167 : f32 to vector<16x16xf32>
    %c0_168 = arith.constant 0 : index
    %c0_169 = arith.constant 0 : index
    %c0_170 = arith.constant 0 : index
    %702 = vector.load %arg7[%c0_168, %c0_169, %c0_170] : memref<4x18x18xf32, #tpu.memory_space<vmem>>, vector<1x16x16xf32>
    %703 = vector.shape_cast %702 : vector<1x16x16xf32> to vector<16x16xf32>
    %c144 = arith.constant 144 : index
    %704 = memref.load %arg2[%c144] : memref<288xf32, #tpu.memory_space<smem>>
    %705 = vector.broadcast %704 : f32 to vector<16x16xf32>
    %706 = arith.mulf %705, %703 : vector<16x16xf32>
    %707 = arith.addf %698, %706 : vector<16x16xf32>
    %c180 = arith.constant 180 : index
    %708 = memref.load %arg2[%c180] : memref<288xf32, #tpu.memory_space<smem>>
    %709 = vector.broadcast %708 : f32 to vector<16x16xf32>
    %710 = arith.mulf %709, %703 : vector<16x16xf32>
    %711 = arith.addf %699, %710 : vector<16x16xf32>
    %c216 = arith.constant 216 : index
    %712 = memref.load %arg2[%c216] : memref<288xf32, #tpu.memory_space<smem>>
    %713 = vector.broadcast %712 : f32 to vector<16x16xf32>
    %714 = arith.mulf %713, %703 : vector<16x16xf32>
    %715 = arith.addf %700, %714 : vector<16x16xf32>
    %c252 = arith.constant 252 : index
    %716 = memref.load %arg2[%c252] : memref<288xf32, #tpu.memory_space<smem>>
    %717 = vector.broadcast %716 : f32 to vector<16x16xf32>
    %718 = arith.mulf %717, %703 : vector<16x16xf32>
    %719 = arith.addf %701, %718 : vector<16x16xf32>
    %c0_171 = arith.constant 0 : index
    %c0_172 = arith.constant 0 : index
    %c1_173 = arith.constant 1 : index
    %720 = vector.load %arg7[%c0_171, %c0_172, %c1_173] : memref<4x18x18xf32, #tpu.memory_space<vmem>>, vector<1x16x16xf32>
    %721 = vector.shape_cast %720 : vector<1x16x16xf32> to vector<16x16xf32>
    %c145 = arith.constant 145 : index
    %722 = memref.load %arg2[%c145] : memref<288xf32, #tpu.memory_space<smem>>
    %723 = vector.broadcast %722 : f32 to vector<16x16xf32>
    %724 = arith.mulf %723, %721 : vector<16x16xf32>
    %725 = arith.addf %707, %724 : vector<16x16xf32>
    %c181 = arith.constant 181 : index
    %726 = memref.load %arg2[%c181] : memref<288xf32, #tpu.memory_space<smem>>
    %727 = vector.broadcast %726 : f32 to vector<16x16xf32>
    %728 = arith.mulf %727, %721 : vector<16x16xf32>
    %729 = arith.addf %711, %728 : vector<16x16xf32>
    %c217 = arith.constant 217 : index
    %730 = memref.load %arg2[%c217] : memref<288xf32, #tpu.memory_space<smem>>
    %731 = vector.broadcast %730 : f32 to vector<16x16xf32>
    %732 = arith.mulf %731, %721 : vector<16x16xf32>
    %733 = arith.addf %715, %732 : vector<16x16xf32>
    %c253 = arith.constant 253 : index
    %734 = memref.load %arg2[%c253] : memref<288xf32, #tpu.memory_space<smem>>
    %735 = vector.broadcast %734 : f32 to vector<16x16xf32>
    %736 = arith.mulf %735, %721 : vector<16x16xf32>
    %737 = arith.addf %719, %736 : vector<16x16xf32>
    %c0_174 = arith.constant 0 : index
    %c0_175 = arith.constant 0 : index
    %c2_176 = arith.constant 2 : index
    %738 = vector.load %arg7[%c0_174, %c0_175, %c2_176] : memref<4x18x18xf32, #tpu.memory_space<vmem>>, vector<1x16x16xf32>
    %739 = vector.shape_cast %738 : vector<1x16x16xf32> to vector<16x16xf32>
    %c146 = arith.constant 146 : index
    %740 = memref.load %arg2[%c146] : memref<288xf32, #tpu.memory_space<smem>>
    %741 = vector.broadcast %740 : f32 to vector<16x16xf32>
    %742 = arith.mulf %741, %739 : vector<16x16xf32>
    %743 = arith.addf %725, %742 : vector<16x16xf32>
    %c182 = arith.constant 182 : index
    %744 = memref.load %arg2[%c182] : memref<288xf32, #tpu.memory_space<smem>>
    %745 = vector.broadcast %744 : f32 to vector<16x16xf32>
    %746 = arith.mulf %745, %739 : vector<16x16xf32>
    %747 = arith.addf %729, %746 : vector<16x16xf32>
    %c218 = arith.constant 218 : index
    %748 = memref.load %arg2[%c218] : memref<288xf32, #tpu.memory_space<smem>>
    %749 = vector.broadcast %748 : f32 to vector<16x16xf32>
    %750 = arith.mulf %749, %739 : vector<16x16xf32>
    %751 = arith.addf %733, %750 : vector<16x16xf32>
    %c254 = arith.constant 254 : index
    %752 = memref.load %arg2[%c254] : memref<288xf32, #tpu.memory_space<smem>>
    %753 = vector.broadcast %752 : f32 to vector<16x16xf32>
    %754 = arith.mulf %753, %739 : vector<16x16xf32>
    %755 = arith.addf %737, %754 : vector<16x16xf32>
    %c0_177 = arith.constant 0 : index
    %c1_178 = arith.constant 1 : index
    %c0_179 = arith.constant 0 : index
    %756 = vector.load %arg7[%c0_177, %c1_178, %c0_179] : memref<4x18x18xf32, #tpu.memory_space<vmem>>, vector<1x16x16xf32>
    %757 = vector.shape_cast %756 : vector<1x16x16xf32> to vector<16x16xf32>
    %c147 = arith.constant 147 : index
    %758 = memref.load %arg2[%c147] : memref<288xf32, #tpu.memory_space<smem>>
    %759 = vector.broadcast %758 : f32 to vector<16x16xf32>
    %760 = arith.mulf %759, %757 : vector<16x16xf32>
    %761 = arith.addf %743, %760 : vector<16x16xf32>
    %c183 = arith.constant 183 : index
    %762 = memref.load %arg2[%c183] : memref<288xf32, #tpu.memory_space<smem>>
    %763 = vector.broadcast %762 : f32 to vector<16x16xf32>
    %764 = arith.mulf %763, %757 : vector<16x16xf32>
    %765 = arith.addf %747, %764 : vector<16x16xf32>
    %c219 = arith.constant 219 : index
    %766 = memref.load %arg2[%c219] : memref<288xf32, #tpu.memory_space<smem>>
    %767 = vector.broadcast %766 : f32 to vector<16x16xf32>
    %768 = arith.mulf %767, %757 : vector<16x16xf32>
    %769 = arith.addf %751, %768 : vector<16x16xf32>
    %c255 = arith.constant 255 : index
    %770 = memref.load %arg2[%c255] : memref<288xf32, #tpu.memory_space<smem>>
    %771 = vector.broadcast %770 : f32 to vector<16x16xf32>
    %772 = arith.mulf %771, %757 : vector<16x16xf32>
    %773 = arith.addf %755, %772 : vector<16x16xf32>
    %c0_180 = arith.constant 0 : index
    %c1_181 = arith.constant 1 : index
    %c1_182 = arith.constant 1 : index
    %774 = vector.load %arg7[%c0_180, %c1_181, %c1_182] : memref<4x18x18xf32, #tpu.memory_space<vmem>>, vector<1x16x16xf32>
    %775 = vector.shape_cast %774 : vector<1x16x16xf32> to vector<16x16xf32>
    %c148 = arith.constant 148 : index
    %776 = memref.load %arg2[%c148] : memref<288xf32, #tpu.memory_space<smem>>
    %777 = vector.broadcast %776 : f32 to vector<16x16xf32>
    %778 = arith.mulf %777, %775 : vector<16x16xf32>
    %779 = arith.addf %761, %778 : vector<16x16xf32>
    %c184 = arith.constant 184 : index
    %780 = memref.load %arg2[%c184] : memref<288xf32, #tpu.memory_space<smem>>
    %781 = vector.broadcast %780 : f32 to vector<16x16xf32>
    %782 = arith.mulf %781, %775 : vector<16x16xf32>
    %783 = arith.addf %765, %782 : vector<16x16xf32>
    %c220 = arith.constant 220 : index
    %784 = memref.load %arg2[%c220] : memref<288xf32, #tpu.memory_space<smem>>
    %785 = vector.broadcast %784 : f32 to vector<16x16xf32>
    %786 = arith.mulf %785, %775 : vector<16x16xf32>
    %787 = arith.addf %769, %786 : vector<16x16xf32>
    %c256 = arith.constant 256 : index
    %788 = memref.load %arg2[%c256] : memref<288xf32, #tpu.memory_space<smem>>
    %789 = vector.broadcast %788 : f32 to vector<16x16xf32>
    %790 = arith.mulf %789, %775 : vector<16x16xf32>
    %791 = arith.addf %773, %790 : vector<16x16xf32>
    %c0_183 = arith.constant 0 : index
    %c1_184 = arith.constant 1 : index
    %c2_185 = arith.constant 2 : index
    %792 = vector.load %arg7[%c0_183, %c1_184, %c2_185] : memref<4x18x18xf32, #tpu.memory_space<vmem>>, vector<1x16x16xf32>
    %793 = vector.shape_cast %792 : vector<1x16x16xf32> to vector<16x16xf32>
    %c149 = arith.constant 149 : index
    %794 = memref.load %arg2[%c149] : memref<288xf32, #tpu.memory_space<smem>>
    %795 = vector.broadcast %794 : f32 to vector<16x16xf32>
    %796 = arith.mulf %795, %793 : vector<16x16xf32>
    %797 = arith.addf %779, %796 : vector<16x16xf32>
    %c185 = arith.constant 185 : index
    %798 = memref.load %arg2[%c185] : memref<288xf32, #tpu.memory_space<smem>>
    %799 = vector.broadcast %798 : f32 to vector<16x16xf32>
    %800 = arith.mulf %799, %793 : vector<16x16xf32>
    %801 = arith.addf %783, %800 : vector<16x16xf32>
    %c221 = arith.constant 221 : index
    %802 = memref.load %arg2[%c221] : memref<288xf32, #tpu.memory_space<smem>>
    %803 = vector.broadcast %802 : f32 to vector<16x16xf32>
    %804 = arith.mulf %803, %793 : vector<16x16xf32>
    %805 = arith.addf %787, %804 : vector<16x16xf32>
    %c257 = arith.constant 257 : index
    %806 = memref.load %arg2[%c257] : memref<288xf32, #tpu.memory_space<smem>>
    %807 = vector.broadcast %806 : f32 to vector<16x16xf32>
    %808 = arith.mulf %807, %793 : vector<16x16xf32>
    %809 = arith.addf %791, %808 : vector<16x16xf32>
    %c0_186 = arith.constant 0 : index
    %c2_187 = arith.constant 2 : index
    %c0_188 = arith.constant 0 : index
    %810 = vector.load %arg7[%c0_186, %c2_187, %c0_188] : memref<4x18x18xf32, #tpu.memory_space<vmem>>, vector<1x16x16xf32>
    %811 = vector.shape_cast %810 : vector<1x16x16xf32> to vector<16x16xf32>
    %c150 = arith.constant 150 : index
    %812 = memref.load %arg2[%c150] : memref<288xf32, #tpu.memory_space<smem>>
    %813 = vector.broadcast %812 : f32 to vector<16x16xf32>
    %814 = arith.mulf %813, %811 : vector<16x16xf32>
    %815 = arith.addf %797, %814 : vector<16x16xf32>
    %c186 = arith.constant 186 : index
    %816 = memref.load %arg2[%c186] : memref<288xf32, #tpu.memory_space<smem>>
    %817 = vector.broadcast %816 : f32 to vector<16x16xf32>
    %818 = arith.mulf %817, %811 : vector<16x16xf32>
    %819 = arith.addf %801, %818 : vector<16x16xf32>
    %c222 = arith.constant 222 : index
    %820 = memref.load %arg2[%c222] : memref<288xf32, #tpu.memory_space<smem>>
    %821 = vector.broadcast %820 : f32 to vector<16x16xf32>
    %822 = arith.mulf %821, %811 : vector<16x16xf32>
    %823 = arith.addf %805, %822 : vector<16x16xf32>
    %c258 = arith.constant 258 : index
    %824 = memref.load %arg2[%c258] : memref<288xf32, #tpu.memory_space<smem>>
    %825 = vector.broadcast %824 : f32 to vector<16x16xf32>
    %826 = arith.mulf %825, %811 : vector<16x16xf32>
    %827 = arith.addf %809, %826 : vector<16x16xf32>
    %c0_189 = arith.constant 0 : index
    %c2_190 = arith.constant 2 : index
    %c1_191 = arith.constant 1 : index
    %828 = vector.load %arg7[%c0_189, %c2_190, %c1_191] : memref<4x18x18xf32, #tpu.memory_space<vmem>>, vector<1x16x16xf32>
    %829 = vector.shape_cast %828 : vector<1x16x16xf32> to vector<16x16xf32>
    %c151 = arith.constant 151 : index
    %830 = memref.load %arg2[%c151] : memref<288xf32, #tpu.memory_space<smem>>
    %831 = vector.broadcast %830 : f32 to vector<16x16xf32>
    %832 = arith.mulf %831, %829 : vector<16x16xf32>
    %833 = arith.addf %815, %832 : vector<16x16xf32>
    %c187 = arith.constant 187 : index
    %834 = memref.load %arg2[%c187] : memref<288xf32, #tpu.memory_space<smem>>
    %835 = vector.broadcast %834 : f32 to vector<16x16xf32>
    %836 = arith.mulf %835, %829 : vector<16x16xf32>
    %837 = arith.addf %819, %836 : vector<16x16xf32>
    %c223 = arith.constant 223 : index
    %838 = memref.load %arg2[%c223] : memref<288xf32, #tpu.memory_space<smem>>
    %839 = vector.broadcast %838 : f32 to vector<16x16xf32>
    %840 = arith.mulf %839, %829 : vector<16x16xf32>
    %841 = arith.addf %823, %840 : vector<16x16xf32>
    %c259 = arith.constant 259 : index
    %842 = memref.load %arg2[%c259] : memref<288xf32, #tpu.memory_space<smem>>
    %843 = vector.broadcast %842 : f32 to vector<16x16xf32>
    %844 = arith.mulf %843, %829 : vector<16x16xf32>
    %845 = arith.addf %827, %844 : vector<16x16xf32>
    %c0_192 = arith.constant 0 : index
    %c2_193 = arith.constant 2 : index
    %c2_194 = arith.constant 2 : index
    %846 = vector.load %arg7[%c0_192, %c2_193, %c2_194] : memref<4x18x18xf32, #tpu.memory_space<vmem>>, vector<1x16x16xf32>
    %847 = vector.shape_cast %846 : vector<1x16x16xf32> to vector<16x16xf32>
    %c152 = arith.constant 152 : index
    %848 = memref.load %arg2[%c152] : memref<288xf32, #tpu.memory_space<smem>>
    %849 = vector.broadcast %848 : f32 to vector<16x16xf32>
    %850 = arith.mulf %849, %847 : vector<16x16xf32>
    %851 = arith.addf %833, %850 : vector<16x16xf32>
    %c188 = arith.constant 188 : index
    %852 = memref.load %arg2[%c188] : memref<288xf32, #tpu.memory_space<smem>>
    %853 = vector.broadcast %852 : f32 to vector<16x16xf32>
    %854 = arith.mulf %853, %847 : vector<16x16xf32>
    %855 = arith.addf %837, %854 : vector<16x16xf32>
    %c224 = arith.constant 224 : index
    %856 = memref.load %arg2[%c224] : memref<288xf32, #tpu.memory_space<smem>>
    %857 = vector.broadcast %856 : f32 to vector<16x16xf32>
    %858 = arith.mulf %857, %847 : vector<16x16xf32>
    %859 = arith.addf %841, %858 : vector<16x16xf32>
    %c260 = arith.constant 260 : index
    %860 = memref.load %arg2[%c260] : memref<288xf32, #tpu.memory_space<smem>>
    %861 = vector.broadcast %860 : f32 to vector<16x16xf32>
    %862 = arith.mulf %861, %847 : vector<16x16xf32>
    %863 = arith.addf %845, %862 : vector<16x16xf32>
    %c1_195 = arith.constant 1 : index
    %c0_196 = arith.constant 0 : index
    %c0_197 = arith.constant 0 : index
    %864 = vector.load %arg7[%c1_195, %c0_196, %c0_197] : memref<4x18x18xf32, #tpu.memory_space<vmem>>, vector<1x16x16xf32>
    %865 = vector.shape_cast %864 : vector<1x16x16xf32> to vector<16x16xf32>
    %c153 = arith.constant 153 : index
    %866 = memref.load %arg2[%c153] : memref<288xf32, #tpu.memory_space<smem>>
    %867 = vector.broadcast %866 : f32 to vector<16x16xf32>
    %868 = arith.mulf %867, %865 : vector<16x16xf32>
    %869 = arith.addf %851, %868 : vector<16x16xf32>
    %c189 = arith.constant 189 : index
    %870 = memref.load %arg2[%c189] : memref<288xf32, #tpu.memory_space<smem>>
    %871 = vector.broadcast %870 : f32 to vector<16x16xf32>
    %872 = arith.mulf %871, %865 : vector<16x16xf32>
    %873 = arith.addf %855, %872 : vector<16x16xf32>
    %c225 = arith.constant 225 : index
    %874 = memref.load %arg2[%c225] : memref<288xf32, #tpu.memory_space<smem>>
    %875 = vector.broadcast %874 : f32 to vector<16x16xf32>
    %876 = arith.mulf %875, %865 : vector<16x16xf32>
    %877 = arith.addf %859, %876 : vector<16x16xf32>
    %c261 = arith.constant 261 : index
    %878 = memref.load %arg2[%c261] : memref<288xf32, #tpu.memory_space<smem>>
    %879 = vector.broadcast %878 : f32 to vector<16x16xf32>
    %880 = arith.mulf %879, %865 : vector<16x16xf32>
    %881 = arith.addf %863, %880 : vector<16x16xf32>
    %c1_198 = arith.constant 1 : index
    %c0_199 = arith.constant 0 : index
    %c1_200 = arith.constant 1 : index
    %882 = vector.load %arg7[%c1_198, %c0_199, %c1_200] : memref<4x18x18xf32, #tpu.memory_space<vmem>>, vector<1x16x16xf32>
    %883 = vector.shape_cast %882 : vector<1x16x16xf32> to vector<16x16xf32>
    %c154 = arith.constant 154 : index
    %884 = memref.load %arg2[%c154] : memref<288xf32, #tpu.memory_space<smem>>
    %885 = vector.broadcast %884 : f32 to vector<16x16xf32>
    %886 = arith.mulf %885, %883 : vector<16x16xf32>
    %887 = arith.addf %869, %886 : vector<16x16xf32>
    %c190 = arith.constant 190 : index
    %888 = memref.load %arg2[%c190] : memref<288xf32, #tpu.memory_space<smem>>
    %889 = vector.broadcast %888 : f32 to vector<16x16xf32>
    %890 = arith.mulf %889, %883 : vector<16x16xf32>
    %891 = arith.addf %873, %890 : vector<16x16xf32>
    %c226 = arith.constant 226 : index
    %892 = memref.load %arg2[%c226] : memref<288xf32, #tpu.memory_space<smem>>
    %893 = vector.broadcast %892 : f32 to vector<16x16xf32>
    %894 = arith.mulf %893, %883 : vector<16x16xf32>
    %895 = arith.addf %877, %894 : vector<16x16xf32>
    %c262 = arith.constant 262 : index
    %896 = memref.load %arg2[%c262] : memref<288xf32, #tpu.memory_space<smem>>
    %897 = vector.broadcast %896 : f32 to vector<16x16xf32>
    %898 = arith.mulf %897, %883 : vector<16x16xf32>
    %899 = arith.addf %881, %898 : vector<16x16xf32>
    %c1_201 = arith.constant 1 : index
    %c0_202 = arith.constant 0 : index
    %c2_203 = arith.constant 2 : index
    %900 = vector.load %arg7[%c1_201, %c0_202, %c2_203] : memref<4x18x18xf32, #tpu.memory_space<vmem>>, vector<1x16x16xf32>
    %901 = vector.shape_cast %900 : vector<1x16x16xf32> to vector<16x16xf32>
    %c155 = arith.constant 155 : index
    %902 = memref.load %arg2[%c155] : memref<288xf32, #tpu.memory_space<smem>>
    %903 = vector.broadcast %902 : f32 to vector<16x16xf32>
    %904 = arith.mulf %903, %901 : vector<16x16xf32>
    %905 = arith.addf %887, %904 : vector<16x16xf32>
    %c191 = arith.constant 191 : index
    %906 = memref.load %arg2[%c191] : memref<288xf32, #tpu.memory_space<smem>>
    %907 = vector.broadcast %906 : f32 to vector<16x16xf32>
    %908 = arith.mulf %907, %901 : vector<16x16xf32>
    %909 = arith.addf %891, %908 : vector<16x16xf32>
    %c227 = arith.constant 227 : index
    %910 = memref.load %arg2[%c227] : memref<288xf32, #tpu.memory_space<smem>>
    %911 = vector.broadcast %910 : f32 to vector<16x16xf32>
    %912 = arith.mulf %911, %901 : vector<16x16xf32>
    %913 = arith.addf %895, %912 : vector<16x16xf32>
    %c263 = arith.constant 263 : index
    %914 = memref.load %arg2[%c263] : memref<288xf32, #tpu.memory_space<smem>>
    %915 = vector.broadcast %914 : f32 to vector<16x16xf32>
    %916 = arith.mulf %915, %901 : vector<16x16xf32>
    %917 = arith.addf %899, %916 : vector<16x16xf32>
    %c1_204 = arith.constant 1 : index
    %c1_205 = arith.constant 1 : index
    %c0_206 = arith.constant 0 : index
    %918 = vector.load %arg7[%c1_204, %c1_205, %c0_206] : memref<4x18x18xf32, #tpu.memory_space<vmem>>, vector<1x16x16xf32>
    %919 = vector.shape_cast %918 : vector<1x16x16xf32> to vector<16x16xf32>
    %c156 = arith.constant 156 : index
    %920 = memref.load %arg2[%c156] : memref<288xf32, #tpu.memory_space<smem>>
    %921 = vector.broadcast %920 : f32 to vector<16x16xf32>
    %922 = arith.mulf %921, %919 : vector<16x16xf32>
    %923 = arith.addf %905, %922 : vector<16x16xf32>
    %c192 = arith.constant 192 : index
    %924 = memref.load %arg2[%c192] : memref<288xf32, #tpu.memory_space<smem>>
    %925 = vector.broadcast %924 : f32 to vector<16x16xf32>
    %926 = arith.mulf %925, %919 : vector<16x16xf32>
    %927 = arith.addf %909, %926 : vector<16x16xf32>
    %c228 = arith.constant 228 : index
    %928 = memref.load %arg2[%c228] : memref<288xf32, #tpu.memory_space<smem>>
    %929 = vector.broadcast %928 : f32 to vector<16x16xf32>
    %930 = arith.mulf %929, %919 : vector<16x16xf32>
    %931 = arith.addf %913, %930 : vector<16x16xf32>
    %c264 = arith.constant 264 : index
    %932 = memref.load %arg2[%c264] : memref<288xf32, #tpu.memory_space<smem>>
    %933 = vector.broadcast %932 : f32 to vector<16x16xf32>
    %934 = arith.mulf %933, %919 : vector<16x16xf32>
    %935 = arith.addf %917, %934 : vector<16x16xf32>
    %c1_207 = arith.constant 1 : index
    %c1_208 = arith.constant 1 : index
    %c1_209 = arith.constant 1 : index
    %936 = vector.load %arg7[%c1_207, %c1_208, %c1_209] : memref<4x18x18xf32, #tpu.memory_space<vmem>>, vector<1x16x16xf32>
    %937 = vector.shape_cast %936 : vector<1x16x16xf32> to vector<16x16xf32>
    %c157 = arith.constant 157 : index
    %938 = memref.load %arg2[%c157] : memref<288xf32, #tpu.memory_space<smem>>
    %939 = vector.broadcast %938 : f32 to vector<16x16xf32>
    %940 = arith.mulf %939, %937 : vector<16x16xf32>
    %941 = arith.addf %923, %940 : vector<16x16xf32>
    %c193 = arith.constant 193 : index
    %942 = memref.load %arg2[%c193] : memref<288xf32, #tpu.memory_space<smem>>
    %943 = vector.broadcast %942 : f32 to vector<16x16xf32>
    %944 = arith.mulf %943, %937 : vector<16x16xf32>
    %945 = arith.addf %927, %944 : vector<16x16xf32>
    %c229 = arith.constant 229 : index
    %946 = memref.load %arg2[%c229] : memref<288xf32, #tpu.memory_space<smem>>
    %947 = vector.broadcast %946 : f32 to vector<16x16xf32>
    %948 = arith.mulf %947, %937 : vector<16x16xf32>
    %949 = arith.addf %931, %948 : vector<16x16xf32>
    %c265 = arith.constant 265 : index
    %950 = memref.load %arg2[%c265] : memref<288xf32, #tpu.memory_space<smem>>
    %951 = vector.broadcast %950 : f32 to vector<16x16xf32>
    %952 = arith.mulf %951, %937 : vector<16x16xf32>
    %953 = arith.addf %935, %952 : vector<16x16xf32>
    %c1_210 = arith.constant 1 : index
    %c1_211 = arith.constant 1 : index
    %c2_212 = arith.constant 2 : index
    %954 = vector.load %arg7[%c1_210, %c1_211, %c2_212] : memref<4x18x18xf32, #tpu.memory_space<vmem>>, vector<1x16x16xf32>
    %955 = vector.shape_cast %954 : vector<1x16x16xf32> to vector<16x16xf32>
    %c158 = arith.constant 158 : index
    %956 = memref.load %arg2[%c158] : memref<288xf32, #tpu.memory_space<smem>>
    %957 = vector.broadcast %956 : f32 to vector<16x16xf32>
    %958 = arith.mulf %957, %955 : vector<16x16xf32>
    %959 = arith.addf %941, %958 : vector<16x16xf32>
    %c194 = arith.constant 194 : index
    %960 = memref.load %arg2[%c194] : memref<288xf32, #tpu.memory_space<smem>>
    %961 = vector.broadcast %960 : f32 to vector<16x16xf32>
    %962 = arith.mulf %961, %955 : vector<16x16xf32>
    %963 = arith.addf %945, %962 : vector<16x16xf32>
    %c230 = arith.constant 230 : index
    %964 = memref.load %arg2[%c230] : memref<288xf32, #tpu.memory_space<smem>>
    %965 = vector.broadcast %964 : f32 to vector<16x16xf32>
    %966 = arith.mulf %965, %955 : vector<16x16xf32>
    %967 = arith.addf %949, %966 : vector<16x16xf32>
    %c266 = arith.constant 266 : index
    %968 = memref.load %arg2[%c266] : memref<288xf32, #tpu.memory_space<smem>>
    %969 = vector.broadcast %968 : f32 to vector<16x16xf32>
    %970 = arith.mulf %969, %955 : vector<16x16xf32>
    %971 = arith.addf %953, %970 : vector<16x16xf32>
    %c1_213 = arith.constant 1 : index
    %c2_214 = arith.constant 2 : index
    %c0_215 = arith.constant 0 : index
    %972 = vector.load %arg7[%c1_213, %c2_214, %c0_215] : memref<4x18x18xf32, #tpu.memory_space<vmem>>, vector<1x16x16xf32>
    %973 = vector.shape_cast %972 : vector<1x16x16xf32> to vector<16x16xf32>
    %c159 = arith.constant 159 : index
    %974 = memref.load %arg2[%c159] : memref<288xf32, #tpu.memory_space<smem>>
    %975 = vector.broadcast %974 : f32 to vector<16x16xf32>
    %976 = arith.mulf %975, %973 : vector<16x16xf32>
    %977 = arith.addf %959, %976 : vector<16x16xf32>
    %c195 = arith.constant 195 : index
    %978 = memref.load %arg2[%c195] : memref<288xf32, #tpu.memory_space<smem>>
    %979 = vector.broadcast %978 : f32 to vector<16x16xf32>
    %980 = arith.mulf %979, %973 : vector<16x16xf32>
    %981 = arith.addf %963, %980 : vector<16x16xf32>
    %c231 = arith.constant 231 : index
    %982 = memref.load %arg2[%c231] : memref<288xf32, #tpu.memory_space<smem>>
    %983 = vector.broadcast %982 : f32 to vector<16x16xf32>
    %984 = arith.mulf %983, %973 : vector<16x16xf32>
    %985 = arith.addf %967, %984 : vector<16x16xf32>
    %c267 = arith.constant 267 : index
    %986 = memref.load %arg2[%c267] : memref<288xf32, #tpu.memory_space<smem>>
    %987 = vector.broadcast %986 : f32 to vector<16x16xf32>
    %988 = arith.mulf %987, %973 : vector<16x16xf32>
    %989 = arith.addf %971, %988 : vector<16x16xf32>
    %c1_216 = arith.constant 1 : index
    %c2_217 = arith.constant 2 : index
    %c1_218 = arith.constant 1 : index
    %990 = vector.load %arg7[%c1_216, %c2_217, %c1_218] : memref<4x18x18xf32, #tpu.memory_space<vmem>>, vector<1x16x16xf32>
    %991 = vector.shape_cast %990 : vector<1x16x16xf32> to vector<16x16xf32>
    %c160 = arith.constant 160 : index
    %992 = memref.load %arg2[%c160] : memref<288xf32, #tpu.memory_space<smem>>
    %993 = vector.broadcast %992 : f32 to vector<16x16xf32>
    %994 = arith.mulf %993, %991 : vector<16x16xf32>
    %995 = arith.addf %977, %994 : vector<16x16xf32>
    %c196 = arith.constant 196 : index
    %996 = memref.load %arg2[%c196] : memref<288xf32, #tpu.memory_space<smem>>
    %997 = vector.broadcast %996 : f32 to vector<16x16xf32>
    %998 = arith.mulf %997, %991 : vector<16x16xf32>
    %999 = arith.addf %981, %998 : vector<16x16xf32>
    %c232 = arith.constant 232 : index
    %1000 = memref.load %arg2[%c232] : memref<288xf32, #tpu.memory_space<smem>>
    %1001 = vector.broadcast %1000 : f32 to vector<16x16xf32>
    %1002 = arith.mulf %1001, %991 : vector<16x16xf32>
    %1003 = arith.addf %985, %1002 : vector<16x16xf32>
    %c268 = arith.constant 268 : index
    %1004 = memref.load %arg2[%c268] : memref<288xf32, #tpu.memory_space<smem>>
    %1005 = vector.broadcast %1004 : f32 to vector<16x16xf32>
    %1006 = arith.mulf %1005, %991 : vector<16x16xf32>
    %1007 = arith.addf %989, %1006 : vector<16x16xf32>
    %c1_219 = arith.constant 1 : index
    %c2_220 = arith.constant 2 : index
    %c2_221 = arith.constant 2 : index
    %1008 = vector.load %arg7[%c1_219, %c2_220, %c2_221] : memref<4x18x18xf32, #tpu.memory_space<vmem>>, vector<1x16x16xf32>
    %1009 = vector.shape_cast %1008 : vector<1x16x16xf32> to vector<16x16xf32>
    %c161 = arith.constant 161 : index
    %1010 = memref.load %arg2[%c161] : memref<288xf32, #tpu.memory_space<smem>>
    %1011 = vector.broadcast %1010 : f32 to vector<16x16xf32>
    %1012 = arith.mulf %1011, %1009 : vector<16x16xf32>
    %1013 = arith.addf %995, %1012 : vector<16x16xf32>
    %c197 = arith.constant 197 : index
    %1014 = memref.load %arg2[%c197] : memref<288xf32, #tpu.memory_space<smem>>
    %1015 = vector.broadcast %1014 : f32 to vector<16x16xf32>
    %1016 = arith.mulf %1015, %1009 : vector<16x16xf32>
    %1017 = arith.addf %999, %1016 : vector<16x16xf32>
    %c233 = arith.constant 233 : index
    %1018 = memref.load %arg2[%c233] : memref<288xf32, #tpu.memory_space<smem>>
    %1019 = vector.broadcast %1018 : f32 to vector<16x16xf32>
    %1020 = arith.mulf %1019, %1009 : vector<16x16xf32>
    %1021 = arith.addf %1003, %1020 : vector<16x16xf32>
    %c269 = arith.constant 269 : index
    %1022 = memref.load %arg2[%c269] : memref<288xf32, #tpu.memory_space<smem>>
    %1023 = vector.broadcast %1022 : f32 to vector<16x16xf32>
    %1024 = arith.mulf %1023, %1009 : vector<16x16xf32>
    %1025 = arith.addf %1007, %1024 : vector<16x16xf32>
    %c2_222 = arith.constant 2 : index
    %c0_223 = arith.constant 0 : index
    %c0_224 = arith.constant 0 : index
    %1026 = vector.load %arg7[%c2_222, %c0_223, %c0_224] : memref<4x18x18xf32, #tpu.memory_space<vmem>>, vector<1x16x16xf32>
    %1027 = vector.shape_cast %1026 : vector<1x16x16xf32> to vector<16x16xf32>
    %c162 = arith.constant 162 : index
    %1028 = memref.load %arg2[%c162] : memref<288xf32, #tpu.memory_space<smem>>
    %1029 = vector.broadcast %1028 : f32 to vector<16x16xf32>
    %1030 = arith.mulf %1029, %1027 : vector<16x16xf32>
    %1031 = arith.addf %1013, %1030 : vector<16x16xf32>
    %c198 = arith.constant 198 : index
    %1032 = memref.load %arg2[%c198] : memref<288xf32, #tpu.memory_space<smem>>
    %1033 = vector.broadcast %1032 : f32 to vector<16x16xf32>
    %1034 = arith.mulf %1033, %1027 : vector<16x16xf32>
    %1035 = arith.addf %1017, %1034 : vector<16x16xf32>
    %c234 = arith.constant 234 : index
    %1036 = memref.load %arg2[%c234] : memref<288xf32, #tpu.memory_space<smem>>
    %1037 = vector.broadcast %1036 : f32 to vector<16x16xf32>
    %1038 = arith.mulf %1037, %1027 : vector<16x16xf32>
    %1039 = arith.addf %1021, %1038 : vector<16x16xf32>
    %c270 = arith.constant 270 : index
    %1040 = memref.load %arg2[%c270] : memref<288xf32, #tpu.memory_space<smem>>
    %1041 = vector.broadcast %1040 : f32 to vector<16x16xf32>
    %1042 = arith.mulf %1041, %1027 : vector<16x16xf32>
    %1043 = arith.addf %1025, %1042 : vector<16x16xf32>
    %c2_225 = arith.constant 2 : index
    %c0_226 = arith.constant 0 : index
    %c1_227 = arith.constant 1 : index
    %1044 = vector.load %arg7[%c2_225, %c0_226, %c1_227] : memref<4x18x18xf32, #tpu.memory_space<vmem>>, vector<1x16x16xf32>
    %1045 = vector.shape_cast %1044 : vector<1x16x16xf32> to vector<16x16xf32>
    %c163 = arith.constant 163 : index
    %1046 = memref.load %arg2[%c163] : memref<288xf32, #tpu.memory_space<smem>>
    %1047 = vector.broadcast %1046 : f32 to vector<16x16xf32>
    %1048 = arith.mulf %1047, %1045 : vector<16x16xf32>
    %1049 = arith.addf %1031, %1048 : vector<16x16xf32>
    %c199 = arith.constant 199 : index
    %1050 = memref.load %arg2[%c199] : memref<288xf32, #tpu.memory_space<smem>>
    %1051 = vector.broadcast %1050 : f32 to vector<16x16xf32>
    %1052 = arith.mulf %1051, %1045 : vector<16x16xf32>
    %1053 = arith.addf %1035, %1052 : vector<16x16xf32>
    %c235 = arith.constant 235 : index
    %1054 = memref.load %arg2[%c235] : memref<288xf32, #tpu.memory_space<smem>>
    %1055 = vector.broadcast %1054 : f32 to vector<16x16xf32>
    %1056 = arith.mulf %1055, %1045 : vector<16x16xf32>
    %1057 = arith.addf %1039, %1056 : vector<16x16xf32>
    %c271 = arith.constant 271 : index
    %1058 = memref.load %arg2[%c271] : memref<288xf32, #tpu.memory_space<smem>>
    %1059 = vector.broadcast %1058 : f32 to vector<16x16xf32>
    %1060 = arith.mulf %1059, %1045 : vector<16x16xf32>
    %1061 = arith.addf %1043, %1060 : vector<16x16xf32>
    %c2_228 = arith.constant 2 : index
    %c0_229 = arith.constant 0 : index
    %c2_230 = arith.constant 2 : index
    %1062 = vector.load %arg7[%c2_228, %c0_229, %c2_230] : memref<4x18x18xf32, #tpu.memory_space<vmem>>, vector<1x16x16xf32>
    %1063 = vector.shape_cast %1062 : vector<1x16x16xf32> to vector<16x16xf32>
    %c164 = arith.constant 164 : index
    %1064 = memref.load %arg2[%c164] : memref<288xf32, #tpu.memory_space<smem>>
    %1065 = vector.broadcast %1064 : f32 to vector<16x16xf32>
    %1066 = arith.mulf %1065, %1063 : vector<16x16xf32>
    %1067 = arith.addf %1049, %1066 : vector<16x16xf32>
    %c200 = arith.constant 200 : index
    %1068 = memref.load %arg2[%c200] : memref<288xf32, #tpu.memory_space<smem>>
    %1069 = vector.broadcast %1068 : f32 to vector<16x16xf32>
    %1070 = arith.mulf %1069, %1063 : vector<16x16xf32>
    %1071 = arith.addf %1053, %1070 : vector<16x16xf32>
    %c236 = arith.constant 236 : index
    %1072 = memref.load %arg2[%c236] : memref<288xf32, #tpu.memory_space<smem>>
    %1073 = vector.broadcast %1072 : f32 to vector<16x16xf32>
    %1074 = arith.mulf %1073, %1063 : vector<16x16xf32>
    %1075 = arith.addf %1057, %1074 : vector<16x16xf32>
    %c272 = arith.constant 272 : index
    %1076 = memref.load %arg2[%c272] : memref<288xf32, #tpu.memory_space<smem>>
    %1077 = vector.broadcast %1076 : f32 to vector<16x16xf32>
    %1078 = arith.mulf %1077, %1063 : vector<16x16xf32>
    %1079 = arith.addf %1061, %1078 : vector<16x16xf32>
    %c2_231 = arith.constant 2 : index
    %c1_232 = arith.constant 1 : index
    %c0_233 = arith.constant 0 : index
    %1080 = vector.load %arg7[%c2_231, %c1_232, %c0_233] : memref<4x18x18xf32, #tpu.memory_space<vmem>>, vector<1x16x16xf32>
    %1081 = vector.shape_cast %1080 : vector<1x16x16xf32> to vector<16x16xf32>
    %c165 = arith.constant 165 : index
    %1082 = memref.load %arg2[%c165] : memref<288xf32, #tpu.memory_space<smem>>
    %1083 = vector.broadcast %1082 : f32 to vector<16x16xf32>
    %1084 = arith.mulf %1083, %1081 : vector<16x16xf32>
    %1085 = arith.addf %1067, %1084 : vector<16x16xf32>
    %c201 = arith.constant 201 : index
    %1086 = memref.load %arg2[%c201] : memref<288xf32, #tpu.memory_space<smem>>
    %1087 = vector.broadcast %1086 : f32 to vector<16x16xf32>
    %1088 = arith.mulf %1087, %1081 : vector<16x16xf32>
    %1089 = arith.addf %1071, %1088 : vector<16x16xf32>
    %c237 = arith.constant 237 : index
    %1090 = memref.load %arg2[%c237] : memref<288xf32, #tpu.memory_space<smem>>
    %1091 = vector.broadcast %1090 : f32 to vector<16x16xf32>
    %1092 = arith.mulf %1091, %1081 : vector<16x16xf32>
    %1093 = arith.addf %1075, %1092 : vector<16x16xf32>
    %c273 = arith.constant 273 : index
    %1094 = memref.load %arg2[%c273] : memref<288xf32, #tpu.memory_space<smem>>
    %1095 = vector.broadcast %1094 : f32 to vector<16x16xf32>
    %1096 = arith.mulf %1095, %1081 : vector<16x16xf32>
    %1097 = arith.addf %1079, %1096 : vector<16x16xf32>
    %c2_234 = arith.constant 2 : index
    %c1_235 = arith.constant 1 : index
    %c1_236 = arith.constant 1 : index
    %1098 = vector.load %arg7[%c2_234, %c1_235, %c1_236] : memref<4x18x18xf32, #tpu.memory_space<vmem>>, vector<1x16x16xf32>
    %1099 = vector.shape_cast %1098 : vector<1x16x16xf32> to vector<16x16xf32>
    %c166 = arith.constant 166 : index
    %1100 = memref.load %arg2[%c166] : memref<288xf32, #tpu.memory_space<smem>>
    %1101 = vector.broadcast %1100 : f32 to vector<16x16xf32>
    %1102 = arith.mulf %1101, %1099 : vector<16x16xf32>
    %1103 = arith.addf %1085, %1102 : vector<16x16xf32>
    %c202 = arith.constant 202 : index
    %1104 = memref.load %arg2[%c202] : memref<288xf32, #tpu.memory_space<smem>>
    %1105 = vector.broadcast %1104 : f32 to vector<16x16xf32>
    %1106 = arith.mulf %1105, %1099 : vector<16x16xf32>
    %1107 = arith.addf %1089, %1106 : vector<16x16xf32>
    %c238 = arith.constant 238 : index
    %1108 = memref.load %arg2[%c238] : memref<288xf32, #tpu.memory_space<smem>>
    %1109 = vector.broadcast %1108 : f32 to vector<16x16xf32>
    %1110 = arith.mulf %1109, %1099 : vector<16x16xf32>
    %1111 = arith.addf %1093, %1110 : vector<16x16xf32>
    %c274 = arith.constant 274 : index
    %1112 = memref.load %arg2[%c274] : memref<288xf32, #tpu.memory_space<smem>>
    %1113 = vector.broadcast %1112 : f32 to vector<16x16xf32>
    %1114 = arith.mulf %1113, %1099 : vector<16x16xf32>
    %1115 = arith.addf %1097, %1114 : vector<16x16xf32>
    %c2_237 = arith.constant 2 : index
    %c1_238 = arith.constant 1 : index
    %c2_239 = arith.constant 2 : index
    %1116 = vector.load %arg7[%c2_237, %c1_238, %c2_239] : memref<4x18x18xf32, #tpu.memory_space<vmem>>, vector<1x16x16xf32>
    %1117 = vector.shape_cast %1116 : vector<1x16x16xf32> to vector<16x16xf32>
    %c167 = arith.constant 167 : index
    %1118 = memref.load %arg2[%c167] : memref<288xf32, #tpu.memory_space<smem>>
    %1119 = vector.broadcast %1118 : f32 to vector<16x16xf32>
    %1120 = arith.mulf %1119, %1117 : vector<16x16xf32>
    %1121 = arith.addf %1103, %1120 : vector<16x16xf32>
    %c203 = arith.constant 203 : index
    %1122 = memref.load %arg2[%c203] : memref<288xf32, #tpu.memory_space<smem>>
    %1123 = vector.broadcast %1122 : f32 to vector<16x16xf32>
    %1124 = arith.mulf %1123, %1117 : vector<16x16xf32>
    %1125 = arith.addf %1107, %1124 : vector<16x16xf32>
    %c239 = arith.constant 239 : index
    %1126 = memref.load %arg2[%c239] : memref<288xf32, #tpu.memory_space<smem>>
    %1127 = vector.broadcast %1126 : f32 to vector<16x16xf32>
    %1128 = arith.mulf %1127, %1117 : vector<16x16xf32>
    %1129 = arith.addf %1111, %1128 : vector<16x16xf32>
    %c275 = arith.constant 275 : index
    %1130 = memref.load %arg2[%c275] : memref<288xf32, #tpu.memory_space<smem>>
    %1131 = vector.broadcast %1130 : f32 to vector<16x16xf32>
    %1132 = arith.mulf %1131, %1117 : vector<16x16xf32>
    %1133 = arith.addf %1115, %1132 : vector<16x16xf32>
    %c2_240 = arith.constant 2 : index
    %c2_241 = arith.constant 2 : index
    %c0_242 = arith.constant 0 : index
    %1134 = vector.load %arg7[%c2_240, %c2_241, %c0_242] : memref<4x18x18xf32, #tpu.memory_space<vmem>>, vector<1x16x16xf32>
    %1135 = vector.shape_cast %1134 : vector<1x16x16xf32> to vector<16x16xf32>
    %c168 = arith.constant 168 : index
    %1136 = memref.load %arg2[%c168] : memref<288xf32, #tpu.memory_space<smem>>
    %1137 = vector.broadcast %1136 : f32 to vector<16x16xf32>
    %1138 = arith.mulf %1137, %1135 : vector<16x16xf32>
    %1139 = arith.addf %1121, %1138 : vector<16x16xf32>
    %c204 = arith.constant 204 : index
    %1140 = memref.load %arg2[%c204] : memref<288xf32, #tpu.memory_space<smem>>
    %1141 = vector.broadcast %1140 : f32 to vector<16x16xf32>
    %1142 = arith.mulf %1141, %1135 : vector<16x16xf32>
    %1143 = arith.addf %1125, %1142 : vector<16x16xf32>
    %c240 = arith.constant 240 : index
    %1144 = memref.load %arg2[%c240] : memref<288xf32, #tpu.memory_space<smem>>
    %1145 = vector.broadcast %1144 : f32 to vector<16x16xf32>
    %1146 = arith.mulf %1145, %1135 : vector<16x16xf32>
    %1147 = arith.addf %1129, %1146 : vector<16x16xf32>
    %c276 = arith.constant 276 : index
    %1148 = memref.load %arg2[%c276] : memref<288xf32, #tpu.memory_space<smem>>
    %1149 = vector.broadcast %1148 : f32 to vector<16x16xf32>
    %1150 = arith.mulf %1149, %1135 : vector<16x16xf32>
    %1151 = arith.addf %1133, %1150 : vector<16x16xf32>
    %c2_243 = arith.constant 2 : index
    %c2_244 = arith.constant 2 : index
    %c1_245 = arith.constant 1 : index
    %1152 = vector.load %arg7[%c2_243, %c2_244, %c1_245] : memref<4x18x18xf32, #tpu.memory_space<vmem>>, vector<1x16x16xf32>
    %1153 = vector.shape_cast %1152 : vector<1x16x16xf32> to vector<16x16xf32>
    %c169 = arith.constant 169 : index
    %1154 = memref.load %arg2[%c169] : memref<288xf32, #tpu.memory_space<smem>>
    %1155 = vector.broadcast %1154 : f32 to vector<16x16xf32>
    %1156 = arith.mulf %1155, %1153 : vector<16x16xf32>
    %1157 = arith.addf %1139, %1156 : vector<16x16xf32>
    %c205 = arith.constant 205 : index
    %1158 = memref.load %arg2[%c205] : memref<288xf32, #tpu.memory_space<smem>>
    %1159 = vector.broadcast %1158 : f32 to vector<16x16xf32>
    %1160 = arith.mulf %1159, %1153 : vector<16x16xf32>
    %1161 = arith.addf %1143, %1160 : vector<16x16xf32>
    %c241 = arith.constant 241 : index
    %1162 = memref.load %arg2[%c241] : memref<288xf32, #tpu.memory_space<smem>>
    %1163 = vector.broadcast %1162 : f32 to vector<16x16xf32>
    %1164 = arith.mulf %1163, %1153 : vector<16x16xf32>
    %1165 = arith.addf %1147, %1164 : vector<16x16xf32>
    %c277 = arith.constant 277 : index
    %1166 = memref.load %arg2[%c277] : memref<288xf32, #tpu.memory_space<smem>>
    %1167 = vector.broadcast %1166 : f32 to vector<16x16xf32>
    %1168 = arith.mulf %1167, %1153 : vector<16x16xf32>
    %1169 = arith.addf %1151, %1168 : vector<16x16xf32>
    %c2_246 = arith.constant 2 : index
    %c2_247 = arith.constant 2 : index
    %c2_248 = arith.constant 2 : index
    %1170 = vector.load %arg7[%c2_246, %c2_247, %c2_248] : memref<4x18x18xf32, #tpu.memory_space<vmem>>, vector<1x16x16xf32>
    %1171 = vector.shape_cast %1170 : vector<1x16x16xf32> to vector<16x16xf32>
    %c170 = arith.constant 170 : index
    %1172 = memref.load %arg2[%c170] : memref<288xf32, #tpu.memory_space<smem>>
    %1173 = vector.broadcast %1172 : f32 to vector<16x16xf32>
    %1174 = arith.mulf %1173, %1171 : vector<16x16xf32>
    %1175 = arith.addf %1157, %1174 : vector<16x16xf32>
    %c206 = arith.constant 206 : index
    %1176 = memref.load %arg2[%c206] : memref<288xf32, #tpu.memory_space<smem>>
    %1177 = vector.broadcast %1176 : f32 to vector<16x16xf32>
    %1178 = arith.mulf %1177, %1171 : vector<16x16xf32>
    %1179 = arith.addf %1161, %1178 : vector<16x16xf32>
    %c242 = arith.constant 242 : index
    %1180 = memref.load %arg2[%c242] : memref<288xf32, #tpu.memory_space<smem>>
    %1181 = vector.broadcast %1180 : f32 to vector<16x16xf32>
    %1182 = arith.mulf %1181, %1171 : vector<16x16xf32>
    %1183 = arith.addf %1165, %1182 : vector<16x16xf32>
    %c278 = arith.constant 278 : index
    %1184 = memref.load %arg2[%c278] : memref<288xf32, #tpu.memory_space<smem>>
    %1185 = vector.broadcast %1184 : f32 to vector<16x16xf32>
    %1186 = arith.mulf %1185, %1171 : vector<16x16xf32>
    %1187 = arith.addf %1169, %1186 : vector<16x16xf32>
    %c3_249 = arith.constant 3 : index
    %c0_250 = arith.constant 0 : index
    %c0_251 = arith.constant 0 : index
    %1188 = vector.load %arg7[%c3_249, %c0_250, %c0_251] : memref<4x18x18xf32, #tpu.memory_space<vmem>>, vector<1x16x16xf32>
    %1189 = vector.shape_cast %1188 : vector<1x16x16xf32> to vector<16x16xf32>
    %c171 = arith.constant 171 : index
    %1190 = memref.load %arg2[%c171] : memref<288xf32, #tpu.memory_space<smem>>
    %1191 = vector.broadcast %1190 : f32 to vector<16x16xf32>
    %1192 = arith.mulf %1191, %1189 : vector<16x16xf32>
    %1193 = arith.addf %1175, %1192 : vector<16x16xf32>
    %c207 = arith.constant 207 : index
    %1194 = memref.load %arg2[%c207] : memref<288xf32, #tpu.memory_space<smem>>
    %1195 = vector.broadcast %1194 : f32 to vector<16x16xf32>
    %1196 = arith.mulf %1195, %1189 : vector<16x16xf32>
    %1197 = arith.addf %1179, %1196 : vector<16x16xf32>
    %c243 = arith.constant 243 : index
    %1198 = memref.load %arg2[%c243] : memref<288xf32, #tpu.memory_space<smem>>
    %1199 = vector.broadcast %1198 : f32 to vector<16x16xf32>
    %1200 = arith.mulf %1199, %1189 : vector<16x16xf32>
    %1201 = arith.addf %1183, %1200 : vector<16x16xf32>
    %c279 = arith.constant 279 : index
    %1202 = memref.load %arg2[%c279] : memref<288xf32, #tpu.memory_space<smem>>
    %1203 = vector.broadcast %1202 : f32 to vector<16x16xf32>
    %1204 = arith.mulf %1203, %1189 : vector<16x16xf32>
    %1205 = arith.addf %1187, %1204 : vector<16x16xf32>
    %c3_252 = arith.constant 3 : index
    %c0_253 = arith.constant 0 : index
    %c1_254 = arith.constant 1 : index
    %1206 = vector.load %arg7[%c3_252, %c0_253, %c1_254] : memref<4x18x18xf32, #tpu.memory_space<vmem>>, vector<1x16x16xf32>
    %1207 = vector.shape_cast %1206 : vector<1x16x16xf32> to vector<16x16xf32>
    %c172 = arith.constant 172 : index
    %1208 = memref.load %arg2[%c172] : memref<288xf32, #tpu.memory_space<smem>>
    %1209 = vector.broadcast %1208 : f32 to vector<16x16xf32>
    %1210 = arith.mulf %1209, %1207 : vector<16x16xf32>
    %1211 = arith.addf %1193, %1210 : vector<16x16xf32>
    %c208 = arith.constant 208 : index
    %1212 = memref.load %arg2[%c208] : memref<288xf32, #tpu.memory_space<smem>>
    %1213 = vector.broadcast %1212 : f32 to vector<16x16xf32>
    %1214 = arith.mulf %1213, %1207 : vector<16x16xf32>
    %1215 = arith.addf %1197, %1214 : vector<16x16xf32>
    %c244 = arith.constant 244 : index
    %1216 = memref.load %arg2[%c244] : memref<288xf32, #tpu.memory_space<smem>>
    %1217 = vector.broadcast %1216 : f32 to vector<16x16xf32>
    %1218 = arith.mulf %1217, %1207 : vector<16x16xf32>
    %1219 = arith.addf %1201, %1218 : vector<16x16xf32>
    %c280 = arith.constant 280 : index
    %1220 = memref.load %arg2[%c280] : memref<288xf32, #tpu.memory_space<smem>>
    %1221 = vector.broadcast %1220 : f32 to vector<16x16xf32>
    %1222 = arith.mulf %1221, %1207 : vector<16x16xf32>
    %1223 = arith.addf %1205, %1222 : vector<16x16xf32>
    %c3_255 = arith.constant 3 : index
    %c0_256 = arith.constant 0 : index
    %c2_257 = arith.constant 2 : index
    %1224 = vector.load %arg7[%c3_255, %c0_256, %c2_257] : memref<4x18x18xf32, #tpu.memory_space<vmem>>, vector<1x16x16xf32>
    %1225 = vector.shape_cast %1224 : vector<1x16x16xf32> to vector<16x16xf32>
    %c173 = arith.constant 173 : index
    %1226 = memref.load %arg2[%c173] : memref<288xf32, #tpu.memory_space<smem>>
    %1227 = vector.broadcast %1226 : f32 to vector<16x16xf32>
    %1228 = arith.mulf %1227, %1225 : vector<16x16xf32>
    %1229 = arith.addf %1211, %1228 : vector<16x16xf32>
    %c209 = arith.constant 209 : index
    %1230 = memref.load %arg2[%c209] : memref<288xf32, #tpu.memory_space<smem>>
    %1231 = vector.broadcast %1230 : f32 to vector<16x16xf32>
    %1232 = arith.mulf %1231, %1225 : vector<16x16xf32>
    %1233 = arith.addf %1215, %1232 : vector<16x16xf32>
    %c245 = arith.constant 245 : index
    %1234 = memref.load %arg2[%c245] : memref<288xf32, #tpu.memory_space<smem>>
    %1235 = vector.broadcast %1234 : f32 to vector<16x16xf32>
    %1236 = arith.mulf %1235, %1225 : vector<16x16xf32>
    %1237 = arith.addf %1219, %1236 : vector<16x16xf32>
    %c281 = arith.constant 281 : index
    %1238 = memref.load %arg2[%c281] : memref<288xf32, #tpu.memory_space<smem>>
    %1239 = vector.broadcast %1238 : f32 to vector<16x16xf32>
    %1240 = arith.mulf %1239, %1225 : vector<16x16xf32>
    %1241 = arith.addf %1223, %1240 : vector<16x16xf32>
    %c3_258 = arith.constant 3 : index
    %c1_259 = arith.constant 1 : index
    %c0_260 = arith.constant 0 : index
    %1242 = vector.load %arg7[%c3_258, %c1_259, %c0_260] : memref<4x18x18xf32, #tpu.memory_space<vmem>>, vector<1x16x16xf32>
    %1243 = vector.shape_cast %1242 : vector<1x16x16xf32> to vector<16x16xf32>
    %c174 = arith.constant 174 : index
    %1244 = memref.load %arg2[%c174] : memref<288xf32, #tpu.memory_space<smem>>
    %1245 = vector.broadcast %1244 : f32 to vector<16x16xf32>
    %1246 = arith.mulf %1245, %1243 : vector<16x16xf32>
    %1247 = arith.addf %1229, %1246 : vector<16x16xf32>
    %c210 = arith.constant 210 : index
    %1248 = memref.load %arg2[%c210] : memref<288xf32, #tpu.memory_space<smem>>
    %1249 = vector.broadcast %1248 : f32 to vector<16x16xf32>
    %1250 = arith.mulf %1249, %1243 : vector<16x16xf32>
    %1251 = arith.addf %1233, %1250 : vector<16x16xf32>
    %c246 = arith.constant 246 : index
    %1252 = memref.load %arg2[%c246] : memref<288xf32, #tpu.memory_space<smem>>
    %1253 = vector.broadcast %1252 : f32 to vector<16x16xf32>
    %1254 = arith.mulf %1253, %1243 : vector<16x16xf32>
    %1255 = arith.addf %1237, %1254 : vector<16x16xf32>
    %c282 = arith.constant 282 : index
    %1256 = memref.load %arg2[%c282] : memref<288xf32, #tpu.memory_space<smem>>
    %1257 = vector.broadcast %1256 : f32 to vector<16x16xf32>
    %1258 = arith.mulf %1257, %1243 : vector<16x16xf32>
    %1259 = arith.addf %1241, %1258 : vector<16x16xf32>
    %c3_261 = arith.constant 3 : index
    %c1_262 = arith.constant 1 : index
    %c1_263 = arith.constant 1 : index
    %1260 = vector.load %arg7[%c3_261, %c1_262, %c1_263] : memref<4x18x18xf32, #tpu.memory_space<vmem>>, vector<1x16x16xf32>
    %1261 = vector.shape_cast %1260 : vector<1x16x16xf32> to vector<16x16xf32>
    %c175 = arith.constant 175 : index
    %1262 = memref.load %arg2[%c175] : memref<288xf32, #tpu.memory_space<smem>>
    %1263 = vector.broadcast %1262 : f32 to vector<16x16xf32>
    %1264 = arith.mulf %1263, %1261 : vector<16x16xf32>
    %1265 = arith.addf %1247, %1264 : vector<16x16xf32>
    %c211 = arith.constant 211 : index
    %1266 = memref.load %arg2[%c211] : memref<288xf32, #tpu.memory_space<smem>>
    %1267 = vector.broadcast %1266 : f32 to vector<16x16xf32>
    %1268 = arith.mulf %1267, %1261 : vector<16x16xf32>
    %1269 = arith.addf %1251, %1268 : vector<16x16xf32>
    %c247 = arith.constant 247 : index
    %1270 = memref.load %arg2[%c247] : memref<288xf32, #tpu.memory_space<smem>>
    %1271 = vector.broadcast %1270 : f32 to vector<16x16xf32>
    %1272 = arith.mulf %1271, %1261 : vector<16x16xf32>
    %1273 = arith.addf %1255, %1272 : vector<16x16xf32>
    %c283 = arith.constant 283 : index
    %1274 = memref.load %arg2[%c283] : memref<288xf32, #tpu.memory_space<smem>>
    %1275 = vector.broadcast %1274 : f32 to vector<16x16xf32>
    %1276 = arith.mulf %1275, %1261 : vector<16x16xf32>
    %1277 = arith.addf %1259, %1276 : vector<16x16xf32>
    %c3_264 = arith.constant 3 : index
    %c1_265 = arith.constant 1 : index
    %c2_266 = arith.constant 2 : index
    %1278 = vector.load %arg7[%c3_264, %c1_265, %c2_266] : memref<4x18x18xf32, #tpu.memory_space<vmem>>, vector<1x16x16xf32>
    %1279 = vector.shape_cast %1278 : vector<1x16x16xf32> to vector<16x16xf32>
    %c176 = arith.constant 176 : index
    %1280 = memref.load %arg2[%c176] : memref<288xf32, #tpu.memory_space<smem>>
    %1281 = vector.broadcast %1280 : f32 to vector<16x16xf32>
    %1282 = arith.mulf %1281, %1279 : vector<16x16xf32>
    %1283 = arith.addf %1265, %1282 : vector<16x16xf32>
    %c212 = arith.constant 212 : index
    %1284 = memref.load %arg2[%c212] : memref<288xf32, #tpu.memory_space<smem>>
    %1285 = vector.broadcast %1284 : f32 to vector<16x16xf32>
    %1286 = arith.mulf %1285, %1279 : vector<16x16xf32>
    %1287 = arith.addf %1269, %1286 : vector<16x16xf32>
    %c248 = arith.constant 248 : index
    %1288 = memref.load %arg2[%c248] : memref<288xf32, #tpu.memory_space<smem>>
    %1289 = vector.broadcast %1288 : f32 to vector<16x16xf32>
    %1290 = arith.mulf %1289, %1279 : vector<16x16xf32>
    %1291 = arith.addf %1273, %1290 : vector<16x16xf32>
    %c284 = arith.constant 284 : index
    %1292 = memref.load %arg2[%c284] : memref<288xf32, #tpu.memory_space<smem>>
    %1293 = vector.broadcast %1292 : f32 to vector<16x16xf32>
    %1294 = arith.mulf %1293, %1279 : vector<16x16xf32>
    %1295 = arith.addf %1277, %1294 : vector<16x16xf32>
    %c3_267 = arith.constant 3 : index
    %c2_268 = arith.constant 2 : index
    %c0_269 = arith.constant 0 : index
    %1296 = vector.load %arg7[%c3_267, %c2_268, %c0_269] : memref<4x18x18xf32, #tpu.memory_space<vmem>>, vector<1x16x16xf32>
    %1297 = vector.shape_cast %1296 : vector<1x16x16xf32> to vector<16x16xf32>
    %c177 = arith.constant 177 : index
    %1298 = memref.load %arg2[%c177] : memref<288xf32, #tpu.memory_space<smem>>
    %1299 = vector.broadcast %1298 : f32 to vector<16x16xf32>
    %1300 = arith.mulf %1299, %1297 : vector<16x16xf32>
    %1301 = arith.addf %1283, %1300 : vector<16x16xf32>
    %c213 = arith.constant 213 : index
    %1302 = memref.load %arg2[%c213] : memref<288xf32, #tpu.memory_space<smem>>
    %1303 = vector.broadcast %1302 : f32 to vector<16x16xf32>
    %1304 = arith.mulf %1303, %1297 : vector<16x16xf32>
    %1305 = arith.addf %1287, %1304 : vector<16x16xf32>
    %c249 = arith.constant 249 : index
    %1306 = memref.load %arg2[%c249] : memref<288xf32, #tpu.memory_space<smem>>
    %1307 = vector.broadcast %1306 : f32 to vector<16x16xf32>
    %1308 = arith.mulf %1307, %1297 : vector<16x16xf32>
    %1309 = arith.addf %1291, %1308 : vector<16x16xf32>
    %c285 = arith.constant 285 : index
    %1310 = memref.load %arg2[%c285] : memref<288xf32, #tpu.memory_space<smem>>
    %1311 = vector.broadcast %1310 : f32 to vector<16x16xf32>
    %1312 = arith.mulf %1311, %1297 : vector<16x16xf32>
    %1313 = arith.addf %1295, %1312 : vector<16x16xf32>
    %c3_270 = arith.constant 3 : index
    %c2_271 = arith.constant 2 : index
    %c1_272 = arith.constant 1 : index
    %1314 = vector.load %arg7[%c3_270, %c2_271, %c1_272] : memref<4x18x18xf32, #tpu.memory_space<vmem>>, vector<1x16x16xf32>
    %1315 = vector.shape_cast %1314 : vector<1x16x16xf32> to vector<16x16xf32>
    %c178 = arith.constant 178 : index
    %1316 = memref.load %arg2[%c178] : memref<288xf32, #tpu.memory_space<smem>>
    %1317 = vector.broadcast %1316 : f32 to vector<16x16xf32>
    %1318 = arith.mulf %1317, %1315 : vector<16x16xf32>
    %1319 = arith.addf %1301, %1318 : vector<16x16xf32>
    %c214 = arith.constant 214 : index
    %1320 = memref.load %arg2[%c214] : memref<288xf32, #tpu.memory_space<smem>>
    %1321 = vector.broadcast %1320 : f32 to vector<16x16xf32>
    %1322 = arith.mulf %1321, %1315 : vector<16x16xf32>
    %1323 = arith.addf %1305, %1322 : vector<16x16xf32>
    %c250 = arith.constant 250 : index
    %1324 = memref.load %arg2[%c250] : memref<288xf32, #tpu.memory_space<smem>>
    %1325 = vector.broadcast %1324 : f32 to vector<16x16xf32>
    %1326 = arith.mulf %1325, %1315 : vector<16x16xf32>
    %1327 = arith.addf %1309, %1326 : vector<16x16xf32>
    %c286 = arith.constant 286 : index
    %1328 = memref.load %arg2[%c286] : memref<288xf32, #tpu.memory_space<smem>>
    %1329 = vector.broadcast %1328 : f32 to vector<16x16xf32>
    %1330 = arith.mulf %1329, %1315 : vector<16x16xf32>
    %1331 = arith.addf %1313, %1330 : vector<16x16xf32>
    %c3_273 = arith.constant 3 : index
    %c2_274 = arith.constant 2 : index
    %c2_275 = arith.constant 2 : index
    %1332 = vector.load %arg7[%c3_273, %c2_274, %c2_275] : memref<4x18x18xf32, #tpu.memory_space<vmem>>, vector<1x16x16xf32>
    %1333 = vector.shape_cast %1332 : vector<1x16x16xf32> to vector<16x16xf32>
    %c179 = arith.constant 179 : index
    %1334 = memref.load %arg2[%c179] : memref<288xf32, #tpu.memory_space<smem>>
    %1335 = vector.broadcast %1334 : f32 to vector<16x16xf32>
    %1336 = arith.mulf %1335, %1333 : vector<16x16xf32>
    %1337 = arith.addf %1319, %1336 : vector<16x16xf32>
    %c215 = arith.constant 215 : index
    %1338 = memref.load %arg2[%c215] : memref<288xf32, #tpu.memory_space<smem>>
    %1339 = vector.broadcast %1338 : f32 to vector<16x16xf32>
    %1340 = arith.mulf %1339, %1333 : vector<16x16xf32>
    %1341 = arith.addf %1323, %1340 : vector<16x16xf32>
    %c251 = arith.constant 251 : index
    %1342 = memref.load %arg2[%c251] : memref<288xf32, #tpu.memory_space<smem>>
    %1343 = vector.broadcast %1342 : f32 to vector<16x16xf32>
    %1344 = arith.mulf %1343, %1333 : vector<16x16xf32>
    %1345 = arith.addf %1327, %1344 : vector<16x16xf32>
    %c287 = arith.constant 287 : index
    %1346 = memref.load %arg2[%c287] : memref<288xf32, #tpu.memory_space<smem>>
    %1347 = vector.broadcast %1346 : f32 to vector<16x16xf32>
    %1348 = arith.mulf %1347, %1333 : vector<16x16xf32>
    %1349 = arith.addf %1331, %1348 : vector<16x16xf32>
    %c0_276 = arith.constant 0 : index
    %c0_277 = arith.constant 0 : index
    %1350 = vector.load %arg3[%c0_276, %c0_277] : memref<16x32xf32, #tpu.memory_space<vmem>>, vector<16x32xf32>
    %cst_278 = arith.constant dense<0.000000e+00> : vector<16x32xf32>
    %1351 = tpu.matmul %1337, %1350, %cst_278 {dimension_numbers = #tpu.dot_dimension_numbers<[1], [0], [0], [1], [0, 0, 1, 1], [], []>} : vector<16x16xf32>, vector<16x32xf32>, vector<16x32xf32> -> vector<16x32xf32>
    %c0_279 = arith.constant 0 : index
    %c0_280 = arith.constant 0 : index
    %1352 = vector.load %arg4[%c0_279, %c0_280] : memref<16x32xf32, #tpu.memory_space<vmem>>, vector<16x32xf32>
    %cst_281 = arith.constant dense<0.000000e+00> : vector<16x32xf32>
    %1353 = tpu.matmul %1341, %1352, %cst_281 {dimension_numbers = #tpu.dot_dimension_numbers<[1], [0], [0], [1], [0, 0, 1, 1], [], []>} : vector<16x16xf32>, vector<16x32xf32>, vector<16x32xf32> -> vector<16x32xf32>
    %1354 = arith.addf %1351, %1353 : vector<16x32xf32>
    %c0_282 = arith.constant 0 : index
    %c0_283 = arith.constant 0 : index
    %1355 = vector.load %arg3[%c0_282, %c0_283] : memref<16x32xf32, #tpu.memory_space<vmem>>, vector<16x32xf32>
    %cst_284 = arith.constant dense<0.000000e+00> : vector<16x32xf32>
    %1356 = tpu.matmul %1345, %1355, %cst_284 {dimension_numbers = #tpu.dot_dimension_numbers<[1], [0], [0], [1], [0, 0, 1, 1], [], []>} : vector<16x16xf32>, vector<16x32xf32>, vector<16x32xf32> -> vector<16x32xf32>
    %c0_285 = arith.constant 0 : index
    %c0_286 = arith.constant 0 : index
    %1357 = vector.load %arg4[%c0_285, %c0_286] : memref<16x32xf32, #tpu.memory_space<vmem>>, vector<16x32xf32>
    %cst_287 = arith.constant dense<0.000000e+00> : vector<16x32xf32>
    %1358 = tpu.matmul %1349, %1357, %cst_287 {dimension_numbers = #tpu.dot_dimension_numbers<[1], [0], [0], [1], [0, 0, 1, 1], [], []>} : vector<16x16xf32>, vector<16x32xf32>, vector<16x32xf32> -> vector<16x32xf32>
    %1359 = arith.addf %1356, %1358 : vector<16x32xf32>
    %1360 = vector.shape_cast %1354 : vector<16x32xf32> to vector<16x1x32xf32>
    %c0_288 = arith.constant 0 : index
    %c1_289 = arith.constant 1 : index
    %c0_290 = arith.constant 0 : index
    %c0_291 = arith.constant 0 : index
    %c0_292 = arith.constant 0 : index
    %1361 = vector.load %arg6[%c0_288, %c1_289, %c0_290, %c0_291, %c0_292] : memref<1x2x16x2x32xf32, #tpu.memory_space<vmem>>, vector<1x1x16x1x32xf32>
    %1362 = vector.shape_cast %1361 : vector<1x1x16x1x32xf32> to vector<16x1x32xf32>
    %1363 = vector.shape_cast %1360 : vector<16x1x32xf32> to vector<1x1x16x1x32xf32>
    tpu.vector_store %arg6[%c0_288, %c1_289, %c0_290, %c0_291, %c0_292], %1363 {strides = array<i32>} : memref<1x2x16x2x32xf32, #tpu.memory_space<vmem>>, vector<1x1x16x1x32xf32>,
    %1364 = vector.shape_cast %1359 : vector<16x32xf32> to vector<16x1x32xf32>
    %c0_293 = arith.constant 0 : index
    %c1_294 = arith.constant 1 : index
    %c0_295 = arith.constant 0 : index
    %c1_296 = arith.constant 1 : index
    %c0_297 = arith.constant 0 : index
    %1365 = vector.load %arg6[%c0_293, %c1_294, %c0_295, %c1_296, %c0_297] : memref<1x2x16x2x32xf32, #tpu.memory_space<vmem>>, vector<1x1x16x1x32xf32>
    %1366 = vector.shape_cast %1365 : vector<1x1x16x1x32xf32> to vector<16x1x32xf32>
    %1367 = vector.shape_cast %1364 : vector<16x1x32xf32> to vector<1x1x16x1x32xf32>
    tpu.vector_store %arg6[%c0_293, %c1_294, %c0_295, %c1_296, %c0_297], %1367 {strides = array<i32>} : memref<1x2x16x2x32xf32, #tpu.memory_space<vmem>>, vector<1x1x16x1x32xf32>,
    return
  }
  func.func @transform_0(%arg0: i32, %arg1: i32) -> i32 {
    %c0_i32 = arith.constant 0 : i32
    %c0_i32_0 = arith.constant 0 : i32
    return %c0_i32 : i32
  }
  func.func @transform_1(%arg0: i32, %arg1: i32) -> (i32, i32) {
    %c0_i32 = arith.constant 0 : i32
    %c0_i32_0 = arith.constant 0 : i32
    %c0_i32_1 = arith.constant 0 : i32
    return %c0_i32, %c0_i32_0 : i32, i32
  }
  func.func @transform_2(%arg0: i32, %arg1: i32) -> (i32, i32) {
    %c0_i32 = arith.constant 0 : i32
    %c0_i32_0 = arith.constant 0 : i32
    %c0_i32_1 = arith.constant 0 : i32
    return %c0_i32, %c0_i32_0 : i32, i32
  }
  func.func @transform_3(%arg0: i32, %arg1: i32) -> (i32, i32, i32, i32) {
    %c0_i32 = arith.constant 0 : i32
    %c0_i32_0 = arith.constant 0 : i32
    %c0_i32_1 = arith.constant 0 : i32
    %c0_i32_2 = arith.constant 0 : i32
    return %arg0, %c0_i32, %c0_i32_0, %c0_i32_1 : i32, i32, i32, i32
  }
  func.func @transform_4(%arg0: i32, %arg1: i32) -> (i32, i32, i32, i32, i32) {
    %c0_i32 = arith.constant 0 : i32
    %c0_i32_0 = arith.constant 0 : i32
    %c0_i32_1 = arith.constant 0 : i32
    %c0_i32_2 = arith.constant 0 : i32
    return %arg0, %c0_i32, %arg1, %c0_i32_0, %c0_i32_1 : i32, i32, i32, i32, i32
  }
}

</mosaic_0001>

<llo_original>
// kernel: tpu_custom_call.1
$region0: #{tpu_custom_call.1}
  #allocation0 [shape = 'u32[]', space=smem, size = 0x4, offset = 0x4, fixed_abs, tag = 'smem constant byte address 0x4 - core index']
  #allocation1 [shape = 'u32[144,128]{1,0:T(1,128)}', space=vmem, size = 0x12000, scoped, tag = 'internal scratch']
  #allocation2 [shape = 'f32[4,18,18]{2,1,0:T(8,128)}', space=vmem, size = 0xc000, scoped, tag = 'scratch operand']
  %s0 = inlined_call_operand.hbm [shape: f32[288], index: 0, kind: input, shape index: {}]
  %s1 = inlined_call_operand.hbm [shape: f32[16,32], index: 1, kind: input, shape index: {}]
  %s2 = inlined_call_operand.hbm [shape: f32[16,32], index: 2, kind: input, shape index: {}]
  %s3 = inlined_call_operand.hbm [shape: f32[2,4,16,16], index: 3, kind: input, shape index: {}]
  %s4 = inlined_call_operand.hbm [shape: f32[2,2,16,2,32], index: 4, kind: output, shape index: {}]
  %s5 = sld [smem:[#allocation0]]
  $region65: #{tpu_custom_call.1} parent=0
    _
  %s7 = ssub.s32 1, %s5
  %s8 = scalar_select 0, %s7, %s5
  $region1: #{tpu_custom_call.1} parent=0
    #allocation3 [shape = 'u8[1536]{0}', space=smem, size = 0x600, scoped, tag = 'input window, operand 0, single buffered']
    #allocation4 [shape = 's32[2]{0}', space=sflag, size = 0x8, scoped, tag = 'scoped memory for tpu_custom_call.1']
    #allocation5 [shape = 's32[2]{0}', space=sflag, size = 0x8, scoped, tag = 'scoped memory for tpu_custom_call.1']
    #allocation6 [shape = 's32[2]{0}', space=sflag, size = 0x8, scoped, tag = 'scoped memory for tpu_custom_call.1']
    #allocation7 [shape = 'u8[8192]{0}', space=vmem, size = 0x2000, scoped, tag = 'input window, operand 1, single buffered']
    #allocation8 [shape = 'u8[8192]{0}', space=vmem, size = 0x2000, scoped, tag = 'input window, operand 2, single buffered']
    #allocation9 [shape = 's32[1]{0}', space=sflag, size = 0x4, scoped, tag = 'scoped memory for tpu_custom_call.1']
    #allocation10 [shape = 'u8[65536]{0}', space=vmem, size = 0x10000, scoped, tag = 'input window, operand 3']
    #allocation11 [shape = 'u8[65536]{0}', space=vmem, size = 0x10000, scoped, tag = 'output window, operand 0']
    %9 = vsyncpa [#allocation6], 0
    %10 = vsyncpa [#allocation4], 0
    %11 = vsyncpa [#allocation9], 0
    %12 = vsyncpa [#allocation5], 0
    %s13 = scalar_lea.sflag [#allocation5], 1
    %14 = vsyncpa %s13, 0
    loop: start=0, step=1, limit=4
    $region2: #{tpu_custom_call.1} parent=1 // loop_pre_header
      _
    $region3: #{tpu_custom_call.1} parent=1 // loop_header
      %s16 = sphi 0, %s20
      %p17 = scmp.ge.s32.totalorder %s16, 4
      %s23 = sphi 0, %s35
      %s24 = sphi 0, %s31
      %s25 = sphi 0, %s23
      %s26 = sphi 0, %s24
      %s27 = sphi 0, %s25
      %s28 = sphi 0, %s26
      %s36 = sphi 0, %s36
      %s38 = sphi 0, %s36
      %s39 = sphi 0, %s38
      %s53 = sphi 0, %s39
      %s57 = sphi 0, %s57
      %s59 = sphi 0, %s57
      %s60 = sphi 0, %s59
      %s74 = sphi 0, %s60
      %s78 = sphi 0, %s78
      %s80 = sphi 0, %s78
      %s81 = sphi 0, %s80
      %s95 = sphi 0, %s81
      %s101 = sphi 0, %s103
      %s104 = sphi 0, %s101
      %s105 = sphi 0, %s104
      %s121 = sphi 0, %s105
      %s129 = sphi 0, %s131
      %s132 = sphi 0, %s129
      %s133 = sphi 0, %s132
      %s149 = sphi 0, %s133
    $region4: #{tpu_custom_call.1} parent=1 // loop_header_branch
      %19 = sbr.rel (%p17) target = $region8
    $region5: #{tpu_custom_call.1} parent=1 // loop_body
      %s21 = ssub.s32 %s16, 1
      %s22 = ssub.s32 %s16, 2
      %s29 = sadd.s32 1, %s24
      %p30 = scmp.ge.s32.totalorder %s29, 1
      %s31 = scalar_select %p30, 0, %s29
      %s32 = sadd.s32 1, %s23
      %s33 = scalar_select %p30, %s32, %s23
      %p34 = scmp.ge.s32.totalorder %s33, 2
      %s35 = scalar_select %p34, 0, %s33
      %s37 = sadd.s32 %s36, 1
      %p40 = scmp.eq.s32.totalorder %s16, 1
      %p41 = scmp.ne.s32.totalorder %s36, %s38
      %p42 = scmp.eq.s32.totalorder %s16, 0
      %p43 = por %p41, %p42
      %p44 = scmp.ne.s32.totalorder %s36, %s38
      %p45 = scmp.eq.s32.totalorder %s21, 1
      %p46 = por %p44, %p45
      %p47 = scmp.ne.s32.totalorder %s38, %s39
      %p48 = scmp.eq.s32.totalorder %s21, 0
      %p49 = por %p47, %p48
      %p50 = scmp.ne.s32.totalorder %s38, %s39
      %p51 = scmp.eq.s32.totalorder %s22, 1
      %p52 = por %p50, %p51
      %p54 = scmp.ne.s32.totalorder %s39, %s53
      %p55 = scmp.eq.s32.totalorder %s22, 0
      %p56 = por %p54, %p55
      %s58 = sadd.s32 %s57, 1
      %p61 = scmp.eq.s32.totalorder %s16, 1
      %p62 = scmp.ne.s32.totalorder %s57, %s59
      %p63 = scmp.eq.s32.totalorder %s16, 0
      %p64 = por %p62, %p63
      %p65 = scmp.ne.s32.totalorder %s57, %s59
      %p66 = scmp.eq.s32.totalorder %s21, 1
      %p67 = por %p65, %p66
      %p68 = scmp.ne.s32.totalorder %s59, %s60
      %p69 = scmp.eq.s32.totalorder %s21, 0
      %p70 = por %p68, %p69
      %p71 = scmp.ne.s32.totalorder %s59, %s60
      %p72 = scmp.eq.s32.totalorder %s22, 1
      %p73 = por %p71, %p72
      %p75 = scmp.ne.s32.totalorder %s60, %s74
      %p76 = scmp.eq.s32.totalorder %s22, 0
      %p77 = por %p75, %p76
      %s79 = sadd.s32 %s78, 1
      %p82 = scmp.eq.s32.totalorder %s16, 1
      %p83 = scmp.ne.s32.totalorder %s78, %s80
      %p84 = scmp.eq.s32.totalorder %s16, 0
      %p85 = por %p83, %p84
      %p86 = scmp.ne.s32.totalorder %s78, %s80
      %p87 = scmp.eq.s32.totalorder %s21, 1
      %p88 = por %p86, %p87
      %p89 = scmp.ne.s32.totalorder %s80, %s81
      %p90 = scmp.eq.s32.totalorder %s21, 0
      %p91 = por %p89, %p90
      %p92 = scmp.ne.s32.totalorder %s80, %s81
      %p93 = scmp.eq.s32.totalorder %s22, 1
      %p94 = por %p92, %p93
      %p96 = scmp.ne.s32.totalorder %s81, %s95
      %p97 = scmp.eq.s32.totalorder %s22, 0
      %p98 = por %p96, %p97
      %s99 = ssub.s32 %s23, %s35
      %p100 = scmp.eq.s32.totalorder %s99, 0
      %s102 = sadd.s32 %s101, 1
      %s103 = scalar_select %p100, %s101, %s102
      %p106 = pneg %p100
      %p107 = scmp.eq.s32.totalorder %s16, 1
      %p108 = por %p106, %p107
      %p109 = scmp.ne.s32.totalorder %s101, %s104
      %p110 = scmp.eq.s32.totalorder %s16, 0
      %p111 = por %p109, %p110
      %p112 = scmp.ne.s32.totalorder %s101, %s104
      %p113 = scmp.eq.s32.totalorder %s21, 1
      %p114 = por %p112, %p113
      %p115 = scmp.ne.s32.totalorder %s104, %s105
      %p116 = scmp.eq.s32.totalorder %s21, 0
      %p117 = por %p115, %p116
      %p118 = scmp.ne.s32.totalorder %s104, %s105
      %p119 = scmp.eq.s32.totalorder %s22, 1
      %p120 = por %p118, %p119
      %p122 = scmp.ne.s32.totalorder %s105, %s121
      %p123 = scmp.eq.s32.totalorder %s22, 0
      %p124 = por %p122, %p123
      %s125 = ssub.s32 %s23, %s35
      %s126 = ssub.s32 %s24, %s31
      %s127 = sor.u32 %s125, %s126
      %p128 = scmp.eq.s32.totalorder %s127, 0
      %s130 = sadd.s32 %s129, 1
      %s131 = scalar_select %p128, %s129, %s130
      %p134 = pneg %p128
      %p135 = scmp.eq.s32.totalorder %s16, 1
      %p136 = por %p134, %p135
      %p137 = scmp.ne.s32.totalorder %s129, %s132
      %p138 = scmp.eq.s32.totalorder %s16, 0
      %p139 = por %p137, %p138
      %p140 = scmp.ne.s32.totalorder %s129, %s132
      %p141 = scmp.eq.s32.totalorder %s21, 1
      %p142 = por %p140, %p141
      %p143 = scmp.ne.s32.totalorder %s132, %s133
      %p144 = scmp.eq.s32.totalorder %s21, 0
      %p145 = por %p143, %p144
      %p146 = scmp.ne.s32.totalorder %s132, %s133
      %p147 = scmp.eq.s32.totalorder %s22, 1
      %p148 = por %p146, %p147
      %p150 = scmp.ne.s32.totalorder %s133, %s149
      %p151 = scmp.eq.s32.totalorder %s22, 0
      %p152 = por %p150, %p151
      %p153 = scmp.le.s32.totalorder 1, %s16
      %p154 = scmp.lt.s32.totalorder %s16, 3
      %p155 = pnand %p153, %p154
      %p156 = pneg %p155
      // Predicated region
      $region9: #{tpu_custom_call.1} parent=5 // pred_check
        _
      $region10: #{tpu_custom_call.1} parent=5 // pred_check_branch
        %158 = sbr.rel (%p155) target = $region12
      $region11: #{tpu_custom_call.1} parent=5 // pred_region
        %s159 = ssub.s32 %s16, 1
        // Predicated region
        $region13: #{tpu_custom_call.1} parent=11 // pred_check
          %p160 = pneg %p49
        $region14: #{tpu_custom_call.1} parent=11 // pred_check_branch
          %162 = sbr.rel (%p160) target = $region16
        $region15: #{tpu_custom_call.1} parent=11 // pred_region
          %s164 = ssub.s32 48, 48
          %165 = vsyncadd [#allocation6], %s164
          %168 = dma.hbm_to_smem %s0, 48, [#allocation3], [#allocation6]
        $region16: #{tpu_custom_call.1} parent=11 // pred_fallthru
          _
        // Predicated region
        $region17: #{tpu_custom_call.1} parent=11 // pred_check
          %p169 = pneg %p70
        $region18: #{tpu_custom_call.1} parent=11 // pred_check_branch
          %171 = sbr.rel (%p169) target = $region20
        $region19: #{tpu_custom_call.1} parent=11 // pred_region
          %s173 = ssub.s32 256, 256
          %174 = vsyncadd [#allocation4], %s173
          %s175 = sshll.u32 [#allocation7], 4
          %s176 = int_to_ptr.vmem [resolvable:$true] %s175
          %181 = dma.hbm_to_vmem [thread:$0]  %s1, 256, %s176, [#allocation4], 128, 128, 8
        $region20: #{tpu_custom_call.1} parent=11 // pred_fallthru
          _
        // Predicated region
        $region21: #{tpu_custom_call.1} parent=11 // pred_check
          %p182 = pneg %p91
        $region22: #{tpu_custom_call.1} parent=11 // pred_check_branch
          %184 = sbr.rel (%p182) target = $region24
        $region23: #{tpu_custom_call.1} parent=11 // pred_region
          %s186 = ssub.s32 256, 256
          %187 = vsyncadd [#allocation9], %s186
          %s188 = sshll.u32 [#allocation8], 4
          %s189 = int_to_ptr.vmem [resolvable:$true] %s188
          %194 = dma.hbm_to_vmem [thread:$0]  %s2, 256, %s189, [#allocation9], 128, 128, 8
        $region24: #{tpu_custom_call.1} parent=11 // pred_fallthru
          _
      $region12: #{tpu_custom_call.1} parent=5 // pred_fallthru
        _
      %p195 = scmp.lt.s32.totalorder %s16, 2
      // Predicated region
      $region25: #{tpu_custom_call.1} parent=5 // pred_check
        %p196 = pneg %p195
      $region26: #{tpu_custom_call.1} parent=5 // pred_check_branch
        %198 = sbr.rel (%p196) target = $region28
      $region27: #{tpu_custom_call.1} parent=5 // pred_region
        // Predicated region
        $region29: #{tpu_custom_call.1} parent=27 // pred_check
          %p199 = pneg %p111
        $region30: #{tpu_custom_call.1} parent=27 // pred_check_branch
          %201 = sbr.rel (%p199) target = $region32
        $region31: #{tpu_custom_call.1} parent=27 // pred_region
          %s202 = sand.u32 %s16, 1
          %s203 = scalar_lea.sflag [#allocation4], %s202
          %s204 = sand.u32 %s101, 1
          %s205 = smul.addr %s204, 64
          %s206 = scalar_lea.vmem [#allocation10], %s205
          %s208 = ssub.s32 1024, 1024
          %209 = vsyncadd %s203, %s208
          %s210 = smul.addr %s23, 8
          %s211 = smul.addr %s210, 128
          %s212 = scalar_lea.hbm %s3, %s211
          %s213 = sshll.u32 %s206, 4
          %s214 = int_to_ptr.vmem [resolvable:$true] %s213
          %219 = dma.hbm_to_vmem [thread:$0]  %s212, 1024, %s214, %s203, 128, 128, 8
        $region32: #{tpu_custom_call.1} parent=27 // pred_fallthru
          _
      $region28: #{tpu_custom_call.1} parent=5 // pred_fallthru
        _
      %p220 = scmp.le.s32.totalorder 1, %s16
      %p221 = scmp.lt.s32.totalorder %s16, 3
      %p222 = pnand %p220, %p221
      %p223 = pneg %p222
      // Predicated region
      $region33: #{tpu_custom_call.1} parent=5 // pred_check
        _
      $region34: #{tpu_custom_call.1} parent=5 // pred_check_branch
        %225 = sbr.rel (%p222) target = $region36
      $region35: #{tpu_custom_call.1} parent=5 // pred_region
        %s226 = ssub.s32 %s16, 1
        // Predicated region
        $region37: #{tpu_custom_call.1} parent=35 // pred_check
          %p227 = pneg %p49
        $region38: #{tpu_custom_call.1} parent=35 // pred_check_branch
          %229 = sbr.rel (%p227) target = $region40
        $region39: #{tpu_custom_call.1} parent=35 // pred_region
          %230 = dma.done [#allocation6], 48
        $region40: #{tpu_custom_call.1} parent=35 // pred_fallthru
          _
        // Predicated region
        $region41: #{tpu_custom_call.1} parent=35 // pred_check
          %p231 = pneg %p70
        $region42: #{tpu_custom_call.1} parent=35 // pred_check_branch
          %233 = sbr.rel (%p231) target = $region44
        $region43: #{tpu_custom_call.1} parent=35 // pred_region
          %234 = dma.done [#allocation4], 256
        $region44: #{tpu_custom_call.1} parent=35 // pred_fallthru
          _
        // Predicated region
        $region45: #{tpu_custom_call.1} parent=35 // pred_check
          %p235 = pneg %p91
        $region46: #{tpu_custom_call.1} parent=35 // pred_check_branch
          %237 = sbr.rel (%p235) target = $region48
        $region47: #{tpu_custom_call.1} parent=35 // pred_region
          %238 = dma.done [#allocation9], 256
        $region48: #{tpu_custom_call.1} parent=35 // pred_fallthru
          _
        %s239 = sand.u32 %s21, 1
        %s240 = scalar_lea.sflag [#allocation4], %s239
        %s241 = sand.u32 %s104, 1
        %s242 = smul.addr %s241, 64
        %s243 = scalar_lea.vmem [#allocation10], %s242
        // Predicated region
        $region49: #{tpu_custom_call.1} parent=35 // pred_check
          %p244 = pneg %p117
        $region50: #{tpu_custom_call.1} parent=35 // pred_check_branch
          %246 = sbr.rel (%p244) target = $region52
        $region51: #{tpu_custom_call.1} parent=35 // pred_region
          %247 = dma.done %s240, 1024
        $region52: #{tpu_custom_call.1} parent=35 // pred_fallthru
          _
        %248 = sfence
        %p249 = pneg %p49
        %p250 = pneg %p46
        %p251 = pneg %p70
        %p252 = pneg %p67
        %p253 = pneg %p91
        %p254 = pneg %p88
        %s255 = sand.u32 %s21, 1
        %s256 = scalar_lea.sflag [#allocation4], %s255
        %s257 = sand.u32 %s104, 1
        %s258 = smul.addr %s257, 64
        %s259 = scalar_lea.vmem [#allocation10], %s258
        %p260 = pneg %p117
        %p261 = pneg %p114
        %p262 = pneg %p145
        %p263 = pneg %p142
        %s264 = sand.u32 %s132, 1
        %s265 = scalar_lea.sflag [#allocation5], %s264
        %s266 = sand.u32 %s132, 1
        %s267 = smul.addr %s266, 64
        %s268 = scalar_lea.vmem [#allocation11], %s267
        %s269 = smul.u32 16, %s26
        %s270 = smul.u32 %s26, 16
        %vm271 = vcmask 7168
        %272 = vst.msk [vmem:[#allocation2] sm:$0xff] %vm271, 0.0
        %273 = vst.msk [vmem:[#allocation2 + $0x8] sm:$0xff] %vm271, 0.0
        %vm274 = vcmask 1024
        %275 = vst.msk [vmem:[#allocation2 + $0x10] sm:$0x3] %vm274, 0.0
        %276 = vst.msk [vmem:[#allocation2 + $0x18] sm:$0xff] %vm271, 0.0
        %277 = vst.msk [vmem:[#allocation2 + $0x20] sm:$0xff] %vm271, 0.0
        %278 = vst.msk [vmem:[#allocation2 + $0x28] sm:$0x3] %vm274, 0.0
        %279 = vst.msk [vmem:[#allocation2 + $0x30] sm:$0xff] %vm271, 0.0
        %280 = vst.msk [vmem:[#allocation2 + $0x38] sm:$0xff] %vm271, 0.0
        %281 = vst.msk [vmem:[#allocation2 + $0x40] sm:$0x3] %vm274, 0.0
        %282 = vst.msk [vmem:[#allocation2 + $0x48] sm:$0xff] %vm271, 0.0
        %283 = vst.msk [vmem:[#allocation2 + $0x50] sm:$0xff] %vm271, 0.0
        %284 = vst.msk [vmem:[#allocation2 + $0x58] sm:$0x3] %vm274, 0.0
        %vm285 = vcmask 146568
        %286 = vst.msk [vmem:[#allocation2] sm:$0xff] %vm285, 0.0
        %287 = vst.msk [vmem:[#allocation2 + $0x8] sm:$0xff] %vm285, 0.0
        %vm288 = vcmask 140424
        %289 = vst.msk [vmem:[#allocation2 + $0x10] sm:$0x3] %vm288, 0.0
        %290 = vst.msk [vmem:[#allocation2 + $0x18] sm:$0xff] %vm285, 0.0
        %291 = vst.msk [vmem:[#allocation2 + $0x20] sm:$0xff] %vm285, 0.0
        %292 = vst.msk [vmem:[#allocation2 + $0x28] sm:$0x3] %vm288, 0.0
        %293 = vst.msk [vmem:[#allocation2 + $0x30] sm:$0xff] %vm285, 0.0
        %294 = vst.msk [vmem:[#allocation2 + $0x38] sm:$0xff] %vm285, 0.0
        %295 = vst.msk [vmem:[#allocation2 + $0x40] sm:$0x3] %vm288, 0.0
        %296 = vst.msk [vmem:[#allocation2 + $0x48] sm:$0xff] %vm285, 0.0
        %297 = vst.msk [vmem:[#allocation2 + $0x50] sm:$0xff] %vm285, 0.0
        %298 = vst.msk [vmem:[#allocation2 + $0x58] sm:$0x3] %vm288, 0.0
        %s299 = scalar_lea.vmem %s243, %s270 [#allocation10]
        %v300 = vld [vmem:[%s299] sm:$0xff]
        %v301 = vld [vmem:[%s299 + $0x8] sm:$0xff]
        %v302 = vld [vmem:[%s299 + $0x10] sm:$0xff]
        %v303 = vld [vmem:[%s299 + $0x18] sm:$0xff]
        %v304 = vld [vmem:[%s299 + $0x20] sm:$0xff]
        %v305 = vld [vmem:[%s299 + $0x28] sm:$0xff]
        %v306 = vld [vmem:[%s299 + $0x30] sm:$0xff]
        %v307 = vld [vmem:[%s299 + $0x38] sm:$0xff]
        %316 = vrot.lane.b32.xlu0 %v300, 1
        %v317 = vpop.permute.xlu0 %316
        %318 = vrot.lane.b32.xlu0 %v301, 1
        %v319 = vpop.permute.xlu0 %318
        %320 = vrot.lane.b32.xlu0 %v302, 1
        %v321 = vpop.permute.xlu0 %320
        %322 = vrot.lane.b32.xlu0 %v303, 1
        %v323 = vpop.permute.xlu0 %322
        %324 = vrot.lane.b32.xlu0 %v304, 1
        %v325 = vpop.permute.xlu0 %324
        %326 = vrot.lane.b32.xlu0 %v305, 1
        %v327 = vpop.permute.xlu0 %326
        %328 = vrot.lane.b32.xlu0 %v306, 1
        %v329 = vpop.permute.xlu0 %328
        %330 = vrot.lane.b32.xlu0 %v307, 1
        %v331 = vpop.permute.xlu0 %330
        %vm340 = vcmask 138248
        %341 = vst.msk [vmem:[#allocation2 + $0x1] sm:$0xff] %vm340, %v317
        %342 = vst.msk [vmem:[#allocation2 + $0x9] sm:$0xff] %vm340, %v319
        %343 = vst.msk [vmem:[#allocation2 + $0x19] sm:$0xff] %vm340, %v321
        %344 = vst.msk [vmem:[#allocation2 + $0x21] sm:$0xff] %vm340, %v323
        %345 = vst.msk [vmem:[#allocation2 + $0x31] sm:$0xff] %vm340, %v325
        %346 = vst.msk [vmem:[#allocation2 + $0x39] sm:$0xff] %vm340, %v327
        %347 = vst.msk [vmem:[#allocation2 + $0x49] sm:$0xff] %vm340, %v329
        %348 = vst.msk [vmem:[#allocation2 + $0x51] sm:$0xff] %vm340, %v331
        %s349 = ssub.s32 %s270, 1
        %p350 = scmp.gt.s32.totalorder %s349, 0
        %s351 = scalar_select %p350, %s349, 0
        %s352 = scalar_lea.vmem %s243, %s351 [#allocation10]
        %v353 = vld [vmem:[%s352] sm:$0x1]
        %v354 = vld [vmem:[%s352 + $0x10] sm:$0x1]
        %v355 = vld [vmem:[%s352 + $0x20] sm:$0x1]
        %v356 = vld [vmem:[%s352 + $0x30] sm:$0x1]
        %p357 = scmp.eq.s32.totalorder %s26, 0
        %s358 = scalar_select %p357, 1, 0
        %v359 = vstv %s358
        %vm360 = vcmp.eq.s32.totalorder %v359, 1
        %v361 = vsel %vm360, 0.0, %v353
        %v362 = vsel %vm360, 0.0, %v354
        %v363 = vsel %vm360, 0.0, %v355
        %v364 = vsel %vm360, 0.0, %v356
        %369 = vrot.lane.b32.xlu0 %v361, 1
        %v370 = vpop.permute.xlu0 %369
        %371 = vrot.lane.b32.xlu0 %v362, 1
        %v372 = vpop.permute.xlu0 %371
        %373 = vrot.lane.b32.xlu0 %v363, 1
        %v374 = vpop.permute.xlu0 %373
        %375 = vrot.lane.b32.xlu0 %v364, 1
        %v376 = vpop.permute.xlu0 %375
        %vm381 = vcmask 131080
        %382 = vst.msk [vmem:[#allocation2] sm:$0x1] %vm381, %v370
        %383 = vst.msk [vmem:[#allocation2 + $0x18] sm:$0x1] %vm381, %v372
        %384 = vst.msk [vmem:[#allocation2 + $0x30] sm:$0x1] %vm381, %v374
        %385 = vst.msk [vmem:[#allocation2 + $0x48] sm:$0x1] %vm381, %v376
        %s386 = sadd.s32 %s270, 16
        %p387 = scmp.lt.s32.totalorder %s386, 15
        %s388 = scalar_select %p387, %s386, 15
        %s389 = scalar_lea.vmem %s243, %s388 [#allocation10]
        %v390 = vld [vmem:[%s389] sm:$0x1]
        %v391 = vld [vmem:[%s389 + $0x10] sm:$0x1]
        %v392 = vld [vmem:[%s389 + $0x20] sm:$0x1]
        %v393 = vld [vmem:[%s389 + $0x30] sm:$0x1]
        %v394 = vsel %vm360, 0.0, %v390
        %v395 = vsel %vm360, 0.0, %v391
        %v396 = vsel %vm360, 0.0, %v392
        %v397 = vsel %vm360, 0.0, %v393
        %402 = vrot.lane.b32.xlu0 %v394, 1
        %v403 = vpop.permute.xlu0 %402
        %404 = vrot.lane.b32.xlu0 %v395, 1
        %v405 = vpop.permute.xlu0 %404
        %406 = vrot.lane.b32.xlu0 %v396, 1
        %v407 = vpop.permute.xlu0 %406
        %408 = vrot.lane.b32.xlu0 %v397, 1
        %v409 = vpop.permute.xlu0 %408
        %414 = vst.msk [vmem:[#allocation2 + $0x11] sm:$0x1] %vm381, %v403
        %415 = vst.msk [vmem:[#allocation2 + $0x29] sm:$0x1] %vm381, %v405
        %416 = vst.msk [vmem:[#allocation2 + $0x41] sm:$0x1] %vm381, %v407
        %417 = vst.msk [vmem:[#allocation2 + $0x59] sm:$0x1] %vm381, %v409
        %v418 = vld [vmem:[#allocation2] sm:$0xff]
        %v419 = vld [vmem:[#allocation2 + $0x8] sm:$0xff]
        %s420 = sld [smem:[#allocation3]]
        %v421 = vstv %s420
        %v422 = vmul.f32 %v421, %v418
        %v423 = vmul.f32 %v421, %v419
        %v424 = vadd.f32 %v422, 0.0
        %v425 = vadd.f32 %v423, 0.0
        %s426 = sld [smem:[#allocation3 + $0x24]]
        %v427 = vstv %s426
        %v428 = vmul.f32 %v427, %v418
        %v429 = vmul.f32 %v427, %v419
        %v430 = vadd.f32 %v428, 0.0
        %v431 = vadd.f32 %v429, 0.0
        %s432 = sld [smem:[#allocation3 + $0x48]]
        %v433 = vstv %s432
        %v434 = vmul.f32 %v433, %v418
        %v435 = vmul.f32 %v433, %v419
        %v436 = vadd.f32 %v434, 0.0
        %v437 = vadd.f32 %v435, 0.0
        %s438 = sld [smem:[#allocation3 + $0x6c]]
        %v439 = vstv %s438
        %v440 = vmul.f32 %v439, %v418
        %v441 = vmul.f32 %v439, %v419
        %v442 = vadd.f32 %v440, 0.0
        %v443 = vadd.f32 %v441, 0.0
        %s444 = sld [smem:[#allocation3 + $0x1]]
        %v445 = vstv %s444
        %v446 = vmul.f32 %v445, %v418
        %v447 = vmul.f32 %v445, %v419
        %450 = vrot.lane.b32.xlu0 %v446, 127
        %v451 = vpop.permute.xlu0 %450
        %452 = vrot.lane.b32.xlu0 %v447, 127
        %v453 = vpop.permute.xlu0 %452
        %v456 = vadd.f32 %v424, %v451
        %v457 = vadd.f32 %v425, %v453
        %s458 = sld [smem:[#allocation3 + $0x25]]
        %v459 = vstv %s458
        %v460 = vmul.f32 %v459, %v418
        %v461 = vmul.f32 %v459, %v419
        %464 = vrot.lane.b32.xlu0 %v460, 127
        %v465 = vpop.permute.xlu0 %464
        %466 = vrot.lane.b32.xlu0 %v461, 127
        %v467 = vpop.permute.xlu0 %466
        %v470 = vadd.f32 %v430, %v465
        %v471 = vadd.f32 %v431, %v467
        %s472 = sld [smem:[#allocation3 + $0x49]]
        %v473 = vstv %s472
        %v474 = vmul.f32 %v473, %v418
        %v475 = vmul.f32 %v473, %v419
        %478 = vrot.lane.b32.xlu0 %v474, 127
        %v479 = vpop.permute.xlu0 %478
        %480 = vrot.lane.b32.xlu0 %v475, 127
        %v481 = vpop.permute.xlu0 %480
        %v484 = vadd.f32 %v436, %v479
        %v485 = vadd.f32 %v437, %v481
        %s486 = sld [smem:[#allocation3 + $0x6d]]
        %v487 = vstv %s486
        %v488 = vmul.f32 %v487, %v418
        %v489 = vmul.f32 %v487, %v419
        %492 = vrot.lane.b32.xlu0 %v488, 127
        %v493 = vpop.permute.xlu0 %492
        %494 = vrot.lane.b32.xlu0 %v489, 127
        %v495 = vpop.permute.xlu0 %494
        %v498 = vadd.f32 %v442, %v493
        %v499 = vadd.f32 %v443, %v495
        %s500 = sld [smem:[#allocation3 + $0x2]]
        %v501 = vstv %s500
        %v502 = vmul.f32 %v501, %v418
        %v503 = vmul.f32 %v501, %v419
        %506 = vrot.lane.b32.xlu0 %v502, 126
        %v507 = vpop.permute.xlu0 %506
        %508 = vrot.lane.b32.xlu0 %v503, 126
        %v509 = vpop.permute.xlu0 %508
        %v512 = vadd.f32 %v456, %v507
        %v513 = vadd.f32 %v457, %v509
        %s514 = sld [smem:[#allocation3 + $0x26]]
        %v515 = vstv %s514
        %v516 = vmul.f32 %v515, %v418
        %v517 = vmul.f32 %v515, %v419
        %520 = vrot.lane.b32.xlu0 %v516, 126
        %v521 = vpop.permute.xlu0 %520
        %522 = vrot.lane.b32.xlu0 %v517, 126
        %v523 = vpop.permute.xlu0 %522
        %v526 = vadd.f32 %v470, %v521
        %v527 = vadd.f32 %v471, %v523
        %s528 = sld [smem:[#allocation3 + $0x4a]]
        %v529 = vstv %s528
        %v530 = vmul.f32 %v529, %v418
        %v531 = vmul.f32 %v529, %v419
        %534 = vrot.lane.b32.xlu0 %v530, 126
        %v535 = vpop.permute.xlu0 %534
        %536 = vrot.lane.b32.xlu0 %v531, 126
        %v537 = vpop.permute.xlu0 %536
        %v540 = vadd.f32 %v484, %v535
        %v541 = vadd.f32 %v485, %v537
        %s542 = sld [smem:[#allocation3 + $0x6e]]
        %v543 = vstv %s542
        %v544 = vmul.f32 %v543, %v418
        %v545 = vmul.f32 %v543, %v419
        %548 = vrot.lane.b32.xlu0 %v544, 126
        %v549 = vpop.permute.xlu0 %548
        %550 = vrot.lane.b32.xlu0 %v545, 126
        %v551 = vpop.permute.xlu0 %550
        %v554 = vadd.f32 %v498, %v549
        %v555 = vadd.f32 %v499, %v551
        %v556 = vld [vmem:[#allocation2 + $0x1] sm:$0xff]
        %v557 = vld [vmem:[#allocation2 + $0x9] sm:$0xff]
        %s558 = sld [smem:[#allocation3 + $0x3]]
        %v559 = vstv %s558
        %v560 = vmul.f32 %v559, %v556
        %v561 = vmul.f32 %v559, %v557
        %v562 = vadd.f32 %v512, %v560
        %v563 = vadd.f32 %v513, %v561
        %s564 = sld [smem:[#allocation3 + $0x27]]
        %v565 = vstv %s564
        %v566 = vmul.f32 %v565, %v556
        %v567 = vmul.f32 %v565, %v557
        %v568 = vadd.f32 %v526, %v566
        %v569 = vadd.f32 %v527, %v567
        %s570 = sld [smem:[#allocation3 + $0x4b]]
        %v571 = vstv %s570
        %v572 = vmul.f32 %v571, %v556
        %v573 = vmul.f32 %v571, %v557
        %v574 = vadd.f32 %v540, %v572
        %v575 = vadd.f32 %v541, %v573
        %s576 = sld [smem:[#allocation3 + $0x6f]]
        %v577 = vstv %s576
        %v578 = vmul.f32 %v577, %v556
        %v579 = vmul.f32 %v577, %v557
        %v580 = vadd.f32 %v554, %v578
        %v581 = vadd.f32 %v555, %v579
        %s582 = sld [smem:[#allocation3 + $0x4]]
        %v583 = vstv %s582
        %v584 = vmul.f32 %v583, %v556
        %v585 = vmul.f32 %v583, %v557
        %588 = vrot.lane.b32.xlu0 %v584, 127
        %v589 = vpop.permute.xlu0 %588
        %590 = vrot.lane.b32.xlu0 %v585, 127
        %v591 = vpop.permute.xlu0 %590
        %v594 = vadd.f32 %v562, %v589
        %v595 = vadd.f32 %v563, %v591
        %s596 = sld [smem:[#allocation3 + $0x28]]
        %v597 = vstv %s596
        %v598 = vmul.f32 %v597, %v556
        %v599 = vmul.f32 %v597, %v557
        %602 = vrot.lane.b32.xlu0 %v598, 127
        %v603 = vpop.permute.xlu0 %602
        %604 = vrot.lane.b32.xlu0 %v599, 127
        %v605 = vpop.permute.xlu0 %604
        %v608 = vadd.f32 %v568, %v603
        %v609 = vadd.f32 %v569, %v605
        %s610 = sld [smem:[#allocation3 + $0x4c]]
        %v611 = vstv %s610
        %v612 = vmul.f32 %v611, %v556
        %v613 = vmul.f32 %v611, %v557
        %616 = vrot.lane.b32.xlu0 %v612, 127
        %v617 = vpop.permute.xlu0 %616
        %618 = vrot.lane.b32.xlu0 %v613, 127
        %v619 = vpop.permute.xlu0 %618
        %v622 = vadd.f32 %v574, %v617
        %v623 = vadd.f32 %v575, %v619
        %s624 = sld [smem:[#allocation3 + $0x70]]
        %v625 = vstv %s624
        %v626 = vmul.f32 %v625, %v556
        %v627 = vmul.f32 %v625, %v557
        %630 = vrot.lane.b32.xlu0 %v626, 127
        %v631 = vpop.permute.xlu0 %630
        %632 = vrot.lane.b32.xlu0 %v627, 127
        %v633 = vpop.permute.xlu0 %632
        %v636 = vadd.f32 %v580, %v631
        %v637 = vadd.f32 %v581, %v633
        %s638 = sld [smem:[#allocation3 + $0x5]]
        %v639 = vstv %s638
        %v640 = vmul.f32 %v639, %v556
        %v641 = vmul.f32 %v639, %v557
        %644 = vrot.lane.b32.xlu0 %v640, 126
        %v645 = vpop.permute.xlu0 %644
        %646 = vrot.lane.b32.xlu0 %v641, 126
        %v647 = vpop.permute.xlu0 %646
        %v650 = vadd.f32 %v594, %v645
        %v651 = vadd.f32 %v595, %v647
        %s652 = sld [smem:[#allocation3 + $0x29]]
        %v653 = vstv %s652
        %v654 = vmul.f32 %v653, %v556
        %v655 = vmul.f32 %v653, %v557
        %658 = vrot.lane.b32.xlu0 %v654, 126
        %v659 = vpop.permute.xlu0 %658
        %660 = vrot.lane.b32.xlu0 %v655, 126
        %v661 = vpop.permute.xlu0 %660
        %v664 = vadd.f32 %v608, %v659
        %v665 = vadd.f32 %v609, %v661
        %s666 = sld [smem:[#allocation3 + $0x4d]]
        %v667 = vstv %s666
        %v668 = vmul.f32 %v667, %v556
        %v669 = vmul.f32 %v667, %v557
        %672 = vrot.lane.b32.xlu0 %v668, 126
        %v673 = vpop.permute.xlu0 %672
        %674 = vrot.lane.b32.xlu0 %v669, 126
        %v675 = vpop.permute.xlu0 %674
        %v678 = vadd.f32 %v622, %v673
        %v679 = vadd.f32 %v623, %v675
        %s680 = sld [smem:[#allocation3 + $0x71]]
        %v681 = vstv %s680
        %v682 = vmul.f32 %v681, %v556
        %v683 = vmul.f32 %v681, %v557
        %686 = vrot.lane.b32.xlu0 %v682, 126
        %v687 = vpop.permute.xlu0 %686
        %688 = vrot.lane.b32.xlu0 %v683, 126
        %v689 = vpop.permute.xlu0 %688
        %v692 = vadd.f32 %v636, %v687
        %v693 = vadd.f32 %v637, %v689
        %v694 = vld [vmem:[#allocation2 + $0x2] sm:$0xff]
        %v695 = vld [vmem:[#allocation2 + $0xa] sm:$0xff]
        %s696 = sld [smem:[#allocation3 + $0x6]]
        %v697 = vstv %s696
        %v698 = vmul.f32 %v697, %v694
        %v699 = vmul.f32 %v697, %v695
        %v700 = vadd.f32 %v650, %v698
        %v701 = vadd.f32 %v651, %v699
        %s702 = sld [smem:[#allocation3 + $0x2a]]
        %v703 = vstv %s702
        %v704 = vmul.f32 %v703, %v694
        %v705 = vmul.f32 %v703, %v695
        %v706 = vadd.f32 %v664, %v704
        %v707 = vadd.f32 %v665, %v705
        %s708 = sld [smem:[#allocation3 + $0x4e]]
        %v709 = vstv %s708
        %v710 = vmul.f32 %v709, %v694
        %v711 = vmul.f32 %v709, %v695
        %v712 = vadd.f32 %v678, %v710
        %v713 = vadd.f32 %v679, %v711
        %s714 = sld [smem:[#allocation3 + $0x72]]
        %v715 = vstv %s714
        %v716 = vmul.f32 %v715, %v694
        %v717 = vmul.f32 %v715, %v695
        %v718 = vadd.f32 %v692, %v716
        %v719 = vadd.f32 %v693, %v717
        %s720 = sld [smem:[#allocation3 + $0x7]]
        %v721 = vstv %s720
        %v722 = vmul.f32 %v721, %v694
        %v723 = vmul.f32 %v721, %v695
        %726 = vrot.lane.b32.xlu0 %v722, 127
        %v727 = vpop.permute.xlu0 %726
        %728 = vrot.lane.b32.xlu0 %v723, 127
        %v729 = vpop.permute.xlu0 %728
        %v732 = vadd.f32 %v700, %v727
        %v733 = vadd.f32 %v701, %v729
        %s734 = sld [smem:[#allocation3 + $0x2b]]
        %v735 = vstv %s734
        %v736 = vmul.f32 %v735, %v694
        %v737 = vmul.f32 %v735, %v695
        %740 = vrot.lane.b32.xlu0 %v736, 127
        %v741 = vpop.permute.xlu0 %740
        %742 = vrot.lane.b32.xlu0 %v737, 127
        %v743 = vpop.permute.xlu0 %742
        %v746 = vadd.f32 %v706, %v741
        %v747 = vadd.f32 %v707, %v743
        %s748 = sld [smem:[#allocation3 + $0x4f]]
        %v749 = vstv %s748
        %v750 = vmul.f32 %v749, %v694
        %v751 = vmul.f32 %v749, %v695
        %754 = vrot.lane.b32.xlu0 %v750, 127
        %v755 = vpop.permute.xlu0 %754
        %756 = vrot.lane.b32.xlu0 %v751, 127
        %v757 = vpop.permute.xlu0 %756
        %v760 = vadd.f32 %v712, %v755
        %v761 = vadd.f32 %v713, %v757
        %s762 = sld [smem:[#allocation3 + $0x73]]
        %v763 = vstv %s762
        %v764 = vmul.f32 %v763, %v694
        %v765 = vmul.f32 %v763, %v695
        %768 = vrot.lane.b32.xlu0 %v764, 127
        %v769 = vpop.permute.xlu0 %768
        %770 = vrot.lane.b32.xlu0 %v765, 127
        %v771 = vpop.permute.xlu0 %770
        %v774 = vadd.f32 %v718, %v769
        %v775 = vadd.f32 %v719, %v771
        %s776 = sld [smem:[#allocation3 + $0x8]]
        %v777 = vstv %s776
        %v778 = vmul.f32 %v777, %v694
        %v779 = vmul.f32 %v777, %v695
        %782 = vrot.lane.b32.xlu0 %v778, 126
        %v783 = vpop.permute.xlu0 %782
        %784 = vrot.lane.b32.xlu0 %v779, 126
        %v785 = vpop.permute.xlu0 %784
        %v788 = vadd.f32 %v732, %v783
        %v789 = vadd.f32 %v733, %v785
        %s790 = sld [smem:[#allocation3 + $0x2c]]
        %v791 = vstv %s790
        %v792 = vmul.f32 %v791, %v694
        %v793 = vmul.f32 %v791, %v695
        %796 = vrot.lane.b32.xlu0 %v792, 126
        %v797 = vpop.permute.xlu0 %796
        %798 = vrot.lane.b32.xlu0 %v793, 126
        %v799 = vpop.permute.xlu0 %798
        %v802 = vadd.f32 %v746, %v797
        %v803 = vadd.f32 %v747, %v799
        %s804 = sld [smem:[#allocation3 + $0x50]]
        %v805 = vstv %s804
        %v806 = vmul.f32 %v805, %v694
        %v807 = vmul.f32 %v805, %v695
        %810 = vrot.lane.b32.xlu0 %v806, 126
        %v811 = vpop.permute.xlu0 %810
        %812 = vrot.lane.b32.xlu0 %v807, 126
        %v813 = vpop.permute.xlu0 %812
        %v816 = vadd.f32 %v760, %v811
        %v817 = vadd.f32 %v761, %v813
        %s818 = sld [smem:[#allocation3 + $0x74]]
        %v819 = vstv %s818
        %v820 = vmul.f32 %v819, %v694
        %v821 = vmul.f32 %v819, %v695
        %824 = vrot.lane.b32.xlu0 %v820, 126
        %v825 = vpop.permute.xlu0 %824
        %826 = vrot.lane.b32.xlu0 %v821, 126
        %v827 = vpop.permute.xlu0 %826
        %v830 = vadd.f32 %v774, %v825
        %v831 = vadd.f32 %v775, %v827
        %s832 = scalar_lea.vmem [#allocation2], 24
        %v833 = vld [vmem:[%s832] sm:$0xff]
        %v834 = vld [vmem:[%s832 + $0x8] sm:$0xff]
        %s835 = sld [smem:[#allocation3 + $0x9]]
        %v836 = vstv %s835
        %v837 = vmul.f32 %v836, %v833
        %v838 = vmul.f32 %v836, %v834
        %v839 = vadd.f32 %v788, %v837
        %v840 = vadd.f32 %v789, %v838
        %s841 = sld [smem:[#allocation3 + $0x2d]]
        %v842 = vstv %s841
        %v843 = vmul.f32 %v842, %v833
        %v844 = vmul.f32 %v842, %v834
        %v845 = vadd.f32 %v802, %v843
        %v846 = vadd.f32 %v803, %v844
        %s847 = sld [smem:[#allocation3 + $0x51]]
        %v848 = vstv %s847
        %v849 = vmul.f32 %v848, %v833
        %v850 = vmul.f32 %v848, %v834
        %v851 = vadd.f32 %v816, %v849
        %v852 = vadd.f32 %v817, %v850
        %s853 = sld [smem:[#allocation3 + $0x75]]
        %v854 = vstv %s853
        %v855 = vmul.f32 %v854, %v833
        %v856 = vmul.f32 %v854, %v834
        %v857 = vadd.f32 %v830, %v855
        %v858 = vadd.f32 %v831, %v856
        %s859 = sld [smem:[#allocation3 + $0xa]]
        %v860 = vstv %s859
        %v861 = vmul.f32 %v860, %v833
        %v862 = vmul.f32 %v860, %v834
        %865 = vrot.lane.b32.xlu0 %v861, 127
        %v866 = vpop.permute.xlu0 %865
        %867 = vrot.lane.b32.xlu0 %v862, 127
        %v868 = vpop.permute.xlu0 %867
        %v871 = vadd.f32 %v839, %v866
        %v872 = vadd.f32 %v840, %v868
        %s873 = sld [smem:[#allocation3 + $0x2e]]
        %v874 = vstv %s873
        %v875 = vmul.f32 %v874, %v833
        %v876 = vmul.f32 %v874, %v834
        %879 = vrot.lane.b32.xlu0 %v875, 127
        %v880 = vpop.permute.xlu0 %879
        %881 = vrot.lane.b32.xlu0 %v876, 127
        %v882 = vpop.permute.xlu0 %881
        %v885 = vadd.f32 %v845, %v880
        %v886 = vadd.f32 %v846, %v882
        %s887 = sld [smem:[#allocation3 + $0x52]]
        %v888 = vstv %s887
        %v889 = vmul.f32 %v888, %v833
        %v890 = vmul.f32 %v888, %v834
        %893 = vrot.lane.b32.xlu0 %v889, 127
        %v894 = vpop.permute.xlu0 %893
        %895 = vrot.lane.b32.xlu0 %v890, 127
        %v896 = vpop.permute.xlu0 %895
        %v899 = vadd.f32 %v851, %v894
        %v900 = vadd.f32 %v852, %v896
        %s901 = sld [smem:[#allocation3 + $0x76]]
        %v902 = vstv %s901
        %v903 = vmul.f32 %v902, %v833
        %v904 = vmul.f32 %v902, %v834
        %907 = vrot.lane.b32.xlu0 %v903, 127
        %v908 = vpop.permute.xlu0 %907
        %909 = vrot.lane.b32.xlu0 %v904, 127
        %v910 = vpop.permute.xlu0 %909
        %v913 = vadd.f32 %v857, %v908
        %v914 = vadd.f32 %v858, %v910
        %s915 = sld [smem:[#allocation3 + $0xb]]
        %v916 = vstv %s915
        %v917 = vmul.f32 %v916, %v833
        %v918 = vmul.f32 %v916, %v834
        %921 = vrot.lane.b32.xlu0 %v917, 126
        %v922 = vpop.permute.xlu0 %921
        %923 = vrot.lane.b32.xlu0 %v918, 126
        %v924 = vpop.permute.xlu0 %923
        %v927 = vadd.f32 %v871, %v922
        %v928 = vadd.f32 %v872, %v924
        %s929 = sld [smem:[#allocation3 + $0x2f]]
        %v930 = vstv %s929
        %v931 = vmul.f32 %v930, %v833
        %v932 = vmul.f32 %v930, %v834
        %935 = vrot.lane.b32.xlu0 %v931, 126
        %v936 = vpop.permute.xlu0 %935
        %937 = vrot.lane.b32.xlu0 %v932, 126
        %v938 = vpop.permute.xlu0 %937
        %v941 = vadd.f32 %v885, %v936
        %v942 = vadd.f32 %v886, %v938
        %s943 = sld [smem:[#allocation3 + $0x53]]
        %v944 = vstv %s943
        %v945 = vmul.f32 %v944, %v833
        %v946 = vmul.f32 %v944, %v834
        %949 = vrot.lane.b32.xlu0 %v945, 126
        %v950 = vpop.permute.xlu0 %949
        %951 = vrot.lane.b32.xlu0 %v946, 126
        %v952 = vpop.permute.xlu0 %951
        %v955 = vadd.f32 %v899, %v950
        %v956 = vadd.f32 %v900, %v952
        %s957 = sld [smem:[#allocation3 + $0x77]]
        %v958 = vstv %s957
        %v959 = vmul.f32 %v958, %v833
        %v960 = vmul.f32 %v958, %v834
        %963 = vrot.lane.b32.xlu0 %v959, 126
        %v964 = vpop.permute.xlu0 %963
        %965 = vrot.lane.b32.xlu0 %v960, 126
        %v966 = vpop.permute.xlu0 %965
        %v969 = vadd.f32 %v913, %v964
        %v970 = vadd.f32 %v914, %v966
        %v971 = vld [vmem:[%s832 + $0x1] sm:$0xff]
        %v972 = vld [vmem:[%s832 + $0x9] sm:$0xff]
        %s973 = sld [smem:[#allocation3 + $0xc]]
        %v974 = vstv %s973
        %v975 = vmul.f32 %v974, %v971
        %v976 = vmul.f32 %v974, %v972
        %v977 = vadd.f32 %v927, %v975
        %v978 = vadd.f32 %v928, %v976
        %s979 = sld [smem:[#allocation3 + $0x30]]
        %v980 = vstv %s979
        %v981 = vmul.f32 %v980, %v971
        %v982 = vmul.f32 %v980, %v972
        %v983 = vadd.f32 %v941, %v981
        %v984 = vadd.f32 %v942, %v982
        %s985 = sld [smem:[#allocation3 + $0x54]]
        %v986 = vstv %s985
        %v987 = vmul.f32 %v986, %v971
        %v988 = vmul.f32 %v986, %v972
        %v989 = vadd.f32 %v955, %v987
        %v990 = vadd.f32 %v956, %v988
        %s991 = sld [smem:[#allocation3 + $0x78]]
        %v992 = vstv %s991
        %v993 = vmul.f32 %v992, %v971
        %v994 = vmul.f32 %v992, %v972
        %v995 = vadd.f32 %v969, %v993
        %v996 = vadd.f32 %v970, %v994
        %s997 = sld [smem:[#allocation3 + $0xd]]
        %v998 = vstv %s997
        %v999 = vmul.f32 %v998, %v971
        %v1000 = vmul.f32 %v998, %v972
        %1003 = vrot.lane.b32.xlu0 %v999, 127
        %v1004 = vpop.permute.xlu0 %1003
        %1005 = vrot.lane.b32.xlu0 %v1000, 127
        %v1006 = vpop.permute.xlu0 %1005
        %v1009 = vadd.f32 %v977, %v1004
        %v1010 = vadd.f32 %v978, %v1006
        %s1011 = sld [smem:[#allocation3 + $0x31]]
        %v1012 = vstv %s1011
        %v1013 = vmul.f32 %v1012, %v971
        %v1014 = vmul.f32 %v1012, %v972
        %1017 = vrot.lane.b32.xlu0 %v1013, 127
        %v1018 = vpop.permute.xlu0 %1017
        %1019 = vrot.lane.b32.xlu0 %v1014, 127
        %v1020 = vpop.permute.xlu0 %1019
        %v1023 = vadd.f32 %v983, %v1018
        %v1024 = vadd.f32 %v984, %v1020
        %s1025 = sld [smem:[#allocation3 + $0x55]]
        %v1026 = vstv %s1025
        %v1027 = vmul.f32 %v1026, %v971
        %v1028 = vmul.f32 %v1026, %v972
        %1031 = vrot.lane.b32.xlu0 %v1027, 127
        %v1032 = vpop.permute.xlu0 %1031
        %1033 = vrot.lane.b32.xlu0 %v1028, 127
        %v1034 = vpop.permute.xlu0 %1033
        %v1037 = vadd.f32 %v989, %v1032
        %v1038 = vadd.f32 %v990, %v1034
        %s1039 = sld [smem:[#allocation3 + $0x79]]
        %v1040 = vstv %s1039
        %v1041 = vmul.f32 %v1040, %v971
        %v1042 = vmul.f32 %v1040, %v972
        %1045 = vrot.lane.b32.xlu0 %v1041, 127
        %v1046 = vpop.permute.xlu0 %1045
        %1047 = vrot.lane.b32.xlu0 %v1042, 127
        %v1048 = vpop.permute.xlu0 %1047
        %v1051 = vadd.f32 %v995, %v1046
        %v1052 = vadd.f32 %v996, %v1048
        %s1053 = sld [smem:[#allocation3 + $0xe]]
        %v1054 = vstv %s1053
        %v1055 = vmul.f32 %v1054, %v971
        %v1056 = vmul.f32 %v1054, %v972
        %1059 = vrot.lane.b32.xlu0 %v1055, 126
        %v1060 = vpop.permute.xlu0 %1059
        %1061 = vrot.lane.b32.xlu0 %v1056, 126
        %v1062 = vpop.permute.xlu0 %1061
        %v1065 = vadd.f32 %v1009, %v1060
        %v1066 = vadd.f32 %v1010, %v1062
        %s1067 = sld [smem:[#allocation3 + $0x32]]
        %v1068 = vstv %s1067
        %v1069 = vmul.f32 %v1068, %v971
        %v1070 = vmul.f32 %v1068, %v972
        %1073 = vrot.lane.b32.xlu0 %v1069, 126
        %v1074 = vpop.permute.xlu0 %1073
        %1075 = vrot.lane.b32.xlu0 %v1070, 126
        %v1076 = vpop.permute.xlu0 %1075
        %v1079 = vadd.f32 %v1023, %v1074
        %v1080 = vadd.f32 %v1024, %v1076
        %s1081 = sld [smem:[#allocation3 + $0x56]]
        %v1082 = vstv %s1081
        %v1083 = vmul.f32 %v1082, %v971
        %v1084 = vmul.f32 %v1082, %v972
        %1087 = vrot.lane.b32.xlu0 %v1083, 126
        %v1088 = vpop.permute.xlu0 %1087
        %1089 = vrot.lane.b32.xlu0 %v1084, 126
        %v1090 = vpop.permute.xlu0 %1089
        %v1093 = vadd.f32 %v1037, %v1088
        %v1094 = vadd.f32 %v1038, %v1090
        %s1095 = sld [smem:[#allocation3 + $0x7a]]
        %v1096 = vstv %s1095
        %v1097 = vmul.f32 %v1096, %v971
        %v1098 = vmul.f32 %v1096, %v972
        %1101 = vrot.lane.b32.xlu0 %v1097, 126
        %v1102 = vpop.permute.xlu0 %1101
        %1103 = vrot.lane.b32.xlu0 %v1098, 126
        %v1104 = vpop.permute.xlu0 %1103
        %v1107 = vadd.f32 %v1051, %v1102
        %v1108 = vadd.f32 %v1052, %v1104
        %v1109 = vld [vmem:[%s832 + $0x2] sm:$0xff]
        %v1110 = vld [vmem:[%s832 + $0xa] sm:$0xff]
        %s1111 = sld [smem:[#allocation3 + $0xf]]
        %v1112 = vstv %s1111
        %v1113 = vmul.f32 %v1112, %v1109
        %v1114 = vmul.f32 %v1112, %v1110
        %v1115 = vadd.f32 %v1065, %v1113
        %v1116 = vadd.f32 %v1066, %v1114
        %s1117 = sld [smem:[#allocation3 + $0x33]]
        %v1118 = vstv %s1117
        %v1119 = vmul.f32 %v1118, %v1109
        %v1120 = vmul.f32 %v1118, %v1110
        %v1121 = vadd.f32 %v1079, %v1119
        %v1122 = vadd.f32 %v1080, %v1120
        %s1123 = sld [smem:[#allocation3 + $0x57]]
        %v1124 = vstv %s1123
        %v1125 = vmul.f32 %v1124, %v1109
        %v1126 = vmul.f32 %v1124, %v1110
        %v1127 = vadd.f32 %v1093, %v1125
        %v1128 = vadd.f32 %v1094, %v1126
        %s1129 = sld [smem:[#allocation3 + $0x7b]]
        %v1130 = vstv %s1129
        %v1131 = vmul.f32 %v1130, %v1109
        %v1132 = vmul.f32 %v1130, %v1110
        %v1133 = vadd.f32 %v1107, %v1131
        %v1134 = vadd.f32 %v1108, %v1132
        %s1135 = sld [smem:[#allocation3 + $0x10]]
        %v1136 = vstv %s1135
        %v1137 = vmul.f32 %v1136, %v1109
        %v1138 = vmul.f32 %v1136, %v1110
        %1141 = vrot.lane.b32.xlu0 %v1137, 127
        %v1142 = vpop.permute.xlu0 %1141
        %1143 = vrot.lane.b32.xlu0 %v1138, 127
        %v1144 = vpop.permute.xlu0 %1143
        %v1147 = vadd.f32 %v1115, %v1142
        %v1148 = vadd.f32 %v1116, %v1144
        %s1149 = sld [smem:[#allocation3 + $0x34]]
        %v1150 = vstv %s1149
        %v1151 = vmul.f32 %v1150, %v1109
        %v1152 = vmul.f32 %v1150, %v1110
        %1155 = vrot.lane.b32.xlu0 %v1151, 127
        %v1156 = vpop.permute.xlu0 %1155
        %1157 = vrot.lane.b32.xlu0 %v1152, 127
        %v1158 = vpop.permute.xlu0 %1157
        %v1161 = vadd.f32 %v1121, %v1156
        %v1162 = vadd.f32 %v1122, %v1158
        %s1163 = sld [smem:[#allocation3 + $0x58]]
        %v1164 = vstv %s1163
        %v1165 = vmul.f32 %v1164, %v1109
        %v1166 = vmul.f32 %v1164, %v1110
        %1169 = vrot.lane.b32.xlu0 %v1165, 127
        %v1170 = vpop.permute.xlu0 %1169
        %1171 = vrot.lane.b32.xlu0 %v1166, 127
        %v1172 = vpop.permute.xlu0 %1171
        %v1175 = vadd.f32 %v1127, %v1170
        %v1176 = vadd.f32 %v1128, %v1172
        %s1177 = sld [smem:[#allocation3 + $0x7c]]
        %v1178 = vstv %s1177
        %v1179 = vmul.f32 %v1178, %v1109
        %v1180 = vmul.f32 %v1178, %v1110
        %1183 = vrot.lane.b32.xlu0 %v1179, 127
        %v1184 = vpop.permute.xlu0 %1183
        %1185 = vrot.lane.b32.xlu0 %v1180, 127
        %v1186 = vpop.permute.xlu0 %1185
        %v1189 = vadd.f32 %v1133, %v1184
        %v1190 = vadd.f32 %v1134, %v1186
        %s1191 = sld [smem:[#allocation3 + $0x11]]
        %v1192 = vstv %s1191
        %v1193 = vmul.f32 %v1192, %v1109
        %v1194 = vmul.f32 %v1192, %v1110
        %1197 = vrot.lane.b32.xlu0 %v1193, 126
        %v1198 = vpop.permute.xlu0 %1197
        %1199 = vrot.lane.b32.xlu0 %v1194, 126
        %v1200 = vpop.permute.xlu0 %1199
        %v1203 = vadd.f32 %v1147, %v1198
        %v1204 = vadd.f32 %v1148, %v1200
        %s1205 = sld [smem:[#allocation3 + $0x35]]
        %v1206 = vstv %s1205
        %v1207 = vmul.f32 %v1206, %v1109
        %v1208 = vmul.f32 %v1206, %v1110
        %1211 = vrot.lane.b32.xlu0 %v1207, 126
        %v1212 = vpop.permute.xlu0 %1211
        %1213 = vrot.lane.b32.xlu0 %v1208, 126
        %v1214 = vpop.permute.xlu0 %1213
        %v1217 = vadd.f32 %v1161, %v1212
        %v1218 = vadd.f32 %v1162, %v1214
        %s1219 = sld [smem:[#allocation3 + $0x59]]
        %v1220 = vstv %s1219
        %v1221 = vmul.f32 %v1220, %v1109
        %v1222 = vmul.f32 %v1220, %v1110
        %1225 = vrot.lane.b32.xlu0 %v1221, 126
        %v1226 = vpop.permute.xlu0 %1225
        %1227 = vrot.lane.b32.xlu0 %v1222, 126
        %v1228 = vpop.permute.xlu0 %1227
        %v1231 = vadd.f32 %v1175, %v1226
        %v1232 = vadd.f32 %v1176, %v1228
        %s1233 = sld [smem:[#allocation3 + $0x7d]]
        %v1234 = vstv %s1233
        %v1235 = vmul.f32 %v1234, %v1109
        %v1236 = vmul.f32 %v1234, %v1110
        %1239 = vrot.lane.b32.xlu0 %v1235, 126
        %v1240 = vpop.permute.xlu0 %1239
        %1241 = vrot.lane.b32.xlu0 %v1236, 126
        %v1242 = vpop.permute.xlu0 %1241
        %v1245 = vadd.f32 %v1189, %v1240
        %v1246 = vadd.f32 %v1190, %v1242
        %s1247 = scalar_lea.vmem [#allocation2], 48
        %v1248 = vld [vmem:[%s1247] sm:$0xff]
        %v1249 = vld [vmem:[%s1247 + $0x8] sm:$0xff]
        %s1250 = sld [smem:[#allocation3 + $0x12]]
        %v1251 = vstv %s1250
        %v1252 = vmul.f32 %v1251, %v1248
        %v1253 = vmul.f32 %v1251, %v1249
        %v1254 = vadd.f32 %v1203, %v1252
        %v1255 = vadd.f32 %v1204, %v1253
        %s1256 = sld [smem:[#allocation3 + $0x36]]
        %v1257 = vstv %s1256
        %v1258 = vmul.f32 %v1257, %v1248
        %v1259 = vmul.f32 %v1257, %v1249
        %v1260 = vadd.f32 %v1217, %v1258
        %v1261 = vadd.f32 %v1218, %v1259
        %s1262 = sld [smem:[#allocation3 + $0x5a]]
        %v1263 = vstv %s1262
        %v1264 = vmul.f32 %v1263, %v1248
        %v1265 = vmul.f32 %v1263, %v1249
        %v1266 = vadd.f32 %v1231, %v1264
        %v1267 = vadd.f32 %v1232, %v1265
        %s1268 = sld [smem:[#allocation3 + $0x7e]]
        %v1269 = vstv %s1268
        %v1270 = vmul.f32 %v1269, %v1248
        %v1271 = vmul.f32 %v1269, %v1249
        %v1272 = vadd.f32 %v1245, %v1270
        %v1273 = vadd.f32 %v1246, %v1271
        %s1274 = sld [smem:[#allocation3 + $0x13]]
        %v1275 = vstv %s1274
        %v1276 = vmul.f32 %v1275, %v1248
        %v1277 = vmul.f32 %v1275, %v1249
        %1280 = vrot.lane.b32.xlu0 %v1276, 127
        %v1281 = vpop.permute.xlu0 %1280
        %1282 = vrot.lane.b32.xlu0 %v1277, 127
        %v1283 = vpop.permute.xlu0 %1282
        %v1286 = vadd.f32 %v1254, %v1281
        %v1287 = vadd.f32 %v1255, %v1283
        %s1288 = sld [smem:[#allocation3 + $0x37]]
        %v1289 = vstv %s1288
        %v1290 = vmul.f32 %v1289, %v1248
        %v1291 = vmul.f32 %v1289, %v1249
        %1294 = vrot.lane.b32.xlu0 %v1290, 127
        %v1295 = vpop.permute.xlu0 %1294
        %1296 = vrot.lane.b32.xlu0 %v1291, 127
        %v1297 = vpop.permute.xlu0 %1296
        %v1300 = vadd.f32 %v1260, %v1295
        %v1301 = vadd.f32 %v1261, %v1297
        %s1302 = sld [smem:[#allocation3 + $0x5b]]
        %v1303 = vstv %s1302
        %v1304 = vmul.f32 %v1303, %v1248
        %v1305 = vmul.f32 %v1303, %v1249
        %1308 = vrot.lane.b32.xlu0 %v1304, 127
        %v1309 = vpop.permute.xlu0 %1308
        %1310 = vrot.lane.b32.xlu0 %v1305, 127
        %v1311 = vpop.permute.xlu0 %1310
        %v1314 = vadd.f32 %v1266, %v1309
        %v1315 = vadd.f32 %v1267, %v1311
        %s1316 = sld [smem:[#allocation3 + $0x7f]]
        %v1317 = vstv %s1316
        %v1318 = vmul.f32 %v1317, %v1248
        %v1319 = vmul.f32 %v1317, %v1249
        %1322 = vrot.lane.b32.xlu0 %v1318, 127
        %v1323 = vpop.permute.xlu0 %1322
        %1324 = vrot.lane.b32.xlu0 %v1319, 127
        %v1325 = vpop.permute.xlu0 %1324
        %v1328 = vadd.f32 %v1272, %v1323
        %v1329 = vadd.f32 %v1273, %v1325
        %s1330 = sld [smem:[#allocation3 + $0x14]]
        %v1331 = vstv %s1330
        %v1332 = vmul.f32 %v1331, %v1248
        %v1333 = vmul.f32 %v1331, %v1249
        %1336 = vrot.lane.b32.xlu0 %v1332, 126
        %v1337 = vpop.permute.xlu0 %1336
        %1338 = vrot.lane.b32.xlu0 %v1333, 126
        %v1339 = vpop.permute.xlu0 %1338
        %v1342 = vadd.f32 %v1286, %v1337
        %v1343 = vadd.f32 %v1287, %v1339
        %s1344 = sld [smem:[#allocation3 + $0x38]]
        %v1345 = vstv %s1344
        %v1346 = vmul.f32 %v1345, %v1248
        %v1347 = vmul.f32 %v1345, %v1249
        %1350 = vrot.lane.b32.xlu0 %v1346, 126
        %v1351 = vpop.permute.xlu0 %1350
        %1352 = vrot.lane.b32.xlu0 %v1347, 126
        %v1353 = vpop.permute.xlu0 %1352
        %v1356 = vadd.f32 %v1300, %v1351
        %v1357 = vadd.f32 %v1301, %v1353
        %s1358 = sld [smem:[#allocation3 + $0x5c]]
        %v1359 = vstv %s1358
        %v1360 = vmul.f32 %v1359, %v1248
        %v1361 = vmul.f32 %v1359, %v1249
        %1364 = vrot.lane.b32.xlu0 %v1360, 126
        %v1365 = vpop.permute.xlu0 %1364
        %1366 = vrot.lane.b32.xlu0 %v1361, 126
        %v1367 = vpop.permute.xlu0 %1366
        %v1370 = vadd.f32 %v1314, %v1365
        %v1371 = vadd.f32 %v1315, %v1367
        %s1372 = sld [smem:[#allocation3 + $0x80]]
        %v1373 = vstv %s1372
        %v1374 = vmul.f32 %v1373, %v1248
        %v1375 = vmul.f32 %v1373, %v1249
        %1378 = vrot.lane.b32.xlu0 %v1374, 126
        %v1379 = vpop.permute.xlu0 %1378
        %1380 = vrot.lane.b32.xlu0 %v1375, 126
        %v1381 = vpop.permute.xlu0 %1380
        %v1384 = vadd.f32 %v1328, %v1379
        %v1385 = vadd.f32 %v1329, %v1381
        %v1386 = vld [vmem:[%s1247 + $0x1] sm:$0xff]
        %v1387 = vld [vmem:[%s1247 + $0x9] sm:$0xff]
        %s1388 = sld [smem:[#allocation3 + $0x15]]
        %v1389 = vstv %s1388
        %v1390 = vmul.f32 %v1389, %v1386
        %v1391 = vmul.f32 %v1389, %v1387
        %v1392 = vadd.f32 %v1342, %v1390
        %v1393 = vadd.f32 %v1343, %v1391
        %s1394 = sld [smem:[#allocation3 + $0x39]]
        %v1395 = vstv %s1394
        %v1396 = vmul.f32 %v1395, %v1386
        %v1397 = vmul.f32 %v1395, %v1387
        %v1398 = vadd.f32 %v1356, %v1396
        %v1399 = vadd.f32 %v1357, %v1397
        %s1400 = sld [smem:[#allocation3 + $0x5d]]
        %v1401 = vstv %s1400
        %v1402 = vmul.f32 %v1401, %v1386
        %v1403 = vmul.f32 %v1401, %v1387
        %v1404 = vadd.f32 %v1370, %v1402
        %v1405 = vadd.f32 %v1371, %v1403
        %s1406 = sld [smem:[#allocation3 + $0x81]]
        %v1407 = vstv %s1406
        %v1408 = vmul.f32 %v1407, %v1386
        %v1409 = vmul.f32 %v1407, %v1387
        %v1410 = vadd.f32 %v1384, %v1408
        %v1411 = vadd.f32 %v1385, %v1409
        %s1412 = sld [smem:[#allocation3 + $0x16]]
        %v1413 = vstv %s1412
        %v1414 = vmul.f32 %v1413, %v1386
        %v1415 = vmul.f32 %v1413, %v1387
        %1418 = vrot.lane.b32.xlu0 %v1414, 127
        %v1419 = vpop.permute.xlu0 %1418
        %1420 = vrot.lane.b32.xlu0 %v1415, 127
        %v1421 = vpop.permute.xlu0 %1420
        %v1424 = vadd.f32 %v1392, %v1419
        %v1425 = vadd.f32 %v1393, %v1421
        %s1426 = sld [smem:[#allocation3 + $0x3a]]
        %v1427 = vstv %s1426
        %v1428 = vmul.f32 %v1427, %v1386
        %v1429 = vmul.f32 %v1427, %v1387
        %1432 = vrot.lane.b32.xlu0 %v1428, 127
        %v1433 = vpop.permute.xlu0 %1432
        %1434 = vrot.lane.b32.xlu0 %v1429, 127
        %v1435 = vpop.permute.xlu0 %1434
        %v1438 = vadd.f32 %v1398, %v1433
        %v1439 = vadd.f32 %v1399, %v1435
        %s1440 = sld [smem:[#allocation3 + $0x5e]]
        %v1441 = vstv %s1440
        %v1442 = vmul.f32 %v1441, %v1386
        %v1443 = vmul.f32 %v1441, %v1387
        %1446 = vrot.lane.b32.xlu0 %v1442, 127
        %v1447 = vpop.permute.xlu0 %1446
        %1448 = vrot.lane.b32.xlu0 %v1443, 127
        %v1449 = vpop.permute.xlu0 %1448
        %v1452 = vadd.f32 %v1404, %v1447
        %v1453 = vadd.f32 %v1405, %v1449
        %s1454 = sld [smem:[#allocation3 + $0x82]]
        %v1455 = vstv %s1454
        %v1456 = vmul.f32 %v1455, %v1386
        %v1457 = vmul.f32 %v1455, %v1387
        %1460 = vrot.lane.b32.xlu0 %v1456, 127
        %v1461 = vpop.permute.xlu0 %1460
        %1462 = vrot.lane.b32.xlu0 %v1457, 127
        %v1463 = vpop.permute.xlu0 %1462
        %v1466 = vadd.f32 %v1410, %v1461
        %v1467 = vadd.f32 %v1411, %v1463
        %s1468 = sld [smem:[#allocation3 + $0x17]]
        %v1469 = vstv %s1468
        %v1470 = vmul.f32 %v1469, %v1386
        %v1471 = vmul.f32 %v1469, %v1387
        %1474 = vrot.lane.b32.xlu0 %v1470, 126
        %v1475 = vpop.permute.xlu0 %1474
        %1476 = vrot.lane.b32.xlu0 %v1471, 126
        %v1477 = vpop.permute.xlu0 %1476
        %v1480 = vadd.f32 %v1424, %v1475
        %v1481 = vadd.f32 %v1425, %v1477
        %s1482 = sld [smem:[#allocation3 + $0x3b]]
        %v1483 = vstv %s1482
        %v1484 = vmul.f32 %v1483, %v1386
        %v1485 = vmul.f32 %v1483, %v1387
        %1488 = vrot.lane.b32.xlu0 %v1484, 126
        %v1489 = vpop.permute.xlu0 %1488
        %1490 = vrot.lane.b32.xlu0 %v1485, 126
        %v1491 = vpop.permute.xlu0 %1490
        %v1494 = vadd.f32 %v1438, %v1489
        %v1495 = vadd.f32 %v1439, %v1491
        %s1496 = sld [smem:[#allocation3 + $0x5f]]
        %v1497 = vstv %s1496
        %v1498 = vmul.f32 %v1497, %v1386
        %v1499 = vmul.f32 %v1497, %v1387
        %1502 = vrot.lane.b32.xlu0 %v1498, 126
        %v1503 = vpop.permute.xlu0 %1502
        %1504 = vrot.lane.b32.xlu0 %v1499, 126
        %v1505 = vpop.permute.xlu0 %1504
        %v1508 = vadd.f32 %v1452, %v1503
        %v1509 = vadd.f32 %v1453, %v1505
        %s1510 = sld [smem:[#allocation3 + $0x83]]
        %v1511 = vstv %s1510
        %v1512 = vmul.f32 %v1511, %v1386
        %v1513 = vmul.f32 %v1511, %v1387
        %1516 = vrot.lane.b32.xlu0 %v1512, 126
        %v1517 = vpop.permute.xlu0 %1516
        %1518 = vrot.lane.b32.xlu0 %v1513, 126
        %v1519 = vpop.permute.xlu0 %1518
        %v1522 = vadd.f32 %v1466, %v1517
        %v1523 = vadd.f32 %v1467, %v1519
        %v1524 = vld [vmem:[%s1247 + $0x2] sm:$0xff]
        %v1525 = vld [vmem:[%s1247 + $0xa] sm:$0xff]
        %s1526 = sld [smem:[#allocation3 + $0x18]]
        %v1527 = vstv %s1526
        %v1528 = vmul.f32 %v1527, %v1524
        %v1529 = vmul.f32 %v1527, %v1525
        %v1530 = vadd.f32 %v1480, %v1528
        %v1531 = vadd.f32 %v1481, %v1529
        %s1532 = sld [smem:[#allocation3 + $0x3c]]
        %v1533 = vstv %s1532
        %v1534 = vmul.f32 %v1533, %v1524
        %v1535 = vmul.f32 %v1533, %v1525
        %v1536 = vadd.f32 %v1494, %v1534
        %v1537 = vadd.f32 %v1495, %v1535
        %s1538 = sld [smem:[#allocation3 + $0x60]]
        %v1539 = vstv %s1538
        %v1540 = vmul.f32 %v1539, %v1524
        %v1541 = vmul.f32 %v1539, %v1525
        %v1542 = vadd.f32 %v1508, %v1540
        %v1543 = vadd.f32 %v1509, %v1541
        %s1544 = sld [smem:[#allocation3 + $0x84]]
        %v1545 = vstv %s1544
        %v1546 = vmul.f32 %v1545, %v1524
        %v1547 = vmul.f32 %v1545, %v1525
        %v1548 = vadd.f32 %v1522, %v1546
        %v1549 = vadd.f32 %v1523, %v1547
        %s1550 = sld [smem:[#allocation3 + $0x19]]
        %v1551 = vstv %s1550
        %v1552 = vmul.f32 %v1551, %v1524
        %v1553 = vmul.f32 %v1551, %v1525
        %1556 = vrot.lane.b32.xlu0 %v1552, 127
        %v1557 = vpop.permute.xlu0 %1556
        %1558 = vrot.lane.b32.xlu0 %v1553, 127
        %v1559 = vpop.permute.xlu0 %1558
        %v1562 = vadd.f32 %v1530, %v1557
        %v1563 = vadd.f32 %v1531, %v1559
        %s1564 = sld [smem:[#allocation3 + $0x3d]]
        %v1565 = vstv %s1564
        %v1566 = vmul.f32 %v1565, %v1524
        %v1567 = vmul.f32 %v1565, %v1525
        %1570 = vrot.lane.b32.xlu0 %v1566, 127
        %v1571 = vpop.permute.xlu0 %1570
        %1572 = vrot.lane.b32.xlu0 %v1567, 127
        %v1573 = vpop.permute.xlu0 %1572
        %v1576 = vadd.f32 %v1536, %v1571
        %v1577 = vadd.f32 %v1537, %v1573
        %s1578 = sld [smem:[#allocation3 + $0x61]]
        %v1579 = vstv %s1578
        %v1580 = vmul.f32 %v1579, %v1524
        %v1581 = vmul.f32 %v1579, %v1525
        %1584 = vrot.lane.b32.xlu0 %v1580, 127
        %v1585 = vpop.permute.xlu0 %1584
        %1586 = vrot.lane.b32.xlu0 %v1581, 127
        %v1587 = vpop.permute.xlu0 %1586
        %v1590 = vadd.f32 %v1542, %v1585
        %v1591 = vadd.f32 %v1543, %v1587
        %s1592 = sld [smem:[#allocation3 + $0x85]]
        %v1593 = vstv %s1592
        %v1594 = vmul.f32 %v1593, %v1524
        %v1595 = vmul.f32 %v1593, %v1525
        %1598 = vrot.lane.b32.xlu0 %v1594, 127
        %v1599 = vpop.permute.xlu0 %1598
        %1600 = vrot.lane.b32.xlu0 %v1595, 127
        %v1601 = vpop.permute.xlu0 %1600
        %v1604 = vadd.f32 %v1548, %v1599
        %v1605 = vadd.f32 %v1549, %v1601
        %s1606 = sld [smem:[#allocation3 + $0x1a]]
        %v1607 = vstv %s1606
        %v1608 = vmul.f32 %v1607, %v1524
        %v1609 = vmul.f32 %v1607, %v1525
        %1612 = vrot.lane.b32.xlu0 %v1608, 126
        %v1613 = vpop.permute.xlu0 %1612
        %1614 = vrot.lane.b32.xlu0 %v1609, 126
        %v1615 = vpop.permute.xlu0 %1614
        %v1618 = vadd.f32 %v1562, %v1613
        %v1619 = vadd.f32 %v1563, %v1615
        %s1620 = sld [smem:[#allocation3 + $0x3e]]
        %v1621 = vstv %s1620
        %v1622 = vmul.f32 %v1621, %v1524
        %v1623 = vmul.f32 %v1621, %v1525
        %1626 = vrot.lane.b32.xlu0 %v1622, 126
        %v1627 = vpop.permute.xlu0 %1626
        %1628 = vrot.lane.b32.xlu0 %v1623, 126
        %v1629 = vpop.permute.xlu0 %1628
        %v1632 = vadd.f32 %v1576, %v1627
        %v1633 = vadd.f32 %v1577, %v1629
        %s1634 = sld [smem:[#allocation3 + $0x62]]
        %v1635 = vstv %s1634
        %v1636 = vmul.f32 %v1635, %v1524
        %v1637 = vmul.f32 %v1635, %v1525
        %1640 = vrot.lane.b32.xlu0 %v1636, 126
        %v1641 = vpop.permute.xlu0 %1640
        %1642 = vrot.lane.b32.xlu0 %v1637, 126
        %v1643 = vpop.permute.xlu0 %1642
        %v1646 = vadd.f32 %v1590, %v1641
        %v1647 = vadd.f32 %v1591, %v1643
        %s1648 = sld [smem:[#allocation3 + $0x86]]
        %v1649 = vstv %s1648
        %v1650 = vmul.f32 %v1649, %v1524
        %v1651 = vmul.f32 %v1649, %v1525
        %1654 = vrot.lane.b32.xlu0 %v1650, 126
        %v1655 = vpop.permute.xlu0 %1654
        %1656 = vrot.lane.b32.xlu0 %v1651, 126
        %v1657 = vpop.permute.xlu0 %1656
        %v1660 = vadd.f32 %v1604, %v1655
        %v1661 = vadd.f32 %v1605, %v1657
        %s1662 = scalar_lea.vmem [#allocation2], 72
        %v1663 = vld [vmem:[%s1662] sm:$0xff]
        %v1664 = vld [vmem:[%s1662 + $0x8] sm:$0xff]
        %s1665 = sld [smem:[#allocation3 + $0x1b]]
        %v1666 = vstv %s1665
        %v1667 = vmul.f32 %v1666, %v1663
        %v1668 = vmul.f32 %v1666, %v1664
        %v1669 = vadd.f32 %v1618, %v1667
        %v1670 = vadd.f32 %v1619, %v1668
        %s1671 = sld [smem:[#allocation3 + $0x3f]]
        %v1672 = vstv %s1671
        %v1673 = vmul.f32 %v1672, %v1663
        %v1674 = vmul.f32 %v1672, %v1664
        %v1675 = vadd.f32 %v1632, %v1673
        %v1676 = vadd.f32 %v1633, %v1674
        %s1677 = sld [smem:[#allocation3 + $0x63]]
        %v1678 = vstv %s1677
        %v1679 = vmul.f32 %v1678, %v1663
        %v1680 = vmul.f32 %v1678, %v1664
        %v1681 = vadd.f32 %v1646, %v1679
        %v1682 = vadd.f32 %v1647, %v1680
        %s1683 = sld [smem:[#allocation3 + $0x87]]
        %v1684 = vstv %s1683
        %v1685 = vmul.f32 %v1684, %v1663
        %v1686 = vmul.f32 %v1684, %v1664
        %v1687 = vadd.f32 %v1660, %v1685
        %v1688 = vadd.f32 %v1661, %v1686
        %s1689 = sld [smem:[#allocation3 + $0x1c]]
        %v1690 = vstv %s1689
        %v1691 = vmul.f32 %v1690, %v1663
        %v1692 = vmul.f32 %v1690, %v1664
        %1695 = vrot.lane.b32.xlu0 %v1691, 127
        %v1696 = vpop.permute.xlu0 %1695
        %1697 = vrot.lane.b32.xlu0 %v1692, 127
        %v1698 = vpop.permute.xlu0 %1697
        %v1701 = vadd.f32 %v1669, %v1696
        %v1702 = vadd.f32 %v1670, %v1698
        %s1703 = sld [smem:[#allocation3 + $0x40]]
        %v1704 = vstv %s1703
        %v1705 = vmul.f32 %v1704, %v1663
        %v1706 = vmul.f32 %v1704, %v1664
        %1709 = vrot.lane.b32.xlu0 %v1705, 127
        %v1710 = vpop.permute.xlu0 %1709
        %1711 = vrot.lane.b32.xlu0 %v1706, 127
        %v1712 = vpop.permute.xlu0 %1711
        %v1715 = vadd.f32 %v1675, %v1710
        %v1716 = vadd.f32 %v1676, %v1712
        %s1717 = sld [smem:[#allocation3 + $0x64]]
        %v1718 = vstv %s1717
        %v1719 = vmul.f32 %v1718, %v1663
        %v1720 = vmul.f32 %v1718, %v1664
        %1723 = vrot.lane.b32.xlu0 %v1719, 127
        %v1724 = vpop.permute.xlu0 %1723
        %1725 = vrot.lane.b32.xlu0 %v1720, 127
        %v1726 = vpop.permute.xlu0 %1725
        %v1729 = vadd.f32 %v1681, %v1724
        %v1730 = vadd.f32 %v1682, %v1726
        %s1731 = sld [smem:[#allocation3 + $0x88]]
        %v1732 = vstv %s1731
        %v1733 = vmul.f32 %v1732, %v1663
        %v1734 = vmul.f32 %v1732, %v1664
        %1737 = vrot.lane.b32.xlu0 %v1733, 127
        %v1738 = vpop.permute.xlu0 %1737
        %1739 = vrot.lane.b32.xlu0 %v1734, 127
        %v1740 = vpop.permute.xlu0 %1739
        %v1743 = vadd.f32 %v1687, %v1738
        %v1744 = vadd.f32 %v1688, %v1740
        %s1745 = sld [smem:[#allocation3 + $0x1d]]
        %v1746 = vstv %s1745
        %v1747 = vmul.f32 %v1746, %v1663
        %v1748 = vmul.f32 %v1746, %v1664
        %1751 = vrot.lane.b32.xlu0 %v1747, 126
        %v1752 = vpop.permute.xlu0 %1751
        %1753 = vrot.lane.b32.xlu0 %v1748, 126
        %v1754 = vpop.permute.xlu0 %1753
        %v1757 = vadd.f32 %v1701, %v1752
        %v1758 = vadd.f32 %v1702, %v1754
        %s1759 = sld [smem:[#allocation3 + $0x41]]
        %v1760 = vstv %s1759
        %v1761 = vmul.f32 %v1760, %v1663
        %v1762 = vmul.f32 %v1760, %v1664
        %1765 = vrot.lane.b32.xlu0 %v1761, 126
        %v1766 = vpop.permute.xlu0 %1765
        %1767 = vrot.lane.b32.xlu0 %v1762, 126
        %v1768 = vpop.permute.xlu0 %1767
        %v1771 = vadd.f32 %v1715, %v1766
        %v1772 = vadd.f32 %v1716, %v1768
        %s1773 = sld [smem:[#allocation3 + $0x65]]
        %v1774 = vstv %s1773
        %v1775 = vmul.f32 %v1774, %v1663
        %v1776 = vmul.f32 %v1774, %v1664
        %1779 = vrot.lane.b32.xlu0 %v1775, 126
        %v1780 = vpop.permute.xlu0 %1779
        %1781 = vrot.lane.b32.xlu0 %v1776, 126
        %v1782 = vpop.permute.xlu0 %1781
        %v1785 = vadd.f32 %v1729, %v1780
        %v1786 = vadd.f32 %v1730, %v1782
        %s1787 = sld [smem:[#allocation3 + $0x89]]
        %v1788 = vstv %s1787
        %v1789 = vmul.f32 %v1788, %v1663
        %v1790 = vmul.f32 %v1788, %v1664
        %1793 = vrot.lane.b32.xlu0 %v1789, 126
        %v1794 = vpop.permute.xlu0 %1793
        %1795 = vrot.lane.b32.xlu0 %v1790, 126
        %v1796 = vpop.permute.xlu0 %1795
        %v1799 = vadd.f32 %v1743, %v1794
        %v1800 = vadd.f32 %v1744, %v1796
        %v1801 = vld [vmem:[%s1662 + $0x1] sm:$0xff]
        %v1802 = vld [vmem:[%s1662 + $0x9] sm:$0xff]
        %s1803 = sld [smem:[#allocation3 + $0x1e]]
        %v1804 = vstv %s1803
        %v1805 = vmul.f32 %v1804, %v1801
        %v1806 = vmul.f32 %v1804, %v1802
        %v1807 = vadd.f32 %v1757, %v1805
        %v1808 = vadd.f32 %v1758, %v1806
        %s1809 = sld [smem:[#allocation3 + $0x42]]
        %v1810 = vstv %s1809
        %v1811 = vmul.f32 %v1810, %v1801
        %v1812 = vmul.f32 %v1810, %v1802
        %v1813 = vadd.f32 %v1771, %v1811
        %v1814 = vadd.f32 %v1772, %v1812
        %s1815 = sld [smem:[#allocation3 + $0x66]]
        %v1816 = vstv %s1815
        %v1817 = vmul.f32 %v1816, %v1801
        %v1818 = vmul.f32 %v1816, %v1802
        %v1819 = vadd.f32 %v1785, %v1817
        %v1820 = vadd.f32 %v1786, %v1818
        %s1821 = sld [smem:[#allocation3 + $0x8a]]
        %v1822 = vstv %s1821
        %v1823 = vmul.f32 %v1822, %v1801
        %v1824 = vmul.f32 %v1822, %v1802
        %v1825 = vadd.f32 %v1799, %v1823
        %v1826 = vadd.f32 %v1800, %v1824
        %s1827 = sld [smem:[#allocation3 + $0x1f]]
        %v1828 = vstv %s1827
        %v1829 = vmul.f32 %v1828, %v1801
        %v1830 = vmul.f32 %v1828, %v1802
        %1833 = vrot.lane.b32.xlu0 %v1829, 127
        %v1834 = vpop.permute.xlu0 %1833
        %1835 = vrot.lane.b32.xlu0 %v1830, 127
        %v1836 = vpop.permute.xlu0 %1835
        %v1839 = vadd.f32 %v1807, %v1834
        %v1840 = vadd.f32 %v1808, %v1836
        %s1841 = sld [smem:[#allocation3 + $0x43]]
        %v1842 = vstv %s1841
        %v1843 = vmul.f32 %v1842, %v1801
        %v1844 = vmul.f32 %v1842, %v1802
        %1847 = vrot.lane.b32.xlu0 %v1843, 127
        %v1848 = vpop.permute.xlu0 %1847
        %1849 = vrot.lane.b32.xlu0 %v1844, 127
        %v1850 = vpop.permute.xlu0 %1849
        %v1853 = vadd.f32 %v1813, %v1848
        %v1854 = vadd.f32 %v1814, %v1850
        %s1855 = sld [smem:[#allocation3 + $0x67]]
        %v1856 = vstv %s1855
        %v1857 = vmul.f32 %v1856, %v1801
        %v1858 = vmul.f32 %v1856, %v1802
        %1861 = vrot.lane.b32.xlu0 %v1857, 127
        %v1862 = vpop.permute.xlu0 %1861
        %1863 = vrot.lane.b32.xlu0 %v1858, 127
        %v1864 = vpop.permute.xlu0 %1863
        %v1867 = vadd.f32 %v1819, %v1862
        %v1868 = vadd.f32 %v1820, %v1864
        %s1869 = sld [smem:[#allocation3 + $0x8b]]
        %v1870 = vstv %s1869
        %v1871 = vmul.f32 %v1870, %v1801
        %v1872 = vmul.f32 %v1870, %v1802
        %1875 = vrot.lane.b32.xlu0 %v1871, 127
        %v1876 = vpop.permute.xlu0 %1875
        %1877 = vrot.lane.b32.xlu0 %v1872, 127
        %v1878 = vpop.permute.xlu0 %1877
        %v1881 = vadd.f32 %v1825, %v1876
        %v1882 = vadd.f32 %v1826, %v1878
        %s1883 = sld [smem:[#allocation3 + $0x20]]
        %v1884 = vstv %s1883
        %v1885 = vmul.f32 %v1884, %v1801
        %v1886 = vmul.f32 %v1884, %v1802
        %1889 = vrot.lane.b32.xlu0 %v1885, 126
        %v1890 = vpop.permute.xlu0 %1889
        %1891 = vrot.lane.b32.xlu0 %v1886, 126
        %v1892 = vpop.permute.xlu0 %1891
        %v1895 = vadd.f32 %v1839, %v1890
        %v1896 = vadd.f32 %v1840, %v1892
        %s1897 = sld [smem:[#allocation3 + $0x44]]
        %v1898 = vstv %s1897
        %v1899 = vmul.f32 %v1898, %v1801
        %v1900 = vmul.f32 %v1898, %v1802
        %1903 = vrot.lane.b32.xlu0 %v1899, 126
        %v1904 = vpop.permute.xlu0 %1903
        %1905 = vrot.lane.b32.xlu0 %v1900, 126
        %v1906 = vpop.permute.xlu0 %1905
        %v1909 = vadd.f32 %v1853, %v1904
        %v1910 = vadd.f32 %v1854, %v1906
        %s1911 = sld [smem:[#allocation3 + $0x68]]
        %v1912 = vstv %s1911
        %v1913 = vmul.f32 %v1912, %v1801
        %v1914 = vmul.f32 %v1912, %v1802
        %1917 = vrot.lane.b32.xlu0 %v1913, 126
        %v1918 = vpop.permute.xlu0 %1917
        %1919 = vrot.lane.b32.xlu0 %v1914, 126
        %v1920 = vpop.permute.xlu0 %1919
        %v1923 = vadd.f32 %v1867, %v1918
        %v1924 = vadd.f32 %v1868, %v1920
        %s1925 = sld [smem:[#allocation3 + $0x8c]]
        %v1926 = vstv %s1925
        %v1927 = vmul.f32 %v1926, %v1801
        %v1928 = vmul.f32 %v1926, %v1802
        %1931 = vrot.lane.b32.xlu0 %v1927, 126
        %v1932 = vpop.permute.xlu0 %1931
        %1933 = vrot.lane.b32.xlu0 %v1928, 126
        %v1934 = vpop.permute.xlu0 %1933
        %v1937 = vadd.f32 %v1881, %v1932
        %v1938 = vadd.f32 %v1882, %v1934
        %v1939 = vld [vmem:[%s1662 + $0x2] sm:$0xff]
        %v1940 = vld [vmem:[%s1662 + $0xa] sm:$0xff]
        %s1941 = sld [smem:[#allocation3 + $0x21]]
        %v1942 = vstv %s1941
        %v1943 = vmul.f32 %v1942, %v1939
        %v1944 = vmul.f32 %v1942, %v1940
        %v1945 = vadd.f32 %v1895, %v1943
        %v1946 = vadd.f32 %v1896, %v1944
        %s1947 = sld [smem:[#allocation3 + $0x45]]
        %v1948 = vstv %s1947
        %v1949 = vmul.f32 %v1948, %v1939
        %v1950 = vmul.f32 %v1948, %v1940
        %v1951 = vadd.f32 %v1909, %v1949
        %v1952 = vadd.f32 %v1910, %v1950
        %s1953 = sld [smem:[#allocation3 + $0x69]]
        %v1954 = vstv %s1953
        %v1955 = vmul.f32 %v1954, %v1939
        %v1956 = vmul.f32 %v1954, %v1940
        %v1957 = vadd.f32 %v1923, %v1955
        %v1958 = vadd.f32 %v1924, %v1956
        %s1959 = sld [smem:[#allocation3 + $0x8d]]
        %v1960 = vstv %s1959
        %v1961 = vmul.f32 %v1960, %v1939
        %v1962 = vmul.f32 %v1960, %v1940
        %v1963 = vadd.f32 %v1937, %v1961
        %v1964 = vadd.f32 %v1938, %v1962
        %s1965 = sld [smem:[#allocation3 + $0x22]]
        %v1966 = vstv %s1965
        %v1967 = vmul.f32 %v1966, %v1939
        %v1968 = vmul.f32 %v1966, %v1940
        %1971 = vrot.lane.b32.xlu0 %v1967, 127
        %v1972 = vpop.permute.xlu0 %1971
        %1973 = vrot.lane.b32.xlu0 %v1968, 127
        %v1974 = vpop.permute.xlu0 %1973
        %v1977 = vadd.f32 %v1945, %v1972
        %v1978 = vadd.f32 %v1946, %v1974
        %s1979 = sld [smem:[#allocation3 + $0x46]]
        %v1980 = vstv %s1979
        %v1981 = vmul.f32 %v1980, %v1939
        %v1982 = vmul.f32 %v1980, %v1940
        %1985 = vrot.lane.b32.xlu0 %v1981, 127
        %v1986 = vpop.permute.xlu0 %1985
        %1987 = vrot.lane.b32.xlu0 %v1982, 127
        %v1988 = vpop.permute.xlu0 %1987
        %v1991 = vadd.f32 %v1951, %v1986
        %v1992 = vadd.f32 %v1952, %v1988
        %s1993 = sld [smem:[#allocation3 + $0x6a]]
        %v1994 = vstv %s1993
        %v1995 = vmul.f32 %v1994, %v1939
        %v1996 = vmul.f32 %v1994, %v1940
        %1999 = vrot.lane.b32.xlu0 %v1995, 127
        %v2000 = vpop.permute.xlu0 %1999
        %2001 = vrot.lane.b32.xlu0 %v1996, 127
        %v2002 = vpop.permute.xlu0 %2001
        %v2005 = vadd.f32 %v1957, %v2000
        %v2006 = vadd.f32 %v1958, %v2002
        %s2007 = sld [smem:[#allocation3 + $0x8e]]
        %v2008 = vstv %s2007
        %v2009 = vmul.f32 %v2008, %v1939
        %v2010 = vmul.f32 %v2008, %v1940
        %2013 = vrot.lane.b32.xlu0 %v2009, 127
        %v2014 = vpop.permute.xlu0 %2013
        %2015 = vrot.lane.b32.xlu0 %v2010, 127
        %v2016 = vpop.permute.xlu0 %2015
        %v2019 = vadd.f32 %v1963, %v2014
        %v2020 = vadd.f32 %v1964, %v2016
        %s2021 = sld [smem:[#allocation3 + $0x23]]
        %v2022 = vstv %s2021
        %v2023 = vmul.f32 %v2022, %v1939
        %v2024 = vmul.f32 %v2022, %v1940
        %2027 = vrot.lane.b32.xlu0 %v2023, 126
        %v2028 = vpop.permute.xlu0 %2027
        %2029 = vrot.lane.b32.xlu0 %v2024, 126
        %v2030 = vpop.permute.xlu0 %2029
        %v2033 = vadd.f32 %v1977, %v2028
        %v2034 = vadd.f32 %v1978, %v2030
        %s2035 = sld [smem:[#allocation3 + $0x47]]
        %v2036 = vstv %s2035
        %v2037 = vmul.f32 %v2036, %v1939
        %v2038 = vmul.f32 %v2036, %v1940
        %2041 = vrot.lane.b32.xlu0 %v2037, 126
        %v2042 = vpop.permute.xlu0 %2041
        %2043 = vrot.lane.b32.xlu0 %v2038, 126
        %v2044 = vpop.permute.xlu0 %2043
        %v2047 = vadd.f32 %v1991, %v2042
        %v2048 = vadd.f32 %v1992, %v2044
        %s2049 = sld [smem:[#allocation3 + $0x6b]]
        %v2050 = vstv %s2049
        %v2051 = vmul.f32 %v2050, %v1939
        %v2052 = vmul.f32 %v2050, %v1940
        %2055 = vrot.lane.b32.xlu0 %v2051, 126
        %v2056 = vpop.permute.xlu0 %2055
        %2057 = vrot.lane.b32.xlu0 %v2052, 126
        %v2058 = vpop.permute.xlu0 %2057
        %v2061 = vadd.f32 %v2005, %v2056
        %v2062 = vadd.f32 %v2006, %v2058
        %s2063 = sld [smem:[#allocation3 + $0x8f]]
        %v2064 = vstv %s2063
        %v2065 = vmul.f32 %v2064, %v1939
        %v2066 = vmul.f32 %v2064, %v1940
        %2069 = vrot.lane.b32.xlu0 %v2065, 126
        %v2070 = vpop.permute.xlu0 %2069
        %2071 = vrot.lane.b32.xlu0 %v2066, 126
        %v2072 = vpop.permute.xlu0 %2071
        %v2075 = vadd.f32 %v2019, %v2070
        %v2076 = vadd.f32 %v2020, %v2072
        %v2077 = vld [vmem:[#allocation7] sm:$0xff]
        %v2078 = vld [vmem:[#allocation7 + $0x8] sm:$0xff]
        %v2079 = vld [vmem:[#allocation8] sm:$0xff]
        %v2080 = vld [vmem:[#allocation8 + $0x8] sm:$0xff]
        %vm2081 = vcmask 130048
        %v2083 = vsel %vm2081, %v2047, 0
        %v2086 = vsel %vm2081, %v2048, 0
        %2088 = vmatprep.subr.mxu0 0.0
        %2089 = vmatpush1.msra.mxu0 0.0
        %2090 = vmatprep.subr.mxu0 0.0
        %2091 = vmatpush1.msra.mxu0 0.0
        %2092 = vmatprep.subr.mxu0 0.0
        %2093 = vmatpush1.msra.mxu0 0.0
        %2094 = vmatprep.subr.mxu0 0.0
        %2095 = vmatpush1.msra.mxu0 0.0
        %2096 = vmatprep.subr.mxu0 0.0
        %2097 = vmatpush1.msra.mxu0 0.0
        %2098 = vmatprep.subr.mxu0 0.0
        %2099 = vmatpush1.msra.mxu0 0.0
        %2100 = vmatprep.subr.mxu0 0.0
        %2101 = vmatpush1.msra.mxu0 0.0
        %2102 = vmatprep.subr.mxu0 0.0
        %2103 = vmatpush1.msra.mxu0 0.0
        %2104 = vmatprep.subr.mxu0 0.0
        %2105 = vmatpush1.msra.mxu0 0.0
        %2106 = vmatprep.subr.mxu0 0.0
        %2107 = vmatpush1.msra.mxu0 0.0
        %2108 = vmatprep.subr.mxu0 0.0
        %2109 = vmatpush1.msra.mxu0 0.0
        %2110 = vmatprep.subr.mxu0 0.0
        %2111 = vmatpush1.msra.mxu0 0.0
        %2112 = vmatprep.subr.mxu0 0.0
        %2113 = vmatpush1.msra.mxu0 0.0
        %2114 = vmatprep.subr.mxu0 0.0
        %2115 = vmatpush1.msra.mxu0 0.0
        %2116 = vmatprep.subr.mxu0 0.0
        %2117 = vmatpush1.msra.mxu0 %v2080
        %2118 = vmatprep.subr.mxu0 0.0
        %2119 = vmatpush1.msra.mxu0 %v2079
        %2120 = vmatprep.subr.mxu0 0.0
        %2121 = vmatpush2.msra.mxu0 0.0
        %2122 = vmatprep.subr.mxu0 0.0
        %2123 = vmatpush2.msra.mxu0 0.0
        %2124 = vmatprep.subr.mxu0 0.0
        %2125 = vmatpush2.msra.mxu0 0.0
        %2126 = vmatprep.subr.mxu0 0.0
        %2127 = vmatpush2.msra.mxu0 0.0
        %2128 = vmatprep.subr.mxu0 0.0
        %2129 = vmatpush2.msra.mxu0 0.0
        %2130 = vmatprep.subr.mxu0 0.0
        %2131 = vmatpush2.msra.mxu0 0.0
        %2132 = vmatprep.subr.mxu0 0.0
        %2133 = vmatpush2.msra.mxu0 0.0
        %2134 = vmatprep.subr.mxu0 0.0
        %2135 = vmatpush2.msra.mxu0 0.0
        %2136 = vmatprep.subr.mxu0 0.0
        %2137 = vmatpush2.msra.mxu0 0.0
        %2138 = vmatprep.subr.mxu0 0.0
        %2139 = vmatpush2.msra.mxu0 0.0
        %2140 = vmatprep.subr.mxu0 0.0
        %2141 = vmatpush2.msra.mxu0 0.0
        %2142 = vmatprep.subr.mxu0 0.0
        %2143 = vmatpush2.msra.mxu0 0.0
        %2144 = vmatprep.subr.mxu0 0.0
        %2145 = vmatpush2.msra.mxu0 0.0
        %2146 = vmatprep.subr.mxu0 0.0
        %2147 = vmatpush2.msra.mxu0 0.0
        %2148 = vmatprep.subr.mxu0 0.0
        %2149 = vmatpush2.msra.mxu0 0.0
        %2150 = vmatprep.subr.mxu0 0.0
        %2151 = vmatpush2.msra.mxu0 0.0
        %2152 = vmatprep.mubr.f32.mxu0 0.0
        %2153 = vmatmul.mubr.f32.gmra.mxu0 %v2083
        %v2154 = vpop.f32.mrf.mxu0
        %v2155 = vadd.f32 0.0, %v2154
        %v2156 = vpop.f32.mrf.mxu0
        %2157 = vmatprep.mubr.f32.mxu0 0.0
        %2158 = vmatmul.mubr.f32.gmra.mxu0 %v2086
        %v2159 = vpop.f32.mrf.mxu0
        %v2160 = vadd.f32 0.0, %v2159
        %v2161 = vpop.f32.mrf.mxu0
        %2162 = vdwg.mxu0
        %v2164 = vsel %vm2081, %v2033, 0
        %v2167 = vsel %vm2081, %v2034, 0
        %2169 = vmatprep.subr.mxu0 0.0
        %2170 = vmatpush1.msra.mxu0 0.0
        %2171 = vmatprep.subr.mxu0 0.0
        %2172 = vmatpush1.msra.mxu0 0.0
        %2173 = vmatprep.subr.mxu0 0.0
        %2174 = vmatpush1.msra.mxu0 0.0
        %2175 = vmatprep.subr.mxu0 0.0
        %2176 = vmatpush1.msra.mxu0 0.0
        %2177 = vmatprep.subr.mxu0 0.0
        %2178 = vmatpush1.msra.mxu0 0.0
        %2179 = vmatprep.subr.mxu0 0.0
        %2180 = vmatpush1.msra.mxu0 0.0
        %2181 = vmatprep.subr.mxu0 0.0
        %2182 = vmatpush1.msra.mxu0 0.0
        %2183 = vmatprep.subr.mxu0 0.0
        %2184 = vmatpush1.msra.mxu0 0.0
        %2185 = vmatprep.subr.mxu0 0.0
        %2186 = vmatpush1.msra.mxu0 0.0
        %2187 = vmatprep.subr.mxu0 0.0
        %2188 = vmatpush1.msra.mxu0 0.0
        %2189 = vmatprep.subr.mxu0 0.0
        %2190 = vmatpush1.msra.mxu0 0.0
        %2191 = vmatprep.subr.mxu0 0.0
        %2192 = vmatpush1.msra.mxu0 0.0
        %2193 = vmatprep.subr.mxu0 0.0
        %2194 = vmatpush1.msra.mxu0 0.0
        %2195 = vmatprep.subr.mxu0 0.0
        %2196 = vmatpush1.msra.mxu0 0.0
        %2197 = vmatprep.subr.mxu0 0.0
        %2198 = vmatpush1.msra.mxu0 %v2078
        %2199 = vmatprep.subr.mxu0 0.0
        %2200 = vmatpush1.msra.mxu0 %v2077
        %2201 = vmatprep.subr.mxu0 0.0
        %2202 = vmatpush2.msra.mxu0 0.0
        %2203 = vmatprep.subr.mxu0 0.0
        %2204 = vmatpush2.msra.mxu0 0.0
        %2205 = vmatprep.subr.mxu0 0.0
        %2206 = vmatpush2.msra.mxu0 0.0
        %2207 = vmatprep.subr.mxu0 0.0
        %2208 = vmatpush2.msra.mxu0 0.0
        %2209 = vmatprep.subr.mxu0 0.0
        %2210 = vmatpush2.msra.mxu0 0.0
        %2211 = vmatprep.subr.mxu0 0.0
        %2212 = vmatpush2.msra.mxu0 0.0
        %2213 = vmatprep.subr.mxu0 0.0
        %2214 = vmatpush2.msra.mxu0 0.0
        %2215 = vmatprep.subr.mxu0 0.0
        %2216 = vmatpush2.msra.mxu0 0.0
        %2217 = vmatprep.subr.mxu0 0.0
        %2218 = vmatpush2.msra.mxu0 0.0
        %2219 = vmatprep.subr.mxu0 0.0
        %2220 = vmatpush2.msra.mxu0 0.0
        %2221 = vmatprep.subr.mxu0 0.0
        %2222 = vmatpush2.msra.mxu0 0.0
        %2223 = vmatprep.subr.mxu0 0.0
        %2224 = vmatpush2.msra.mxu0 0.0
        %2225 = vmatprep.subr.mxu0 0.0
        %2226 = vmatpush2.msra.mxu0 0.0
        %2227 = vmatprep.subr.mxu0 0.0
        %2228 = vmatpush2.msra.mxu0 0.0
        %2229 = vmatprep.subr.mxu0 0.0
        %2230 = vmatpush2.msra.mxu0 0.0
        %2231 = vmatprep.subr.mxu0 0.0
        %2232 = vmatpush2.msra.mxu0 0.0
        %2233 = vmatprep.mubr.f32.mxu0 0.0
        %2234 = vmatmul.mubr.f32.gmra.mxu0 %v2164
        %v2235 = vpop.f32.mrf.mxu0
        %v2236 = vadd.f32 %v2155, %v2235
        %v2237 = vpop.f32.mrf.mxu0
        %2238 = vmatprep.mubr.f32.mxu0 0.0
        %2239 = vmatmul.mubr.f32.gmra.mxu0 %v2167
        %v2240 = vpop.f32.mrf.mxu0
        %v2241 = vadd.f32 %v2160, %v2240
        %v2242 = vpop.f32.mrf.mxu0
        %2243 = vdwg.mxu0
        %v2245 = vsel %vm2081, %v2075, 0
        %v2248 = vsel %vm2081, %v2076, 0
        %2250 = vmatprep.subr.mxu0 0.0
        %2251 = vmatpush1.msra.mxu0 0.0
        %2252 = vmatprep.subr.mxu0 0.0
        %2253 = vmatpush1.msra.mxu0 0.0
        %2254 = vmatprep.subr.mxu0 0.0
        %2255 = vmatpush1.msra.mxu0 0.0
        %2256 = vmatprep.subr.mxu0 0.0
        %2257 = vmatpush1.msra.mxu0 0.0
        %2258 = vmatprep.subr.mxu0 0.0
        %2259 = vmatpush1.msra.mxu0 0.0
        %2260 = vmatprep.subr.mxu0 0.0
        %2261 = vmatpush1.msra.mxu0 0.0
        %2262 = vmatprep.subr.mxu0 0.0
        %2263 = vmatpush1.msra.mxu0 0.0
        %2264 = vmatprep.subr.mxu0 0.0
        %2265 = vmatpush1.msra.mxu0 0.0
        %2266 = vmatprep.subr.mxu0 0.0
        %2267 = vmatpush1.msra.mxu0 0.0
        %2268 = vmatprep.subr.mxu0 0.0
        %2269 = vmatpush1.msra.mxu0 0.0
        %2270 = vmatprep.subr.mxu0 0.0
        %2271 = vmatpush1.msra.mxu0 0.0
        %2272 = vmatprep.subr.mxu0 0.0
        %2273 = vmatpush1.msra.mxu0 0.0
        %2274 = vmatprep.subr.mxu0 0.0
        %2275 = vmatpush1.msra.mxu0 0.0
        %2276 = vmatprep.subr.mxu0 0.0
        %2277 = vmatpush1.msra.mxu0 0.0
        %2278 = vmatprep.subr.mxu0 0.0
        %2279 = vmatpush1.msra.mxu0 %v2080
        %2280 = vmatprep.subr.mxu0 0.0
        %2281 = vmatpush1.msra.mxu0 %v2079
        %2282 = vmatprep.subr.mxu0 0.0
        %2283 = vmatpush2.msra.mxu0 0.0
        %2284 = vmatprep.subr.mxu0 0.0
        %2285 = vmatpush2.msra.mxu0 0.0
        %2286 = vmatprep.subr.mxu0 0.0
        %2287 = vmatpush2.msra.mxu0 0.0
        %2288 = vmatprep.subr.mxu0 0.0
        %2289 = vmatpush2.msra.mxu0 0.0
        %2290 = vmatprep.subr.mxu0 0.0
        %2291 = vmatpush2.msra.mxu0 0.0
        %2292 = vmatprep.subr.mxu0 0.0
        %2293 = vmatpush2.msra.mxu0 0.0
        %2294 = vmatprep.subr.mxu0 0.0
        %2295 = vmatpush2.msra.mxu0 0.0
        %2296 = vmatprep.subr.mxu0 0.0
        %2297 = vmatpush2.msra.mxu0 0.0
        %2298 = vmatprep.subr.mxu0 0.0
        %2299 = vmatpush2.msra.mxu0 0.0
        %2300 = vmatprep.subr.mxu0 0.0
        %2301 = vmatpush2.msra.mxu0 0.0
        %2302 = vmatprep.subr.mxu0 0.0
        %2303 = vmatpush2.msra.mxu0 0.0
        %2304 = vmatprep.subr.mxu0 0.0
        %2305 = vmatpush2.msra.mxu0 0.0
        %2306 = vmatprep.subr.mxu0 0.0
        %2307 = vmatpush2.msra.mxu0 0.0
        %2308 = vmatprep.subr.mxu0 0.0
        %2309 = vmatpush2.msra.mxu0 0.0
        %2310 = vmatprep.subr.mxu0 0.0
        %2311 = vmatpush2.msra.mxu0 0.0
        %2312 = vmatprep.subr.mxu0 0.0
        %2313 = vmatpush2.msra.mxu0 0.0
        %2314 = vmatprep.mubr.f32.mxu0 0.0
        %2315 = vmatmul.mubr.f32.gmra.mxu0 %v2245
        %v2316 = vpop.f32.mrf.mxu0
        %v2317 = vadd.f32 0.0, %v2316
        %v2318 = vpop.f32.mrf.mxu0
        %2319 = vmatprep.mubr.f32.mxu0 0.0
        %2320 = vmatmul.mubr.f32.gmra.mxu0 %v2248
        %v2321 = vpop.f32.mrf.mxu0
        %v2322 = vadd.f32 0.0, %v2321
        %v2323 = vpop.f32.mrf.mxu0
        %2324 = vdwg.mxu0
        %v2326 = vsel %vm2081, %v2061, 0
        %v2329 = vsel %vm2081, %v2062, 0
        %2331 = vmatprep.subr.mxu0 0.0
        %2332 = vmatpush1.msra.mxu0 0.0
        %2333 = vmatprep.subr.mxu0 0.0
        %2334 = vmatpush1.msra.mxu0 0.0
        %2335 = vmatprep.subr.mxu0 0.0
        %2336 = vmatpush1.msra.mxu0 0.0
        %2337 = vmatprep.subr.mxu0 0.0
        %2338 = vmatpush1.msra.mxu0 0.0
        %2339 = vmatprep.subr.mxu0 0.0
        %2340 = vmatpush1.msra.mxu0 0.0
        %2341 = vmatprep.subr.mxu0 0.0
        %2342 = vmatpush1.msra.mxu0 0.0
        %2343 = vmatprep.subr.mxu0 0.0
        %2344 = vmatpush1.msra.mxu0 0.0
        %2345 = vmatprep.subr.mxu0 0.0
        %2346 = vmatpush1.msra.mxu0 0.0
        %2347 = vmatprep.subr.mxu0 0.0
        %2348 = vmatpush1.msra.mxu0 0.0
        %2349 = vmatprep.subr.mxu0 0.0
        %2350 = vmatpush1.msra.mxu0 0.0
        %2351 = vmatprep.subr.mxu0 0.0
        %2352 = vmatpush1.msra.mxu0 0.0
        %2353 = vmatprep.subr.mxu0 0.0
        %2354 = vmatpush1.msra.mxu0 0.0
        %2355 = vmatprep.subr.mxu0 0.0
        %2356 = vmatpush1.msra.mxu0 0.0
        %2357 = vmatprep.subr.mxu0 0.0
        %2358 = vmatpush1.msra.mxu0 0.0
        %2359 = vmatprep.subr.mxu0 0.0
        %2360 = vmatpush1.msra.mxu0 %v2078
        %2361 = vmatprep.subr.mxu0 0.0
        %2362 = vmatpush1.msra.mxu0 %v2077
        %2363 = vmatprep.subr.mxu0 0.0
        %2364 = vmatpush2.msra.mxu0 0.0
        %2365 = vmatprep.subr.mxu0 0.0
        %2366 = vmatpush2.msra.mxu0 0.0
        %2367 = vmatprep.subr.mxu0 0.0
        %2368 = vmatpush2.msra.mxu0 0.0
        %2369 = vmatprep.subr.mxu0 0.0
        %2370 = vmatpush2.msra.mxu0 0.0
        %2371 = vmatprep.subr.mxu0 0.0
        %2372 = vmatpush2.msra.mxu0 0.0
        %2373 = vmatprep.subr.mxu0 0.0
        %2374 = vmatpush2.msra.mxu0 0.0
        %2375 = vmatprep.subr.mxu0 0.0
        %2376 = vmatpush2.msra.mxu0 0.0
        %2377 = vmatprep.subr.mxu0 0.0
        %2378 = vmatpush2.msra.mxu0 0.0
        %2379 = vmatprep.subr.mxu0 0.0
        %2380 = vmatpush2.msra.mxu0 0.0
        %2381 = vmatprep.subr.mxu0 0.0
        %2382 = vmatpush2.msra.mxu0 0.0
        %2383 = vmatprep.subr.mxu0 0.0
        %2384 = vmatpush2.msra.mxu0 0.0
        %2385 = vmatprep.subr.mxu0 0.0
        %2386 = vmatpush2.msra.mxu0 0.0
        %2387 = vmatprep.subr.mxu0 0.0
        %2388 = vmatpush2.msra.mxu0 0.0
        %2389 = vmatprep.subr.mxu0 0.0
        %2390 = vmatpush2.msra.mxu0 0.0
        %2391 = vmatprep.subr.mxu0 0.0
        %2392 = vmatpush2.msra.mxu0 0.0
        %2393 = vmatprep.subr.mxu0 0.0
        %2394 = vmatpush2.msra.mxu0 0.0
        %2395 = vmatprep.mubr.f32.mxu0 0.0
        %2396 = vmatmul.mubr.f32.gmra.mxu0 %v2326
        %v2397 = vpop.f32.mrf.mxu0
        %v2398 = vadd.f32 %v2317, %v2397
        %v2399 = vpop.f32.mrf.mxu0
        %2400 = vmatprep.mubr.f32.mxu0 0.0
        %2401 = vmatmul.mubr.f32.gmra.mxu0 %v2329
        %v2402 = vpop.f32.mrf.mxu0
        %v2403 = vadd.f32 %v2322, %v2402
        %v2404 = vpop.f32.mrf.mxu0
        %2405 = vdwg.mxu0
        %v2408 = vcombine.high %v2236, %v2236
        %v2410 = vunpack.c.l.s4 1966171168
        %v2411 = vunpack.c.0.s8 %v2410
        %v2412 = vlaneseq
        %v2413 = vshrl.u32 %v2412, 7
        %v2414 = vsub.s32 %v2411, %v2413
        %v2415 = vrot.slane %v2236, %v2414
        %v2417 = vunpack.c.l.s4 1966171168
        %v2418 = vunpack.c.0.s8 %v2417
        %v2419 = vlaneseq
        %v2420 = vshrl.u32 %v2419, 7
        %v2421 = vsub.s32 %v2418, %v2420
        %v2422 = vrot.slane %v2408, %v2421
        %v2423 = vcombine.high %v2415, %v2415
        %v2424 = vcombine.high %v2422, %v2422
        %v2426 = vunpack.c.l.s4 1966171168
        %v2427 = vunpack.c.0.s8 %v2426
        %v2428 = vlaneseq
        %v2429 = vshrl.u32 %v2428, 7
        %v2430 = vsub.s32 %v2427, %v2429
        %v2431 = vrot.slane %v2415, %v2430
        %v2433 = vunpack.c.l.s4 1966171168
        %v2434 = vunpack.c.0.s8 %v2433
        %v2435 = vlaneseq
        %v2436 = vshrl.u32 %v2435, 7
        %v2437 = vsub.s32 %v2434, %v2436
        %v2438 = vrot.slane %v2422, %v2437
        %v2440 = vunpack.c.l.s4 1966171168
        %v2441 = vunpack.c.0.s8 %v2440
        %v2442 = vlaneseq
        %v2443 = vshrl.u32 %v2442, 7
        %v2444 = vsub.s32 %v2441, %v2443
        %v2445 = vrot.slane %v2423, %v2444
        %v2447 = vunpack.c.l.s4 1966171168
        %v2448 = vunpack.c.0.s8 %v2447
        %v2449 = vlaneseq
        %v2450 = vshrl.u32 %v2449, 7
        %v2451 = vsub.s32 %v2448, %v2450
        %v2452 = vrot.slane %v2424, %v2451
        %v2453 = vcombine.high %v2431, %v2431
        %v2454 = vcombine.high %v2438, %v2438
        %v2455 = vcombine.high %v2445, %v2445
        %v2456 = vcombine.high %v2452, %v2452
        %v2457 = vcombine.high %v2241, %v2241
        %v2459 = vunpack.c.l.s4 1966171168
        %v2460 = vunpack.c.0.s8 %v2459
        %v2461 = vlaneseq
        %v2462 = vshrl.u32 %v2461, 7
        %v2463 = vsub.s32 %v2460, %v2462
        %v2464 = vrot.slane %v2241, %v2463
        %v2466 = vunpack.c.l.s4 1966171168
        %v2467 = vunpack.c.0.s8 %v2466
        %v2468 = vlaneseq
        %v2469 = vshrl.u32 %v2468, 7
        %v2470 = vsub.s32 %v2467, %v2469
        %v2471 = vrot.slane %v2457, %v2470
        %v2472 = vcombine.high %v2464, %v2464
        %v2473 = vcombine.high %v2471, %v2471
        %v2475 = vunpack.c.l.s4 1966171168
        %v2476 = vunpack.c.0.s8 %v2475
        %v2477 = vlaneseq
        %v2478 = vshrl.u32 %v2477, 7
        %v2479 = vsub.s32 %v2476, %v2478
        %v2480 = vrot.slane %v2464, %v2479
        %v2482 = vunpack.c.l.s4 1966171168
        %v2483 = vunpack.c.0.s8 %v2482
        %v2484 = vlaneseq
        %v2485 = vshrl.u32 %v2484, 7
        %v2486 = vsub.s32 %v2483, %v2485
        %v2487 = vrot.slane %v2471, %v2486
        %v2489 = vunpack.c.l.s4 1966171168
        %v2490 = vunpack.c.0.s8 %v2489
        %v2491 = vlaneseq
        %v2492 = vshrl.u32 %v2491, 7
        %v2493 = vsub.s32 %v2490, %v2492
        %v2494 = vrot.slane %v2472, %v2493
        %v2496 = vunpack.c.l.s4 1966171168
        %v2497 = vunpack.c.0.s8 %v2496
        %v2498 = vlaneseq
        %v2499 = vshrl.u32 %v2498, 7
        %v2500 = vsub.s32 %v2497, %v2499
        %v2501 = vrot.slane %v2473, %v2500
        %v2502 = vcombine.high %v2480, %v2480
        %v2503 = vcombine.high %v2487, %v2487
        %v2504 = vcombine.high %v2494, %v2494
        %v2505 = vcombine.high %v2501, %v2501
        %vm2522 = vcmask 253952
        %2523 = vst.msk [vmem:[%s268] sm:$0x1] %vm2522, %v2431
        %2524 = vst.msk [vmem:[%s268 + $0x2] sm:$0x1] %vm2522, %v2445
        %2525 = vst.msk [vmem:[%s268 + $0x4] sm:$0x1] %vm2522, %v2453
        %2526 = vst.msk [vmem:[%s268 + $0x6] sm:$0x1] %vm2522, %v2455
        %2527 = vst.msk [vmem:[%s268 + $0x8] sm:$0x1] %vm2522, %v2438
        %2528 = vst.msk [vmem:[%s268 + $0xa] sm:$0x1] %vm2522, %v2452
        %2529 = vst.msk [vmem:[%s268 + $0xc] sm:$0x1] %vm2522, %v2454
        %2530 = vst.msk [vmem:[%s268 + $0xe] sm:$0x1] %vm2522, %v2456
        %2531 = vst.msk [vmem:[%s268 + $0x10] sm:$0x1] %vm2522, %v2480
        %2532 = vst.msk [vmem:[%s268 + $0x12] sm:$0x1] %vm2522, %v2494
        %2533 = vst.msk [vmem:[%s268 + $0x14] sm:$0x1] %vm2522, %v2502
        %2534 = vst.msk [vmem:[%s268 + $0x16] sm:$0x1] %vm2522, %v2504
        %2535 = vst.msk [vmem:[%s268 + $0x18] sm:$0x1] %vm2522, %v2487
        %2536 = vst.msk [vmem:[%s268 + $0x1a] sm:$0x1] %vm2522, %v2501
        %2537 = vst.msk [vmem:[%s268 + $0x1c] sm:$0x1] %vm2522, %v2503
        %2538 = vst.msk [vmem:[%s268 + $0x1e] sm:$0x1] %vm2522, %v2505
        %v2541 = vcombine.high %v2398, %v2398
        %v2543 = vunpack.c.l.s4 1966171168
        %v2544 = vunpack.c.0.s8 %v2543
        %v2545 = vlaneseq
        %v2546 = vshrl.u32 %v2545, 7
        %v2547 = vsub.s32 %v2544, %v2546
        %v2548 = vrot.slane %v2398, %v2547
        %v2550 = vunpack.c.l.s4 1966171168
        %v2551 = vunpack.c.0.s8 %v2550
        %v2552 = vlaneseq
        %v2553 = vshrl.u32 %v2552, 7
        %v2554 = vsub.s32 %v2551, %v2553
        %v2555 = vrot.slane %v2541, %v2554
        %v2556 = vcombine.high %v2548, %v2548
        %v2557 = vcombine.high %v2555, %v2555
        %v2559 = vunpack.c.l.s4 1966171168
        %v2560 = vunpack.c.0.s8 %v2559
        %v2561 = vlaneseq
        %v2562 = vshrl.u32 %v2561, 7
        %v2563 = vsub.s32 %v2560, %v2562
        %v2564 = vrot.slane %v2548, %v2563
        %v2566 = vunpack.c.l.s4 1966171168
        %v2567 = vunpack.c.0.s8 %v2566
        %v2568 = vlaneseq
        %v2569 = vshrl.u32 %v2568, 7
        %v2570 = vsub.s32 %v2567, %v2569
        %v2571 = vrot.slane %v2555, %v2570
        %v2573 = vunpack.c.l.s4 1966171168
        %v2574 = vunpack.c.0.s8 %v2573
        %v2575 = vlaneseq
        %v2576 = vshrl.u32 %v2575, 7
        %v2577 = vsub.s32 %v2574, %v2576
        %v2578 = vrot.slane %v2556, %v2577
        %v2580 = vunpack.c.l.s4 1966171168
        %v2581 = vunpack.c.0.s8 %v2580
        %v2582 = vlaneseq
        %v2583 = vshrl.u32 %v2582, 7
        %v2584 = vsub.s32 %v2581, %v2583
        %v2585 = vrot.slane %v2557, %v2584
        %v2586 = vcombine.high %v2564, %v2564
        %v2587 = vcombine.high %v2571, %v2571
        %v2588 = vcombine.high %v2578, %v2578
        %v2589 = vcombine.high %v2585, %v2585
        %v2590 = vcombine.high %v2403, %v2403
        %v2592 = vunpack.c.l.s4 1966171168
        %v2593 = vunpack.c.0.s8 %v2592
        %v2594 = vlaneseq
        %v2595 = vshrl.u32 %v2594, 7
        %v2596 = vsub.s32 %v2593, %v2595
        %v2597 = vrot.slane %v2403, %v2596
        %v2599 = vunpack.c.l.s4 1966171168
        %v2600 = vunpack.c.0.s8 %v2599
        %v2601 = vlaneseq
        %v2602 = vshrl.u32 %v2601, 7
        %v2603 = vsub.s32 %v2600, %v2602
        %v2604 = vrot.slane %v2590, %v2603
        %v2605 = vcombine.high %v2597, %v2597
        %v2606 = vcombine.high %v2604, %v2604
        %v2608 = vunpack.c.l.s4 1966171168
        %v2609 = vunpack.c.0.s8 %v2608
        %v2610 = vlaneseq
        %v2611 = vshrl.u32 %v2610, 7
        %v2612 = vsub.s32 %v2609, %v2611
        %v2613 = vrot.slane %v2597, %v2612
        %v2615 = vunpack.c.l.s4 1966171168
        %v2616 = vunpack.c.0.s8 %v2615
        %v2617 = vlaneseq
        %v2618 = vshrl.u32 %v2617, 7
        %v2619 = vsub.s32 %v2616, %v2618
        %v2620 = vrot.slane %v2604, %v2619
        %v2622 = vunpack.c.l.s4 1966171168
        %v2623 = vunpack.c.0.s8 %v2622
        %v2624 = vlaneseq
        %v2625 = vshrl.u32 %v2624, 7
        %v2626 = vsub.s32 %v2623, %v2625
        %v2627 = vrot.slane %v2605, %v2626
        %v2629 = vunpack.c.l.s4 1966171168
        %v2630 = vunpack.c.0.s8 %v2629
        %v2631 = vlaneseq
        %v2632 = vshrl.u32 %v2631, 7
        %v2633 = vsub.s32 %v2630, %v2632
        %v2634 = vrot.slane %v2606, %v2633
        %v2635 = vcombine.high %v2613, %v2613
        %v2636 = vcombine.high %v2620, %v2620
        %v2637 = vcombine.high %v2627, %v2627
        %v2638 = vcombine.high %v2634, %v2634
        %2655 = vst.msk [vmem:[%s268 + $0x1] sm:$0x1] %vm2522, %v2564
        %2656 = vst.msk [vmem:[%s268 + $0x3] sm:$0x1] %vm2522, %v2578
        %2657 = vst.msk [vmem:[%s268 + $0x5] sm:$0x1] %vm2522, %v2586
        %2658 = vst.msk [vmem:[%s268 + $0x7] sm:$0x1] %vm2522, %v2588
        %2659 = vst.msk [vmem:[%s268 + $0x9] sm:$0x1] %vm2522, %v2571
        %2660 = vst.msk [vmem:[%s268 + $0xb] sm:$0x1] %vm2522, %v2585
        %2661 = vst.msk [vmem:[%s268 + $0xd] sm:$0x1] %vm2522, %v2587
        %2662 = vst.msk [vmem:[%s268 + $0xf] sm:$0x1] %vm2522, %v2589
        %2663 = vst.msk [vmem:[%s268 + $0x11] sm:$0x1] %vm2522, %v2613
        %2664 = vst.msk [vmem:[%s268 + $0x13] sm:$0x1] %vm2522, %v2627
        %2665 = vst.msk [vmem:[%s268 + $0x15] sm:$0x1] %vm2522, %v2635
        %2666 = vst.msk [vmem:[%s268 + $0x17] sm:$0x1] %vm2522, %v2637
        %2667 = vst.msk [vmem:[%s268 + $0x19] sm:$0x1] %vm2522, %v2620
        %2668 = vst.msk [vmem:[%s268 + $0x1b] sm:$0x1] %vm2522, %v2634
        %2669 = vst.msk [vmem:[%s268 + $0x1d] sm:$0x1] %vm2522, %v2636
        %2670 = vst.msk [vmem:[%s268 + $0x1f] sm:$0x1] %vm2522, %v2638
        %v2671 = vld [vmem:[#allocation2] sm:$0xff]
        %v2672 = vld [vmem:[#allocation2 + $0x8] sm:$0xff]
        %s2673 = sld [smem:[#allocation3 + $0x90]]
        %v2674 = vstv %s2673
        %v2675 = vmul.f32 %v2674, %v2671
        %v2676 = vmul.f32 %v2674, %v2672
        %v2677 = vadd.f32 %v2675, 0.0
        %v2678 = vadd.f32 %v2676, 0.0
        %s2679 = sld [smem:[#allocation3 + $0xb4]]
        %v2680 = vstv %s2679
        %v2681 = vmul.f32 %v2680, %v2671
        %v2682 = vmul.f32 %v2680, %v2672
        %v2683 = vadd.f32 %v2681, 0.0
        %v2684 = vadd.f32 %v2682, 0.0
        %s2685 = sld [smem:[#allocation3 + $0xd8]]
        %v2686 = vstv %s2685
        %v2687 = vmul.f32 %v2686, %v2671
        %v2688 = vmul.f32 %v2686, %v2672
        %v2689 = vadd.f32 %v2687, 0.0
        %v2690 = vadd.f32 %v2688, 0.0
        %s2691 = sld [smem:[#allocation3 + $0xfc]]
        %v2692 = vstv %s2691
        %v2693 = vmul.f32 %v2692, %v2671
        %v2694 = vmul.f32 %v2692, %v2672
        %v2695 = vadd.f32 %v2693, 0.0
        %v2696 = vadd.f32 %v2694, 0.0
        %s2697 = sld [smem:[#allocation3 + $0x91]]
        %v2698 = vstv %s2697
        %v2699 = vmul.f32 %v2698, %v2671
        %v2700 = vmul.f32 %v2698, %v2672
        %2703 = vrot.lane.b32.xlu0 %v2699, 127
        %v2704 = vpop.permute.xlu0 %2703
        %2705 = vrot.lane.b32.xlu0 %v2700, 127
        %v2706 = vpop.permute.xlu0 %2705
        %v2709 = vadd.f32 %v2677, %v2704
        %v2710 = vadd.f32 %v2678, %v2706
        %s2711 = sld [smem:[#allocation3 + $0xb5]]
        %v2712 = vstv %s2711
        %v2713 = vmul.f32 %v2712, %v2671
        %v2714 = vmul.f32 %v2712, %v2672
        %2717 = vrot.lane.b32.xlu0 %v2713, 127
        %v2718 = vpop.permute.xlu0 %2717
        %2719 = vrot.lane.b32.xlu0 %v2714, 127
        %v2720 = vpop.permute.xlu0 %2719
        %v2723 = vadd.f32 %v2683, %v2718
        %v2724 = vadd.f32 %v2684, %v2720
        %s2725 = sld [smem:[#allocation3 + $0xd9]]
        %v2726 = vstv %s2725
        %v2727 = vmul.f32 %v2726, %v2671
        %v2728 = vmul.f32 %v2726, %v2672
        %2731 = vrot.lane.b32.xlu0 %v2727, 127
        %v2732 = vpop.permute.xlu0 %2731
        %2733 = vrot.lane.b32.xlu0 %v2728, 127
        %v2734 = vpop.permute.xlu0 %2733
        %v2737 = vadd.f32 %v2689, %v2732
        %v2738 = vadd.f32 %v2690, %v2734
        %s2739 = sld [smem:[#allocation3 + $0xfd]]
        %v2740 = vstv %s2739
        %v2741 = vmul.f32 %v2740, %v2671
        %v2742 = vmul.f32 %v2740, %v2672
        %2745 = vrot.lane.b32.xlu0 %v2741, 127
        %v2746 = vpop.permute.xlu0 %2745
        %2747 = vrot.lane.b32.xlu0 %v2742, 127
        %v2748 = vpop.permute.xlu0 %2747
        %v2751 = vadd.f32 %v2695, %v2746
        %v2752 = vadd.f32 %v2696, %v2748
        %s2753 = sld [smem:[#allocation3 + $0x92]]
        %v2754 = vstv %s2753
        %v2755 = vmul.f32 %v2754, %v2671
        %v2756 = vmul.f32 %v2754, %v2672
        %2759 = vrot.lane.b32.xlu0 %v2755, 126
        %v2760 = vpop.permute.xlu0 %2759
        %2761 = vrot.lane.b32.xlu0 %v2756, 126
        %v2762 = vpop.permute.xlu0 %2761
        %v2765 = vadd.f32 %v2709, %v2760
        %v2766 = vadd.f32 %v2710, %v2762
        %s2767 = sld [smem:[#allocation3 + $0xb6]]
        %v2768 = vstv %s2767
        %v2769 = vmul.f32 %v2768, %v2671
        %v2770 = vmul.f32 %v2768, %v2672
        %2773 = vrot.lane.b32.xlu0 %v2769, 126
        %v2774 = vpop.permute.xlu0 %2773
        %2775 = vrot.lane.b32.xlu0 %v2770, 126
        %v2776 = vpop.permute.xlu0 %2775
        %v2779 = vadd.f32 %v2723, %v2774
        %v2780 = vadd.f32 %v2724, %v2776
        %s2781 = sld [smem:[#allocation3 + $0xda]]
        %v2782 = vstv %s2781
        %v2783 = vmul.f32 %v2782, %v2671
        %v2784 = vmul.f32 %v2782, %v2672
        %2787 = vrot.lane.b32.xlu0 %v2783, 126
        %v2788 = vpop.permute.xlu0 %2787
        %2789 = vrot.lane.b32.xlu0 %v2784, 126
        %v2790 = vpop.permute.xlu0 %2789
        %v2793 = vadd.f32 %v2737, %v2788
        %v2794 = vadd.f32 %v2738, %v2790
        %s2795 = sld [smem:[#allocation3 + $0xfe]]
        %v2796 = vstv %s2795
        %v2797 = vmul.f32 %v2796, %v2671
        %v2798 = vmul.f32 %v2796, %v2672
        %2801 = vrot.lane.b32.xlu0 %v2797, 126
        %v2802 = vpop.permute.xlu0 %2801
        %2803 = vrot.lane.b32.xlu0 %v2798, 126
        %v2804 = vpop.permute.xlu0 %2803
        %v2807 = vadd.f32 %v2751, %v2802
        %v2808 = vadd.f32 %v2752, %v2804
        %v2809 = vld [vmem:[#allocation2 + $0x1] sm:$0xff]
        %v2810 = vld [vmem:[#allocation2 + $0x9] sm:$0xff]
        %s2811 = sld [smem:[#allocation3 + $0x93]]
        %v2812 = vstv %s2811
        %v2813 = vmul.f32 %v2812, %v2809
        %v2814 = vmul.f32 %v2812, %v2810
        %v2815 = vadd.f32 %v2765, %v2813
        %v2816 = vadd.f32 %v2766, %v2814
        %s2817 = sld [smem:[#allocation3 + $0xb7]]
        %v2818 = vstv %s2817
        %v2819 = vmul.f32 %v2818, %v2809
        %v2820 = vmul.f32 %v2818, %v2810
        %v2821 = vadd.f32 %v2779, %v2819
        %v2822 = vadd.f32 %v2780, %v2820
        %s2823 = sld [smem:[#allocation3 + $0xdb]]
        %v2824 = vstv %s2823
        %v2825 = vmul.f32 %v2824, %v2809
        %v2826 = vmul.f32 %v2824, %v2810
        %v2827 = vadd.f32 %v2793, %v2825
        %v2828 = vadd.f32 %v2794, %v2826
        %s2829 = sld [smem:[#allocation3 + $0xff]]
        %v2830 = vstv %s2829
        %v2831 = vmul.f32 %v2830, %v2809
        %v2832 = vmul.f32 %v2830, %v2810
        %v2833 = vadd.f32 %v2807, %v2831
        %v2834 = vadd.f32 %v2808, %v2832
        %s2835 = sld [smem:[#allocation3 + $0x94]]
        %v2836 = vstv %s2835
        %v2837 = vmul.f32 %v2836, %v2809
        %v2838 = vmul.f32 %v2836, %v2810
        %2841 = vrot.lane.b32.xlu0 %v2837, 127
        %v2842 = vpop.permute.xlu0 %2841
        %2843 = vrot.lane.b32.xlu0 %v2838, 127
        %v2844 = vpop.permute.xlu0 %2843
        %v2847 = vadd.f32 %v2815, %v2842
        %v2848 = vadd.f32 %v2816, %v2844
        %s2849 = sld [smem:[#allocation3 + $0xb8]]
        %v2850 = vstv %s2849
        %v2851 = vmul.f32 %v2850, %v2809
        %v2852 = vmul.f32 %v2850, %v2810
        %2855 = vrot.lane.b32.xlu0 %v2851, 127
        %v2856 = vpop.permute.xlu0 %2855
        %2857 = vrot.lane.b32.xlu0 %v2852, 127
        %v2858 = vpop.permute.xlu0 %2857
        %v2861 = vadd.f32 %v2821, %v2856
        %v2862 = vadd.f32 %v2822, %v2858
        %s2863 = sld [smem:[#allocation3 + $0xdc]]
        %v2864 = vstv %s2863
        %v2865 = vmul.f32 %v2864, %v2809
        %v2866 = vmul.f32 %v2864, %v2810
        %2869 = vrot.lane.b32.xlu0 %v2865, 127
        %v2870 = vpop.permute.xlu0 %2869
        %2871 = vrot.lane.b32.xlu0 %v2866, 127
        %v2872 = vpop.permute.xlu0 %2871
        %v2875 = vadd.f32 %v2827, %v2870
        %v2876 = vadd.f32 %v2828, %v2872
        %s2877 = sld [smem:[#allocation3 + $0x100]]
        %v2878 = vstv %s2877
        %v2879 = vmul.f32 %v2878, %v2809
        %v2880 = vmul.f32 %v2878, %v2810
        %2883 = vrot.lane.b32.xlu0 %v2879, 127
        %v2884 = vpop.permute.xlu0 %2883
        %2885 = vrot.lane.b32.xlu0 %v2880, 127
        %v2886 = vpop.permute.xlu0 %2885
        %v2889 = vadd.f32 %v2833, %v2884
        %v2890 = vadd.f32 %v2834, %v2886
        %s2891 = sld [smem:[#allocation3 + $0x95]]
        %v2892 = vstv %s2891
        %v2893 = vmul.f32 %v2892, %v2809
        %v2894 = vmul.f32 %v2892, %v2810
        %2897 = vrot.lane.b32.xlu0 %v2893, 126
        %v2898 = vpop.permute.xlu0 %2897
        %2899 = vrot.lane.b32.xlu0 %v2894, 126
        %v2900 = vpop.permute.xlu0 %2899
        %v2903 = vadd.f32 %v2847, %v2898
        %v2904 = vadd.f32 %v2848, %v2900
        %s2905 = sld [smem:[#allocation3 + $0xb9]]
        %v2906 = vstv %s2905
        %v2907 = vmul.f32 %v2906, %v2809
        %v2908 = vmul.f32 %v2906, %v2810
        %2911 = vrot.lane.b32.xlu0 %v2907, 126
        %v2912 = vpop.permute.xlu0 %2911
        %2913 = vrot.lane.b32.xlu0 %v2908, 126
        %v2914 = vpop.permute.xlu0 %2913
        %v2917 = vadd.f32 %v2861, %v2912
        %v2918 = vadd.f32 %v2862, %v2914
        %s2919 = sld [smem:[#allocation3 + $0xdd]]
        %v2920 = vstv %s2919
        %v2921 = vmul.f32 %v2920, %v2809
        %v2922 = vmul.f32 %v2920, %v2810
        %2925 = vrot.lane.b32.xlu0 %v2921, 126
        %v2926 = vpop.permute.xlu0 %2925
        %2927 = vrot.lane.b32.xlu0 %v2922, 126
        %v2928 = vpop.permute.xlu0 %2927
        %v2931 = vadd.f32 %v2875, %v2926
        %v2932 = vadd.f32 %v2876, %v2928
        %s2933 = sld [smem:[#allocation3 + $0x101]]
        %v2934 = vstv %s2933
        %v2935 = vmul.f32 %v2934, %v2809
        %v2936 = vmul.f32 %v2934, %v2810
        %2939 = vrot.lane.b32.xlu0 %v2935, 126
        %v2940 = vpop.permute.xlu0 %2939
        %2941 = vrot.lane.b32.xlu0 %v2936, 126
        %v2942 = vpop.permute.xlu0 %2941
        %v2945 = vadd.f32 %v2889, %v2940
        %v2946 = vadd.f32 %v2890, %v2942
        %v2947 = vld [vmem:[#allocation2 + $0x2] sm:$0xff]
        %v2948 = vld [vmem:[#allocation2 + $0xa] sm:$0xff]
        %s2949 = sld [smem:[#allocation3 + $0x96]]
        %v2950 = vstv %s2949
        %v2951 = vmul.f32 %v2950, %v2947
        %v2952 = vmul.f32 %v2950, %v2948
        %v2953 = vadd.f32 %v2903, %v2951
        %v2954 = vadd.f32 %v2904, %v2952
        %s2955 = sld [smem:[#allocation3 + $0xba]]
        %v2956 = vstv %s2955
        %v2957 = vmul.f32 %v2956, %v2947
        %v2958 = vmul.f32 %v2956, %v2948
        %v2959 = vadd.f32 %v2917, %v2957
        %v2960 = vadd.f32 %v2918, %v2958
        %s2961 = sld [smem:[#allocation3 + $0xde]]
        %v2962 = vstv %s2961
        %v2963 = vmul.f32 %v2962, %v2947
        %v2964 = vmul.f32 %v2962, %v2948
        %v2965 = vadd.f32 %v2931, %v2963
        %v2966 = vadd.f32 %v2932, %v2964
        %s2967 = sld [smem:[#allocation3 + $0x102]]
        %v2968 = vstv %s2967
        %v2969 = vmul.f32 %v2968, %v2947
        %v2970 = vmul.f32 %v2968, %v2948
        %v2971 = vadd.f32 %v2945, %v2969
        %v2972 = vadd.f32 %v2946, %v2970
        %s2973 = sld [smem:[#allocation3 + $0x97]]
        %v2974 = vstv %s2973
        %v2975 = vmul.f32 %v2974, %v2947
        %v2976 = vmul.f32 %v2974, %v2948
        %2979 = vrot.lane.b32.xlu0 %v2975, 127
        %v2980 = vpop.permute.xlu0 %2979
        %2981 = vrot.lane.b32.xlu0 %v2976, 127
        %v2982 = vpop.permute.xlu0 %2981
        %v2985 = vadd.f32 %v2953, %v2980
        %v2986 = vadd.f32 %v2954, %v2982
        %s2987 = sld [smem:[#allocation3 + $0xbb]]
        %v2988 = vstv %s2987
        %v2989 = vmul.f32 %v2988, %v2947
        %v2990 = vmul.f32 %v2988, %v2948
        %2993 = vrot.lane.b32.xlu0 %v2989, 127
        %v2994 = vpop.permute.xlu0 %2993
        %2995 = vrot.lane.b32.xlu0 %v2990, 127
        %v2996 = vpop.permute.xlu0 %2995
        %v2999 = vadd.f32 %v2959, %v2994
        %v3000 = vadd.f32 %v2960, %v2996
        %s3001 = sld [smem:[#allocation3 + $0xdf]]
        %v3002 = vstv %s3001
        %v3003 = vmul.f32 %v3002, %v2947
        %v3004 = vmul.f32 %v3002, %v2948
        %3007 = vrot.lane.b32.xlu0 %v3003, 127
        %v3008 = vpop.permute.xlu0 %3007
        %3009 = vrot.lane.b32.xlu0 %v3004, 127
        %v3010 = vpop.permute.xlu0 %3009
        %v3013 = vadd.f32 %v2965, %v3008
        %v3014 = vadd.f32 %v2966, %v3010
        %s3015 = sld [smem:[#allocation3 + $0x103]]
        %v3016 = vstv %s3015
        %v3017 = vmul.f32 %v3016, %v2947
        %v3018 = vmul.f32 %v3016, %v2948
        %3021 = vrot.lane.b32.xlu0 %v3017, 127
        %v3022 = vpop.permute.xlu0 %3021
        %3023 = vrot.lane.b32.xlu0 %v3018, 127
        %v3024 = vpop.permute.xlu0 %3023
        %v3027 = vadd.f32 %v2971, %v3022
        %v3028 = vadd.f32 %v2972, %v3024
        %s3029 = sld [smem:[#allocation3 + $0x98]]
        %v3030 = vstv %s3029
        %v3031 = vmul.f32 %v3030, %v2947
        %v3032 = vmul.f32 %v3030, %v2948
        %3035 = vrot.lane.b32.xlu0 %v3031, 126
        %v3036 = vpop.permute.xlu0 %3035
        %3037 = vrot.lane.b32.xlu0 %v3032, 126
        %v3038 = vpop.permute.xlu0 %3037
        %v3041 = vadd.f32 %v2985, %v3036
        %v3042 = vadd.f32 %v2986, %v3038
        %s3043 = sld [smem:[#allocation3 + $0xbc]]
        %v3044 = vstv %s3043
        %v3045 = vmul.f32 %v3044, %v2947
        %v3046 = vmul.f32 %v3044, %v2948
        %3049 = vrot.lane.b32.xlu0 %v3045, 126
        %v3050 = vpop.permute.xlu0 %3049
        %3051 = vrot.lane.b32.xlu0 %v3046, 126
        %v3052 = vpop.permute.xlu0 %3051
        %v3055 = vadd.f32 %v2999, %v3050
        %v3056 = vadd.f32 %v3000, %v3052
        %s3057 = sld [smem:[#allocation3 + $0xe0]]
        %v3058 = vstv %s3057
        %v3059 = vmul.f32 %v3058, %v2947
        %v3060 = vmul.f32 %v3058, %v2948
        %3063 = vrot.lane.b32.xlu0 %v3059, 126
        %v3064 = vpop.permute.xlu0 %3063
        %3065 = vrot.lane.b32.xlu0 %v3060, 126
        %v3066 = vpop.permute.xlu0 %3065
        %v3069 = vadd.f32 %v3013, %v3064
        %v3070 = vadd.f32 %v3014, %v3066
        %s3071 = sld [smem:[#allocation3 + $0x104]]
        %v3072 = vstv %s3071
        %v3073 = vmul.f32 %v3072, %v2947
        %v3074 = vmul.f32 %v3072, %v2948
        %3077 = vrot.lane.b32.xlu0 %v3073, 126
        %v3078 = vpop.permute.xlu0 %3077
        %3079 = vrot.lane.b32.xlu0 %v3074, 126
        %v3080 = vpop.permute.xlu0 %3079
        %v3083 = vadd.f32 %v3027, %v3078
        %v3084 = vadd.f32 %v3028, %v3080
        %v3085 = vld [vmem:[%s832] sm:$0xff]
        %v3086 = vld [vmem:[%s832 + $0x8] sm:$0xff]
        %s3087 = sld [smem:[#allocation3 + $0x99]]
        %v3088 = vstv %s3087
        %v3089 = vmul.f32 %v3088, %v3085
        %v3090 = vmul.f32 %v3088, %v3086
        %v3091 = vadd.f32 %v3041, %v3089
        %v3092 = vadd.f32 %v3042, %v3090
        %s3093 = sld [smem:[#allocation3 + $0xbd]]
        %v3094 = vstv %s3093
        %v3095 = vmul.f32 %v3094, %v3085
        %v3096 = vmul.f32 %v3094, %v3086
        %v3097 = vadd.f32 %v3055, %v3095
        %v3098 = vadd.f32 %v3056, %v3096
        %s3099 = sld [smem:[#allocation3 + $0xe1]]
        %v3100 = vstv %s3099
        %v3101 = vmul.f32 %v3100, %v3085
        %v3102 = vmul.f32 %v3100, %v3086
        %v3103 = vadd.f32 %v3069, %v3101
        %v3104 = vadd.f32 %v3070, %v3102
        %s3105 = sld [smem:[#allocation3 + $0x105]]
        %v3106 = vstv %s3105
        %v3107 = vmul.f32 %v3106, %v3085
        %v3108 = vmul.f32 %v3106, %v3086
        %v3109 = vadd.f32 %v3083, %v3107
        %v3110 = vadd.f32 %v3084, %v3108
        %s3111 = sld [smem:[#allocation3 + $0x9a]]
        %v3112 = vstv %s3111
        %v3113 = vmul.f32 %v3112, %v3085
        %v3114 = vmul.f32 %v3112, %v3086
        %3117 = vrot.lane.b32.xlu0 %v3113, 127
        %v3118 = vpop.permute.xlu0 %3117
        %3119 = vrot.lane.b32.xlu0 %v3114, 127
        %v3120 = vpop.permute.xlu0 %3119
        %v3123 = vadd.f32 %v3091, %v3118
        %v3124 = vadd.f32 %v3092, %v3120
        %s3125 = sld [smem:[#allocation3 + $0xbe]]
        %v3126 = vstv %s3125
        %v3127 = vmul.f32 %v3126, %v3085
        %v3128 = vmul.f32 %v3126, %v3086
        %3131 = vrot.lane.b32.xlu0 %v3127, 127
        %v3132 = vpop.permute.xlu0 %3131
        %3133 = vrot.lane.b32.xlu0 %v3128, 127
        %v3134 = vpop.permute.xlu0 %3133
        %v3137 = vadd.f32 %v3097, %v3132
        %v3138 = vadd.f32 %v3098, %v3134
        %s3139 = sld [smem:[#allocation3 + $0xe2]]
        %v3140 = vstv %s3139
        %v3141 = vmul.f32 %v3140, %v3085
        %v3142 = vmul.f32 %v3140, %v3086
        %3145 = vrot.lane.b32.xlu0 %v3141, 127
        %v3146 = vpop.permute.xlu0 %3145
        %3147 = vrot.lane.b32.xlu0 %v3142, 127
        %v3148 = vpop.permute.xlu0 %3147
        %v3151 = vadd.f32 %v3103, %v3146
        %v3152 = vadd.f32 %v3104, %v3148
        %s3153 = sld [smem:[#allocation3 + $0x106]]
        %v3154 = vstv %s3153
        %v3155 = vmul.f32 %v3154, %v3085
        %v3156 = vmul.f32 %v3154, %v3086
        %3159 = vrot.lane.b32.xlu0 %v3155, 127
        %v3160 = vpop.permute.xlu0 %3159
        %3161 = vrot.lane.b32.xlu0 %v3156, 127
        %v3162 = vpop.permute.xlu0 %3161
        %v3165 = vadd.f32 %v3109, %v3160
        %v3166 = vadd.f32 %v3110, %v3162
        %s3167 = sld [smem:[#allocation3 + $0x9b]]
        %v3168 = vstv %s3167
        %v3169 = vmul.f32 %v3168, %v3085
        %v3170 = vmul.f32 %v3168, %v3086
        %3173 = vrot.lane.b32.xlu0 %v3169, 126
        %v3174 = vpop.permute.xlu0 %3173
        %3175 = vrot.lane.b32.xlu0 %v3170, 126
        %v3176 = vpop.permute.xlu0 %3175
        %v3179 = vadd.f32 %v3123, %v3174
        %v3180 = vadd.f32 %v3124, %v3176
        %s3181 = sld [smem:[#allocation3 + $0xbf]]
        %v3182 = vstv %s3181
        %v3183 = vmul.f32 %v3182, %v3085
        %v3184 = vmul.f32 %v3182, %v3086
        %3187 = vrot.lane.b32.xlu0 %v3183, 126
        %v3188 = vpop.permute.xlu0 %3187
        %3189 = vrot.lane.b32.xlu0 %v3184, 126
        %v3190 = vpop.permute.xlu0 %3189
        %v3193 = vadd.f32 %v3137, %v3188
        %v3194 = vadd.f32 %v3138, %v3190
        %s3195 = sld [smem:[#allocation3 + $0xe3]]
        %v3196 = vstv %s3195
        %v3197 = vmul.f32 %v3196, %v3085
        %v3198 = vmul.f32 %v3196, %v3086
        %3201 = vrot.lane.b32.xlu0 %v3197, 126
        %v3202 = vpop.permute.xlu0 %3201
        %3203 = vrot.lane.b32.xlu0 %v3198, 126
        %v3204 = vpop.permute.xlu0 %3203
        %v3207 = vadd.f32 %v3151, %v3202
        %v3208 = vadd.f32 %v3152, %v3204
        %s3209 = sld [smem:[#allocation3 + $0x107]]
        %v3210 = vstv %s3209
        %v3211 = vmul.f32 %v3210, %v3085
        %v3212 = vmul.f32 %v3210, %v3086
        %3215 = vrot.lane.b32.xlu0 %v3211, 126
        %v3216 = vpop.permute.xlu0 %3215
        %3217 = vrot.lane.b32.xlu0 %v3212, 126
        %v3218 = vpop.permute.xlu0 %3217
        %v3221 = vadd.f32 %v3165, %v3216
        %v3222 = vadd.f32 %v3166, %v3218
        %v3223 = vld [vmem:[%s832 + $0x1] sm:$0xff]
        %v3224 = vld [vmem:[%s832 + $0x9] sm:$0xff]
        %s3225 = sld [smem:[#allocation3 + $0x9c]]
        %v3226 = vstv %s3225
        %v3227 = vmul.f32 %v3226, %v3223
        %v3228 = vmul.f32 %v3226, %v3224
        %v3229 = vadd.f32 %v3179, %v3227
        %v3230 = vadd.f32 %v3180, %v3228
        %s3231 = sld [smem:[#allocation3 + $0xc0]]
        %v3232 = vstv %s3231
        %v3233 = vmul.f32 %v3232, %v3223
        %v3234 = vmul.f32 %v3232, %v3224
        %v3235 = vadd.f32 %v3193, %v3233
        %v3236 = vadd.f32 %v3194, %v3234
        %s3237 = sld [smem:[#allocation3 + $0xe4]]
        %v3238 = vstv %s3237
        %v3239 = vmul.f32 %v3238, %v3223
        %v3240 = vmul.f32 %v3238, %v3224
        %v3241 = vadd.f32 %v3207, %v3239
        %v3242 = vadd.f32 %v3208, %v3240
        %s3243 = sld [smem:[#allocation3 + $0x108]]
        %v3244 = vstv %s3243
        %v3245 = vmul.f32 %v3244, %v3223
        %v3246 = vmul.f32 %v3244, %v3224
        %v3247 = vadd.f32 %v3221, %v3245
        %v3248 = vadd.f32 %v3222, %v3246
        %s3249 = sld [smem:[#allocation3 + $0x9d]]
        %v3250 = vstv %s3249
        %v3251 = vmul.f32 %v3250, %v3223
        %v3252 = vmul.f32 %v3250, %v3224
        %3255 = vrot.lane.b32.xlu0 %v3251, 127
        %v3256 = vpop.permute.xlu0 %3255
        %3257 = vrot.lane.b32.xlu0 %v3252, 127
        %v3258 = vpop.permute.xlu0 %3257
        %v3261 = vadd.f32 %v3229, %v3256
        %v3262 = vadd.f32 %v3230, %v3258
        %s3263 = sld [smem:[#allocation3 + $0xc1]]
        %v3264 = vstv %s3263
        %v3265 = vmul.f32 %v3264, %v3223
        %v3266 = vmul.f32 %v3264, %v3224
        %3269 = vrot.lane.b32.xlu0 %v3265, 127
        %v3270 = vpop.permute.xlu0 %3269
        %3271 = vrot.lane.b32.xlu0 %v3266, 127
        %v3272 = vpop.permute.xlu0 %3271
        %v3275 = vadd.f32 %v3235, %v3270
        %v3276 = vadd.f32 %v3236, %v3272
        %s3277 = sld [smem:[#allocation3 + $0xe5]]
        %v3278 = vstv %s3277
        %v3279 = vmul.f32 %v3278, %v3223
        %v3280 = vmul.f32 %v3278, %v3224
        %3283 = vrot.lane.b32.xlu0 %v3279, 127
        %v3284 = vpop.permute.xlu0 %3283
        %3285 = vrot.lane.b32.xlu0 %v3280, 127
        %v3286 = vpop.permute.xlu0 %3285
        %v3289 = vadd.f32 %v3241, %v3284
        %v3290 = vadd.f32 %v3242, %v3286
        %s3291 = sld [smem:[#allocation3 + $0x109]]
        %v3292 = vstv %s3291
        %v3293 = vmul.f32 %v3292, %v3223
        %v3294 = vmul.f32 %v3292, %v3224
        %3297 = vrot.lane.b32.xlu0 %v3293, 127
        %v3298 = vpop.permute.xlu0 %3297
        %3299 = vrot.lane.b32.xlu0 %v3294, 127
        %v3300 = vpop.permute.xlu0 %3299
        %v3303 = vadd.f32 %v3247, %v3298
        %v3304 = vadd.f32 %v3248, %v3300
        %s3305 = sld [smem:[#allocation3 + $0x9e]]
        %v3306 = vstv %s3305
        %v3307 = vmul.f32 %v3306, %v3223
        %v3308 = vmul.f32 %v3306, %v3224
        %3311 = vrot.lane.b32.xlu0 %v3307, 126
        %v3312 = vpop.permute.xlu0 %3311
        %3313 = vrot.lane.b32.xlu0 %v3308, 126
        %v3314 = vpop.permute.xlu0 %3313
        %v3317 = vadd.f32 %v3261, %v3312
        %v3318 = vadd.f32 %v3262, %v3314
        %s3319 = sld [smem:[#allocation3 + $0xc2]]
        %v3320 = vstv %s3319
        %v3321 = vmul.f32 %v3320, %v3223
        %v3322 = vmul.f32 %v3320, %v3224
        %3325 = vrot.lane.b32.xlu0 %v3321, 126
        %v3326 = vpop.permute.xlu0 %3325
        %3327 = vrot.lane.b32.xlu0 %v3322, 126
        %v3328 = vpop.permute.xlu0 %3327
        %v3331 = vadd.f32 %v3275, %v3326
        %v3332 = vadd.f32 %v3276, %v3328
        %s3333 = sld [smem:[#allocation3 + $0xe6]]
        %v3334 = vstv %s3333
        %v3335 = vmul.f32 %v3334, %v3223
        %v3336 = vmul.f32 %v3334, %v3224
        %3339 = vrot.lane.b32.xlu0 %v3335, 126
        %v3340 = vpop.permute.xlu0 %3339
        %3341 = vrot.lane.b32.xlu0 %v3336, 126
        %v3342 = vpop.permute.xlu0 %3341
        %v3345 = vadd.f32 %v3289, %v3340
        %v3346 = vadd.f32 %v3290, %v3342
        %s3347 = sld [smem:[#allocation3 + $0x10a]]
        %v3348 = vstv %s3347
        %v3349 = vmul.f32 %v3348, %v3223
        %v3350 = vmul.f32 %v3348, %v3224
        %3353 = vrot.lane.b32.xlu0 %v3349, 126
        %v3354 = vpop.permute.xlu0 %3353
        %3355 = vrot.lane.b32.xlu0 %v3350, 126
        %v3356 = vpop.permute.xlu0 %3355
        %v3359 = vadd.f32 %v3303, %v3354
        %v3360 = vadd.f32 %v3304, %v3356
        %v3361 = vld [vmem:[%s832 + $0x2] sm:$0xff]
        %v3362 = vld [vmem:[%s832 + $0xa] sm:$0xff]
        %s3363 = sld [smem:[#allocation3 + $0x9f]]
        %v3364 = vstv %s3363
        %v3365 = vmul.f32 %v3364, %v3361
        %v3366 = vmul.f32 %v3364, %v3362
        %v3367 = vadd.f32 %v3317, %v3365
        %v3368 = vadd.f32 %v3318, %v3366
        %s3369 = sld [smem:[#allocation3 + $0xc3]]
        %v3370 = vstv %s3369
        %v3371 = vmul.f32 %v3370, %v3361
        %v3372 = vmul.f32 %v3370, %v3362
        %v3373 = vadd.f32 %v3331, %v3371
        %v3374 = vadd.f32 %v3332, %v3372
        %s3375 = sld [smem:[#allocation3 + $0xe7]]
        %v3376 = vstv %s3375
        %v3377 = vmul.f32 %v3376, %v3361
        %v3378 = vmul.f32 %v3376, %v3362
        %v3379 = vadd.f32 %v3345, %v3377
        %v3380 = vadd.f32 %v3346, %v3378
        %s3381 = sld [smem:[#allocation3 + $0x10b]]
        %v3382 = vstv %s3381
        %v3383 = vmul.f32 %v3382, %v3361
        %v3384 = vmul.f32 %v3382, %v3362
        %v3385 = vadd.f32 %v3359, %v3383
        %v3386 = vadd.f32 %v3360, %v3384
        %s3387 = sld [smem:[#allocation3 + $0xa0]]
        %v3388 = vstv %s3387
        %v3389 = vmul.f32 %v3388, %v3361
        %v3390 = vmul.f32 %v3388, %v3362
        %3393 = vrot.lane.b32.xlu0 %v3389, 127
        %v3394 = vpop.permute.xlu0 %3393
        %3395 = vrot.lane.b32.xlu0 %v3390, 127
        %v3396 = vpop.permute.xlu0 %3395
        %v3399 = vadd.f32 %v3367, %v3394
        %v3400 = vadd.f32 %v3368, %v3396
        %s3401 = sld [smem:[#allocation3 + $0xc4]]
        %v3402 = vstv %s3401
        %v3403 = vmul.f32 %v3402, %v3361
        %v3404 = vmul.f32 %v3402, %v3362
        %3407 = vrot.lane.b32.xlu0 %v3403, 127
        %v3408 = vpop.permute.xlu0 %3407
        %3409 = vrot.lane.b32.xlu0 %v3404, 127
        %v3410 = vpop.permute.xlu0 %3409
        %v3413 = vadd.f32 %v3373, %v3408
        %v3414 = vadd.f32 %v3374, %v3410
        %s3415 = sld [smem:[#allocation3 + $0xe8]]
        %v3416 = vstv %s3415
        %v3417 = vmul.f32 %v3416, %v3361
        %v3418 = vmul.f32 %v3416, %v3362
        %3421 = vrot.lane.b32.xlu0 %v3417, 127
        %v3422 = vpop.permute.xlu0 %3421
        %3423 = vrot.lane.b32.xlu0 %v3418, 127
        %v3424 = vpop.permute.xlu0 %3423
        %v3427 = vadd.f32 %v3379, %v3422
        %v3428 = vadd.f32 %v3380, %v3424
        %s3429 = sld [smem:[#allocation3 + $0x10c]]
        %v3430 = vstv %s3429
        %v3431 = vmul.f32 %v3430, %v3361
        %v3432 = vmul.f32 %v3430, %v3362
        %3435 = vrot.lane.b32.xlu0 %v3431, 127
        %v3436 = vpop.permute.xlu0 %3435
        %3437 = vrot.lane.b32.xlu0 %v3432, 127
        %v3438 = vpop.permute.xlu0 %3437
        %v3441 = vadd.f32 %v3385, %v3436
        %v3442 = vadd.f32 %v3386, %v3438
        %s3443 = sld [smem:[#allocation3 + $0xa1]]
        %v3444 = vstv %s3443
        %v3445 = vmul.f32 %v3444, %v3361
        %v3446 = vmul.f32 %v3444, %v3362
        %3449 = vrot.lane.b32.xlu0 %v3445, 126
        %v3450 = vpop.permute.xlu0 %3449
        %3451 = vrot.lane.b32.xlu0 %v3446, 126
        %v3452 = vpop.permute.xlu0 %3451
        %v3455 = vadd.f32 %v3399, %v3450
        %v3456 = vadd.f32 %v3400, %v3452
        %s3457 = sld [smem:[#allocation3 + $0xc5]]
        %v3458 = vstv %s3457
        %v3459 = vmul.f32 %v3458, %v3361
        %v3460 = vmul.f32 %v3458, %v3362
        %3463 = vrot.lane.b32.xlu0 %v3459, 126
        %v3464 = vpop.permute.xlu0 %3463
        %3465 = vrot.lane.b32.xlu0 %v3460, 126
        %v3466 = vpop.permute.xlu0 %3465
        %v3469 = vadd.f32 %v3413, %v3464
        %v3470 = vadd.f32 %v3414, %v3466
        %s3471 = sld [smem:[#allocation3 + $0xe9]]
        %v3472 = vstv %s3471
        %v3473 = vmul.f32 %v3472, %v3361
        %v3474 = vmul.f32 %v3472, %v3362
        %3477 = vrot.lane.b32.xlu0 %v3473, 126
        %v3478 = vpop.permute.xlu0 %3477
        %3479 = vrot.lane.b32.xlu0 %v3474, 126
        %v3480 = vpop.permute.xlu0 %3479
        %v3483 = vadd.f32 %v3427, %v3478
        %v3484 = vadd.f32 %v3428, %v3480
        %s3485 = sld [smem:[#allocation3 + $0x10d]]
        %v3486 = vstv %s3485
        %v3487 = vmul.f32 %v3486, %v3361
        %v3488 = vmul.f32 %v3486, %v3362
        %3491 = vrot.lane.b32.xlu0 %v3487, 126
        %v3492 = vpop.permute.xlu0 %3491
        %3493 = vrot.lane.b32.xlu0 %v3488, 126
        %v3494 = vpop.permute.xlu0 %3493
        %v3497 = vadd.f32 %v3441, %v3492
        %v3498 = vadd.f32 %v3442, %v3494
        %v3499 = vld [vmem:[%s1247] sm:$0xff]
        %v3500 = vld [vmem:[%s1247 + $0x8] sm:$0xff]
        %s3501 = sld [smem:[#allocation3 + $0xa2]]
        %v3502 = vstv %s3501
        %v3503 = vmul.f32 %v3502, %v3499
        %v3504 = vmul.f32 %v3502, %v3500
        %v3505 = vadd.f32 %v3455, %v3503
        %v3506 = vadd.f32 %v3456, %v3504
        %s3507 = sld [smem:[#allocation3 + $0xc6]]
        %v3508 = vstv %s3507
        %v3509 = vmul.f32 %v3508, %v3499
        %v3510 = vmul.f32 %v3508, %v3500
        %v3511 = vadd.f32 %v3469, %v3509
        %v3512 = vadd.f32 %v3470, %v3510
        %s3513 = sld [smem:[#allocation3 + $0xea]]
        %v3514 = vstv %s3513
        %v3515 = vmul.f32 %v3514, %v3499
        %v3516 = vmul.f32 %v3514, %v3500
        %v3517 = vadd.f32 %v3483, %v3515
        %v3518 = vadd.f32 %v3484, %v3516
        %s3519 = sld [smem:[#allocation3 + $0x10e]]
        %v3520 = vstv %s3519
        %v3521 = vmul.f32 %v3520, %v3499
        %v3522 = vmul.f32 %v3520, %v3500
        %v3523 = vadd.f32 %v3497, %v3521
        %v3524 = vadd.f32 %v3498, %v3522
        %s3525 = sld [smem:[#allocation3 + $0xa3]]
        %v3526 = vstv %s3525
        %v3527 = vmul.f32 %v3526, %v3499
        %v3528 = vmul.f32 %v3526, %v3500
        %3531 = vrot.lane.b32.xlu0 %v3527, 127
        %v3532 = vpop.permute.xlu0 %3531
        %3533 = vrot.lane.b32.xlu0 %v3528, 127
        %v3534 = vpop.permute.xlu0 %3533
        %v3537 = vadd.f32 %v3505, %v3532
        %v3538 = vadd.f32 %v3506, %v3534
        %s3539 = sld [smem:[#allocation3 + $0xc7]]
        %v3540 = vstv %s3539
        %v3541 = vmul.f32 %v3540, %v3499
        %v3542 = vmul.f32 %v3540, %v3500
        %3545 = vrot.lane.b32.xlu0 %v3541, 127
        %v3546 = vpop.permute.xlu0 %3545
        %3547 = vrot.lane.b32.xlu0 %v3542, 127
        %v3548 = vpop.permute.xlu0 %3547
        %v3551 = vadd.f32 %v3511, %v3546
        %v3552 = vadd.f32 %v3512, %v3548
        %s3553 = sld [smem:[#allocation3 + $0xeb]]
        %v3554 = vstv %s3553
        %v3555 = vmul.f32 %v3554, %v3499
        %v3556 = vmul.f32 %v3554, %v3500
        %3559 = vrot.lane.b32.xlu0 %v3555, 127
        %v3560 = vpop.permute.xlu0 %3559
        %3561 = vrot.lane.b32.xlu0 %v3556, 127
        %v3562 = vpop.permute.xlu0 %3561
        %v3565 = vadd.f32 %v3517, %v3560
        %v3566 = vadd.f32 %v3518, %v3562
        %s3567 = sld [smem:[#allocation3 + $0x10f]]
        %v3568 = vstv %s3567
        %v3569 = vmul.f32 %v3568, %v3499
        %v3570 = vmul.f32 %v3568, %v3500
        %3573 = vrot.lane.b32.xlu0 %v3569, 127
        %v3574 = vpop.permute.xlu0 %3573
        %3575 = vrot.lane.b32.xlu0 %v3570, 127
        %v3576 = vpop.permute.xlu0 %3575
        %v3579 = vadd.f32 %v3523, %v3574
        %v3580 = vadd.f32 %v3524, %v3576
        %s3581 = sld [smem:[#allocation3 + $0xa4]]
        %v3582 = vstv %s3581
        %v3583 = vmul.f32 %v3582, %v3499
        %v3584 = vmul.f32 %v3582, %v3500
        %3587 = vrot.lane.b32.xlu0 %v3583, 126
        %v3588 = vpop.permute.xlu0 %3587
        %3589 = vrot.lane.b32.xlu0 %v3584, 126
        %v3590 = vpop.permute.xlu0 %3589
        %v3593 = vadd.f32 %v3537, %v3588
        %v3594 = vadd.f32 %v3538, %v3590
        %s3595 = sld [smem:[#allocation3 + $0xc8]]
        %v3596 = vstv %s3595
        %v3597 = vmul.f32 %v3596, %v3499
        %v3598 = vmul.f32 %v3596, %v3500
        %3601 = vrot.lane.b32.xlu0 %v3597, 126
        %v3602 = vpop.permute.xlu0 %3601
        %3603 = vrot.lane.b32.xlu0 %v3598, 126
        %v3604 = vpop.permute.xlu0 %3603
        %v3607 = vadd.f32 %v3551, %v3602
        %v3608 = vadd.f32 %v3552, %v3604
        %s3609 = sld [smem:[#allocation3 + $0xec]]
        %v3610 = vstv %s3609
        %v3611 = vmul.f32 %v3610, %v3499
        %v3612 = vmul.f32 %v3610, %v3500
        %3615 = vrot.lane.b32.xlu0 %v3611, 126
        %v3616 = vpop.permute.xlu0 %3615
        %3617 = vrot.lane.b32.xlu0 %v3612, 126
        %v3618 = vpop.permute.xlu0 %3617
        %v3621 = vadd.f32 %v3565, %v3616
        %v3622 = vadd.f32 %v3566, %v3618
        %s3623 = sld [smem:[#allocation3 + $0x110]]
        %v3624 = vstv %s3623
        %v3625 = vmul.f32 %v3624, %v3499
        %v3626 = vmul.f32 %v3624, %v3500
        %3629 = vrot.lane.b32.xlu0 %v3625, 126
        %v3630 = vpop.permute.xlu0 %3629
        %3631 = vrot.lane.b32.xlu0 %v3626, 126
        %v3632 = vpop.permute.xlu0 %3631
        %v3635 = vadd.f32 %v3579, %v3630
        %v3636 = vadd.f32 %v3580, %v3632
        %v3637 = vld [vmem:[%s1247 + $0x1] sm:$0xff]
        %v3638 = vld [vmem:[%s1247 + $0x9] sm:$0xff]
        %s3639 = sld [smem:[#allocation3 + $0xa5]]
        %v3640 = vstv %s3639
        %v3641 = vmul.f32 %v3640, %v3637
        %v3642 = vmul.f32 %v3640, %v3638
        %v3643 = vadd.f32 %v3593, %v3641
        %v3644 = vadd.f32 %v3594, %v3642
        %s3645 = sld [smem:[#allocation3 + $0xc9]]
        %v3646 = vstv %s3645
        %v3647 = vmul.f32 %v3646, %v3637
        %v3648 = vmul.f32 %v3646, %v3638
        %v3649 = vadd.f32 %v3607, %v3647
        %v3650 = vadd.f32 %v3608, %v3648
        %s3651 = sld [smem:[#allocation3 + $0xed]]
        %v3652 = vstv %s3651
        %v3653 = vmul.f32 %v3652, %v3637
        %v3654 = vmul.f32 %v3652, %v3638
        %v3655 = vadd.f32 %v3621, %v3653
        %v3656 = vadd.f32 %v3622, %v3654
        %s3657 = sld [smem:[#allocation3 + $0x111]]
        %v3658 = vstv %s3657
        %v3659 = vmul.f32 %v3658, %v3637
        %v3660 = vmul.f32 %v3658, %v3638
        %v3661 = vadd.f32 %v3635, %v3659
        %v3662 = vadd.f32 %v3636, %v3660
        %s3663 = sld [smem:[#allocation3 + $0xa6]]
        %v3664 = vstv %s3663
        %v3665 = vmul.f32 %v3664, %v3637
        %v3666 = vmul.f32 %v3664, %v3638
        %3669 = vrot.lane.b32.xlu0 %v3665, 127
        %v3670 = vpop.permute.xlu0 %3669
        %3671 = vrot.lane.b32.xlu0 %v3666, 127
        %v3672 = vpop.permute.xlu0 %3671
        %v3675 = vadd.f32 %v3643, %v3670
        %v3676 = vadd.f32 %v3644, %v3672
        %s3677 = sld [smem:[#allocation3 + $0xca]]
        %v3678 = vstv %s3677
        %v3679 = vmul.f32 %v3678, %v3637
        %v3680 = vmul.f32 %v3678, %v3638
        %3683 = vrot.lane.b32.xlu0 %v3679, 127
        %v3684 = vpop.permute.xlu0 %3683
        %3685 = vrot.lane.b32.xlu0 %v3680, 127
        %v3686 = vpop.permute.xlu0 %3685
        %v3689 = vadd.f32 %v3649, %v3684
        %v3690 = vadd.f32 %v3650, %v3686
        %s3691 = sld [smem:[#allocation3 + $0xee]]
        %v3692 = vstv %s3691
        %v3693 = vmul.f32 %v3692, %v3637
        %v3694 = vmul.f32 %v3692, %v3638
        %3697 = vrot.lane.b32.xlu0 %v3693, 127
        %v3698 = vpop.permute.xlu0 %3697
        %3699 = vrot.lane.b32.xlu0 %v3694, 127
        %v3700 = vpop.permute.xlu0 %3699
        %v3703 = vadd.f32 %v3655, %v3698
        %v3704 = vadd.f32 %v3656, %v3700
        %s3705 = sld [smem:[#allocation3 + $0x112]]
        %v3706 = vstv %s3705
        %v3707 = vmul.f32 %v3706, %v3637
        %v3708 = vmul.f32 %v3706, %v3638
        %3711 = vrot.lane.b32.xlu0 %v3707, 127
        %v3712 = vpop.permute.xlu0 %3711
        %3713 = vrot.lane.b32.xlu0 %v3708, 127
        %v3714 = vpop.permute.xlu0 %3713
        %v3717 = vadd.f32 %v3661, %v3712
        %v3718 = vadd.f32 %v3662, %v3714
        %s3719 = sld [smem:[#allocation3 + $0xa7]]
        %v3720 = vstv %s3719
        %v3721 = vmul.f32 %v3720, %v3637
        %v3722 = vmul.f32 %v3720, %v3638
        %3725 = vrot.lane.b32.xlu0 %v3721, 126
        %v3726 = vpop.permute.xlu0 %3725
        %3727 = vrot.lane.b32.xlu0 %v3722, 126
        %v3728 = vpop.permute.xlu0 %3727
        %v3731 = vadd.f32 %v3675, %v3726
        %v3732 = vadd.f32 %v3676, %v3728
        %s3733 = sld [smem:[#allocation3 + $0xcb]]
        %v3734 = vstv %s3733
        %v3735 = vmul.f32 %v3734, %v3637
        %v3736 = vmul.f32 %v3734, %v3638
        %3739 = vrot.lane.b32.xlu0 %v3735, 126
        %v3740 = vpop.permute.xlu0 %3739
        %3741 = vrot.lane.b32.xlu0 %v3736, 126
        %v3742 = vpop.permute.xlu0 %3741
        %v3745 = vadd.f32 %v3689, %v3740
        %v3746 = vadd.f32 %v3690, %v3742
        %s3747 = sld [smem:[#allocation3 + $0xef]]
        %v3748 = vstv %s3747
        %v3749 = vmul.f32 %v3748, %v3637
        %v3750 = vmul.f32 %v3748, %v3638
        %3753 = vrot.lane.b32.xlu0 %v3749, 126
        %v3754 = vpop.permute.xlu0 %3753
        %3755 = vrot.lane.b32.xlu0 %v3750, 126
        %v3756 = vpop.permute.xlu0 %3755
        %v3759 = vadd.f32 %v3703, %v3754
        %v3760 = vadd.f32 %v3704, %v3756
        %s3761 = sld [smem:[#allocation3 + $0x113]]
        %v3762 = vstv %s3761
        %v3763 = vmul.f32 %v3762, %v3637
        %v3764 = vmul.f32 %v3762, %v3638
        %3767 = vrot.lane.b32.xlu0 %v3763, 126
        %v3768 = vpop.permute.xlu0 %3767
        %3769 = vrot.lane.b32.xlu0 %v3764, 126
        %v3770 = vpop.permute.xlu0 %3769
        %v3773 = vadd.f32 %v3717, %v3768
        %v3774 = vadd.f32 %v3718, %v3770
        %v3775 = vld [vmem:[%s1247 + $0x2] sm:$0xff]
        %v3776 = vld [vmem:[%s1247 + $0xa] sm:$0xff]
        %s3777 = sld [smem:[#allocation3 + $0xa8]]
        %v3778 = vstv %s3777
        %v3779 = vmul.f32 %v3778, %v3775
        %v3780 = vmul.f32 %v3778, %v3776
        %v3781 = vadd.f32 %v3731, %v3779
        %v3782 = vadd.f32 %v3732, %v3780
        %s3783 = sld [smem:[#allocation3 + $0xcc]]
        %v3784 = vstv %s3783
        %v3785 = vmul.f32 %v3784, %v3775
        %v3786 = vmul.f32 %v3784, %v3776
        %v3787 = vadd.f32 %v3745, %v3785
        %v3788 = vadd.f32 %v3746, %v3786
        %s3789 = sld [smem:[#allocation3 + $0xf0]]
        %v3790 = vstv %s3789
        %v3791 = vmul.f32 %v3790, %v3775
        %v3792 = vmul.f32 %v3790, %v3776
        %v3793 = vadd.f32 %v3759, %v3791
        %v3794 = vadd.f32 %v3760, %v3792
        %s3795 = sld [smem:[#allocation3 + $0x114]]
        %v3796 = vstv %s3795
        %v3797 = vmul.f32 %v3796, %v3775
        %v3798 = vmul.f32 %v3796, %v3776
        %v3799 = vadd.f32 %v3773, %v3797
        %v3800 = vadd.f32 %v3774, %v3798
        %s3801 = sld [smem:[#allocation3 + $0xa9]]
        %v3802 = vstv %s3801
        %v3803 = vmul.f32 %v3802, %v3775
        %v3804 = vmul.f32 %v3802, %v3776
        %3807 = vrot.lane.b32.xlu0 %v3803, 127
        %v3808 = vpop.permute.xlu0 %3807
        %3809 = vrot.lane.b32.xlu0 %v3804, 127
        %v3810 = vpop.permute.xlu0 %3809
        %v3813 = vadd.f32 %v3781, %v3808
        %v3814 = vadd.f32 %v3782, %v3810
        %s3815 = sld [smem:[#allocation3 + $0xcd]]
        %v3816 = vstv %s3815
        %v3817 = vmul.f32 %v3816, %v3775
        %v3818 = vmul.f32 %v3816, %v3776
        %3821 = vrot.lane.b32.xlu0 %v3817, 127
        %v3822 = vpop.permute.xlu0 %3821
        %3823 = vrot.lane.b32.xlu0 %v3818, 127
        %v3824 = vpop.permute.xlu0 %3823
        %v3827 = vadd.f32 %v3787, %v3822
        %v3828 = vadd.f32 %v3788, %v3824
        %s3829 = sld [smem:[#allocation3 + $0xf1]]
        %v3830 = vstv %s3829
        %v3831 = vmul.f32 %v3830, %v3775
        %v3832 = vmul.f32 %v3830, %v3776
        %3835 = vrot.lane.b32.xlu0 %v3831, 127
        %v3836 = vpop.permute.xlu0 %3835
        %3837 = vrot.lane.b32.xlu0 %v3832, 127
        %v3838 = vpop.permute.xlu0 %3837
        %v3841 = vadd.f32 %v3793, %v3836
        %v3842 = vadd.f32 %v3794, %v3838
        %s3843 = sld [smem:[#allocation3 + $0x115]]
        %v3844 = vstv %s3843
        %v3845 = vmul.f32 %v3844, %v3775
        %v3846 = vmul.f32 %v3844, %v3776
        %3849 = vrot.lane.b32.xlu0 %v3845, 127
        %v3850 = vpop.permute.xlu0 %3849
        %3851 = vrot.lane.b32.xlu0 %v3846, 127
        %v3852 = vpop.permute.xlu0 %3851
        %v3855 = vadd.f32 %v3799, %v3850
        %v3856 = vadd.f32 %v3800, %v3852
        %s3857 = sld [smem:[#allocation3 + $0xaa]]
        %v3858 = vstv %s3857
        %v3859 = vmul.f32 %v3858, %v3775
        %v3860 = vmul.f32 %v3858, %v3776
        %3863 = vrot.lane.b32.xlu0 %v3859, 126
        %v3864 = vpop.permute.xlu0 %3863
        %3865 = vrot.lane.b32.xlu0 %v3860, 126
        %v3866 = vpop.permute.xlu0 %3865
        %v3869 = vadd.f32 %v3813, %v3864
        %v3870 = vadd.f32 %v3814, %v3866
        %s3871 = sld [smem:[#allocation3 + $0xce]]
        %v3872 = vstv %s3871
        %v3873 = vmul.f32 %v3872, %v3775
        %v3874 = vmul.f32 %v3872, %v3776
        %3877 = vrot.lane.b32.xlu0 %v3873, 126
        %v3878 = vpop.permute.xlu0 %3877
        %3879 = vrot.lane.b32.xlu0 %v3874, 126
        %v3880 = vpop.permute.xlu0 %3879
        %v3883 = vadd.f32 %v3827, %v3878
        %v3884 = vadd.f32 %v3828, %v3880
        %s3885 = sld [smem:[#allocation3 + $0xf2]]
        %v3886 = vstv %s3885
        %v3887 = vmul.f32 %v3886, %v3775
        %v3888 = vmul.f32 %v3886, %v3776
        %3891 = vrot.lane.b32.xlu0 %v3887, 126
        %v3892 = vpop.permute.xlu0 %3891
        %3893 = vrot.lane.b32.xlu0 %v3888, 126
        %v3894 = vpop.permute.xlu0 %3893
        %v3897 = vadd.f32 %v3841, %v3892
        %v3898 = vadd.f32 %v3842, %v3894
        %s3899 = sld [smem:[#allocation3 + $0x116]]
        %v3900 = vstv %s3899
        %v3901 = vmul.f32 %v3900, %v3775
        %v3902 = vmul.f32 %v3900, %v3776
        %3905 = vrot.lane.b32.xlu0 %v3901, 126
        %v3906 = vpop.permute.xlu0 %3905
        %3907 = vrot.lane.b32.xlu0 %v3902, 126
        %v3908 = vpop.permute.xlu0 %3907
        %v3911 = vadd.f32 %v3855, %v3906
        %v3912 = vadd.f32 %v3856, %v3908
        %v3913 = vld [vmem:[%s1662] sm:$0xff]
        %v3914 = vld [vmem:[%s1662 + $0x8] sm:$0xff]
        %s3915 = sld [smem:[#allocation3 + $0xab]]
        %v3916 = vstv %s3915
        %v3917 = vmul.f32 %v3916, %v3913
        %v3918 = vmul.f32 %v3916, %v3914
        %v3919 = vadd.f32 %v3869, %v3917
        %v3920 = vadd.f32 %v3870, %v3918
        %s3921 = sld [smem:[#allocation3 + $0xcf]]
        %v3922 = vstv %s3921
        %v3923 = vmul.f32 %v3922, %v3913
        %v3924 = vmul.f32 %v3922, %v3914
        %v3925 = vadd.f32 %v3883, %v3923
        %v3926 = vadd.f32 %v3884, %v3924
        %s3927 = sld [smem:[#allocation3 + $0xf3]]
        %v3928 = vstv %s3927
        %v3929 = vmul.f32 %v3928, %v3913
        %v3930 = vmul.f32 %v3928, %v3914
        %v3931 = vadd.f32 %v3897, %v3929
        %v3932 = vadd.f32 %v3898, %v3930
        %s3933 = sld [smem:[#allocation3 + $0x117]]
        %v3934 = vstv %s3933
        %v3935 = vmul.f32 %v3934, %v3913
        %v3936 = vmul.f32 %v3934, %v3914
        %v3937 = vadd.f32 %v3911, %v3935
        %v3938 = vadd.f32 %v3912, %v3936
        %s3939 = sld [smem:[#allocation3 + $0xac]]
        %v3940 = vstv %s3939
        %v3941 = vmul.f32 %v3940, %v3913
        %v3942 = vmul.f32 %v3940, %v3914
        %3945 = vrot.lane.b32.xlu0 %v3941, 127
        %v3946 = vpop.permute.xlu0 %3945
        %3947 = vrot.lane.b32.xlu0 %v3942, 127
        %v3948 = vpop.permute.xlu0 %3947
        %v3951 = vadd.f32 %v3919, %v3946
        %v3952 = vadd.f32 %v3920, %v3948
        %s3953 = sld [smem:[#allocation3 + $0xd0]]
        %v3954 = vstv %s3953
        %v3955 = vmul.f32 %v3954, %v3913
        %v3956 = vmul.f32 %v3954, %v3914
        %3959 = vrot.lane.b32.xlu0 %v3955, 127
        %v3960 = vpop.permute.xlu0 %3959
        %3961 = vrot.lane.b32.xlu0 %v3956, 127
        %v3962 = vpop.permute.xlu0 %3961
        %v3965 = vadd.f32 %v3925, %v3960
        %v3966 = vadd.f32 %v3926, %v3962
        %s3967 = sld [smem:[#allocation3 + $0xf4]]
        %v3968 = vstv %s3967
        %v3969 = vmul.f32 %v3968, %v3913
        %v3970 = vmul.f32 %v3968, %v3914
        %3973 = vrot.lane.b32.xlu0 %v3969, 127
        %v3974 = vpop.permute.xlu0 %3973
        %3975 = vrot.lane.b32.xlu0 %v3970, 127
        %v3976 = vpop.permute.xlu0 %3975
        %v3979 = vadd.f32 %v3931, %v3974
        %v3980 = vadd.f32 %v3932, %v3976
        %s3981 = sld [smem:[#allocation3 + $0x118]]
        %v3982 = vstv %s3981
        %v3983 = vmul.f32 %v3982, %v3913
        %v3984 = vmul.f32 %v3982, %v3914
        %3987 = vrot.lane.b32.xlu0 %v3983, 127
        %v3988 = vpop.permute.xlu0 %3987
        %3989 = vrot.lane.b32.xlu0 %v3984, 127
        %v3990 = vpop.permute.xlu0 %3989
        %v3993 = vadd.f32 %v3937, %v3988
        %v3994 = vadd.f32 %v3938, %v3990
        %s3995 = sld [smem:[#allocation3 + $0xad]]
        %v3996 = vstv %s3995
        %v3997 = vmul.f32 %v3996, %v3913
        %v3998 = vmul.f32 %v3996, %v3914
        %4001 = vrot.lane.b32.xlu0 %v3997, 126
        %v4002 = vpop.permute.xlu0 %4001
        %4003 = vrot.lane.b32.xlu0 %v3998, 126
        %v4004 = vpop.permute.xlu0 %4003
        %v4007 = vadd.f32 %v3951, %v4002
        %v4008 = vadd.f32 %v3952, %v4004
        %s4009 = sld [smem:[#allocation3 + $0xd1]]
        %v4010 = vstv %s4009
        %v4011 = vmul.f32 %v4010, %v3913
        %v4012 = vmul.f32 %v4010, %v3914
        %4015 = vrot.lane.b32.xlu0 %v4011, 126
        %v4016 = vpop.permute.xlu0 %4015
        %4017 = vrot.lane.b32.xlu0 %v4012, 126
        %v4018 = vpop.permute.xlu0 %4017
        %v4021 = vadd.f32 %v3965, %v4016
        %v4022 = vadd.f32 %v3966, %v4018
        %s4023 = sld [smem:[#allocation3 + $0xf5]]
        %v4024 = vstv %s4023
        %v4025 = vmul.f32 %v4024, %v3913
        %v4026 = vmul.f32 %v4024, %v3914
        %4029 = vrot.lane.b32.xlu0 %v4025, 126
        %v4030 = vpop.permute.xlu0 %4029
        %4031 = vrot.lane.b32.xlu0 %v4026, 126
        %v4032 = vpop.permute.xlu0 %4031
        %v4035 = vadd.f32 %v3979, %v4030
        %v4036 = vadd.f32 %v3980, %v4032
        %s4037 = sld [smem:[#allocation3 + $0x119]]
        %v4038 = vstv %s4037
        %v4039 = vmul.f32 %v4038, %v3913
        %v4040 = vmul.f32 %v4038, %v3914
        %4043 = vrot.lane.b32.xlu0 %v4039, 126
        %v4044 = vpop.permute.xlu0 %4043
        %4045 = vrot.lane.b32.xlu0 %v4040, 126
        %v4046 = vpop.permute.xlu0 %4045
        %v4049 = vadd.f32 %v3993, %v4044
        %v4050 = vadd.f32 %v3994, %v4046
        %v4051 = vld [vmem:[%s1662 + $0x1] sm:$0xff]
        %v4052 = vld [vmem:[%s1662 + $0x9] sm:$0xff]
        %s4053 = sld [smem:[#allocation3 + $0xae]]
        %v4054 = vstv %s4053
        %v4055 = vmul.f32 %v4054, %v4051
        %v4056 = vmul.f32 %v4054, %v4052
        %v4057 = vadd.f32 %v4007, %v4055
        %v4058 = vadd.f32 %v4008, %v4056
        %s4059 = sld [smem:[#allocation3 + $0xd2]]
        %v4060 = vstv %s4059
        %v4061 = vmul.f32 %v4060, %v4051
        %v4062 = vmul.f32 %v4060, %v4052
        %v4063 = vadd.f32 %v4021, %v4061
        %v4064 = vadd.f32 %v4022, %v4062
        %s4065 = sld [smem:[#allocation3 + $0xf6]]
        %v4066 = vstv %s4065
        %v4067 = vmul.f32 %v4066, %v4051
        %v4068 = vmul.f32 %v4066, %v4052
        %v4069 = vadd.f32 %v4035, %v4067
        %v4070 = vadd.f32 %v4036, %v4068
        %s4071 = sld [smem:[#allocation3 + $0x11a]]
        %v4072 = vstv %s4071
        %v4073 = vmul.f32 %v4072, %v4051
        %v4074 = vmul.f32 %v4072, %v4052
        %v4075 = vadd.f32 %v4049, %v4073
        %v4076 = vadd.f32 %v4050, %v4074
        %s4077 = sld [smem:[#allocation3 + $0xaf]]
        %v4078 = vstv %s4077
        %v4079 = vmul.f32 %v4078, %v4051
        %v4080 = vmul.f32 %v4078, %v4052
        %4083 = vrot.lane.b32.xlu0 %v4079, 127
        %v4084 = vpop.permute.xlu0 %4083
        %4085 = vrot.lane.b32.xlu0 %v4080, 127
        %v4086 = vpop.permute.xlu0 %4085
        %v4089 = vadd.f32 %v4057, %v4084
        %v4090 = vadd.f32 %v4058, %v4086
        %s4091 = sld [smem:[#allocation3 + $0xd3]]
        %v4092 = vstv %s4091
        %v4093 = vmul.f32 %v4092, %v4051
        %v4094 = vmul.f32 %v4092, %v4052
        %4097 = vrot.lane.b32.xlu0 %v4093, 127
        %v4098 = vpop.permute.xlu0 %4097
        %4099 = vrot.lane.b32.xlu0 %v4094, 127
        %v4100 = vpop.permute.xlu0 %4099
        %v4103 = vadd.f32 %v4063, %v4098
        %v4104 = vadd.f32 %v4064, %v4100
        %s4105 = sld [smem:[#allocation3 + $0xf7]]
        %v4106 = vstv %s4105
        %v4107 = vmul.f32 %v4106, %v4051
        %v4108 = vmul.f32 %v4106, %v4052
        %4111 = vrot.lane.b32.xlu0 %v4107, 127
        %v4112 = vpop.permute.xlu0 %4111
        %4113 = vrot.lane.b32.xlu0 %v4108, 127
        %v4114 = vpop.permute.xlu0 %4113
        %v4117 = vadd.f32 %v4069, %v4112
        %v4118 = vadd.f32 %v4070, %v4114
        %s4119 = sld [smem:[#allocation3 + $0x11b]]
        %v4120 = vstv %s4119
        %v4121 = vmul.f32 %v4120, %v4051
        %v4122 = vmul.f32 %v4120, %v4052
        %4125 = vrot.lane.b32.xlu0 %v4121, 127
        %v4126 = vpop.permute.xlu0 %4125
        %4127 = vrot.lane.b32.xlu0 %v4122, 127
        %v4128 = vpop.permute.xlu0 %4127
        %v4131 = vadd.f32 %v4075, %v4126
        %v4132 = vadd.f32 %v4076, %v4128
        %s4133 = sld [smem:[#allocation3 + $0xb0]]
        %v4134 = vstv %s4133
        %v4135 = vmul.f32 %v4134, %v4051
        %v4136 = vmul.f32 %v4134, %v4052
        %4139 = vrot.lane.b32.xlu0 %v4135, 126
        %v4140 = vpop.permute.xlu0 %4139
        %4141 = vrot.lane.b32.xlu0 %v4136, 126
        %v4142 = vpop.permute.xlu0 %4141
        %v4145 = vadd.f32 %v4089, %v4140
        %v4146 = vadd.f32 %v4090, %v4142
        %s4147 = sld [smem:[#allocation3 + $0xd4]]
        %v4148 = vstv %s4147
        %v4149 = vmul.f32 %v4148, %v4051
        %v4150 = vmul.f32 %v4148, %v4052
        %4153 = vrot.lane.b32.xlu0 %v4149, 126
        %v4154 = vpop.permute.xlu0 %4153
        %4155 = vrot.lane.b32.xlu0 %v4150, 126
        %v4156 = vpop.permute.xlu0 %4155
        %v4159 = vadd.f32 %v4103, %v4154
        %v4160 = vadd.f32 %v4104, %v4156
        %s4161 = sld [smem:[#allocation3 + $0xf8]]
        %v4162 = vstv %s4161
        %v4163 = vmul.f32 %v4162, %v4051
        %v4164 = vmul.f32 %v4162, %v4052
        %4167 = vrot.lane.b32.xlu0 %v4163, 126
        %v4168 = vpop.permute.xlu0 %4167
        %4169 = vrot.lane.b32.xlu0 %v4164, 126
        %v4170 = vpop.permute.xlu0 %4169
        %v4173 = vadd.f32 %v4117, %v4168
        %v4174 = vadd.f32 %v4118, %v4170
        %s4175 = sld [smem:[#allocation3 + $0x11c]]
        %v4176 = vstv %s4175
        %v4177 = vmul.f32 %v4176, %v4051
        %v4178 = vmul.f32 %v4176, %v4052
        %4181 = vrot.lane.b32.xlu0 %v4177, 126
        %v4182 = vpop.permute.xlu0 %4181
        %4183 = vrot.lane.b32.xlu0 %v4178, 126
        %v4184 = vpop.permute.xlu0 %4183
        %v4187 = vadd.f32 %v4131, %v4182
        %v4188 = vadd.f32 %v4132, %v4184
        %v4189 = vld [vmem:[%s1662 + $0x2] sm:$0xff]
        %v4190 = vld [vmem:[%s1662 + $0xa] sm:$0xff]
        %s4191 = sld [smem:[#allocation3 + $0xb1]]
        %v4192 = vstv %s4191
        %v4193 = vmul.f32 %v4192, %v4189
        %v4194 = vmul.f32 %v4192, %v4190
        %v4195 = vadd.f32 %v4145, %v4193
        %v4196 = vadd.f32 %v4146, %v4194
        %s4197 = sld [smem:[#allocation3 + $0xd5]]
        %v4198 = vstv %s4197
        %v4199 = vmul.f32 %v4198, %v4189
        %v4200 = vmul.f32 %v4198, %v4190
        %v4201 = vadd.f32 %v4159, %v4199
        %v4202 = vadd.f32 %v4160, %v4200
        %s4203 = sld [smem:[#allocation3 + $0xf9]]
        %v4204 = vstv %s4203
        %v4205 = vmul.f32 %v4204, %v4189
        %v4206 = vmul.f32 %v4204, %v4190
        %v4207 = vadd.f32 %v4173, %v4205
        %v4208 = vadd.f32 %v4174, %v4206
        %s4209 = sld [smem:[#allocation3 + $0x11d]]
        %v4210 = vstv %s4209
        %v4211 = vmul.f32 %v4210, %v4189
        %v4212 = vmul.f32 %v4210, %v4190
        %v4213 = vadd.f32 %v4187, %v4211
        %v4214 = vadd.f32 %v4188, %v4212
        %s4215 = sld [smem:[#allocation3 + $0xb2]]
        %v4216 = vstv %s4215
        %v4217 = vmul.f32 %v4216, %v4189
        %v4218 = vmul.f32 %v4216, %v4190
        %4221 = vrot.lane.b32.xlu0 %v4217, 127
        %v4222 = vpop.permute.xlu0 %4221
        %4223 = vrot.lane.b32.xlu0 %v4218, 127
        %v4224 = vpop.permute.xlu0 %4223
        %v4227 = vadd.f32 %v4195, %v4222
        %v4228 = vadd.f32 %v4196, %v4224
        %s4229 = sld [smem:[#allocation3 + $0xd6]]
        %v4230 = vstv %s4229
        %v4231 = vmul.f32 %v4230, %v4189
        %v4232 = vmul.f32 %v4230, %v4190
        %4235 = vrot.lane.b32.xlu0 %v4231, 127
        %v4236 = vpop.permute.xlu0 %4235
        %4237 = vrot.lane.b32.xlu0 %v4232, 127
        %v4238 = vpop.permute.xlu0 %4237
        %v4241 = vadd.f32 %v4201, %v4236
        %v4242 = vadd.f32 %v4202, %v4238
        %s4243 = sld [smem:[#allocation3 + $0xfa]]
        %v4244 = vstv %s4243
        %v4245 = vmul.f32 %v4244, %v4189
        %v4246 = vmul.f32 %v4244, %v4190
        %4249 = vrot.lane.b32.xlu0 %v4245, 127
        %v4250 = vpop.permute.xlu0 %4249
        %4251 = vrot.lane.b32.xlu0 %v4246, 127
        %v4252 = vpop.permute.xlu0 %4251
        %v4255 = vadd.f32 %v4207, %v4250
        %v4256 = vadd.f32 %v4208, %v4252
        %s4257 = sld [smem:[#allocation3 + $0x11e]]
        %v4258 = vstv %s4257
        %v4259 = vmul.f32 %v4258, %v4189
        %v4260 = vmul.f32 %v4258, %v4190
        %4263 = vrot.lane.b32.xlu0 %v4259, 127
        %v4264 = vpop.permute.xlu0 %4263
        %4265 = vrot.lane.b32.xlu0 %v4260, 127
        %v4266 = vpop.permute.xlu0 %4265
        %v4269 = vadd.f32 %v4213, %v4264
        %v4270 = vadd.f32 %v4214, %v4266
        %s4271 = sld [smem:[#allocation3 + $0xb3]]
        %v4272 = vstv %s4271
        %v4273 = vmul.f32 %v4272, %v4189
        %v4274 = vmul.f32 %v4272, %v4190
        %4277 = vrot.lane.b32.xlu0 %v4273, 126
        %v4278 = vpop.permute.xlu0 %4277
        %4279 = vrot.lane.b32.xlu0 %v4274, 126
        %v4280 = vpop.permute.xlu0 %4279
        %v4283 = vadd.f32 %v4227, %v4278
        %v4284 = vadd.f32 %v4228, %v4280
        %s4285 = sld [smem:[#allocation3 + $0xd7]]
        %v4286 = vstv %s4285
        %v4287 = vmul.f32 %v4286, %v4189
        %v4288 = vmul.f32 %v4286, %v4190
        %4291 = vrot.lane.b32.xlu0 %v4287, 126
        %v4292 = vpop.permute.xlu0 %4291
        %4293 = vrot.lane.b32.xlu0 %v4288, 126
        %v4294 = vpop.permute.xlu0 %4293
        %v4297 = vadd.f32 %v4241, %v4292
        %v4298 = vadd.f32 %v4242, %v4294
        %s4299 = sld [smem:[#allocation3 + $0xfb]]
        %v4300 = vstv %s4299
        %v4301 = vmul.f32 %v4300, %v4189
        %v4302 = vmul.f32 %v4300, %v4190
        %4305 = vrot.lane.b32.xlu0 %v4301, 126
        %v4306 = vpop.permute.xlu0 %4305
        %4307 = vrot.lane.b32.xlu0 %v4302, 126
        %v4308 = vpop.permute.xlu0 %4307
        %v4311 = vadd.f32 %v4255, %v4306
        %v4312 = vadd.f32 %v4256, %v4308
        %s4313 = sld [smem:[#allocation3 + $0x11f]]
        %v4314 = vstv %s4313
        %v4315 = vmul.f32 %v4314, %v4189
        %v4316 = vmul.f32 %v4314, %v4190
        %4319 = vrot.lane.b32.xlu0 %v4315, 126
        %v4320 = vpop.permute.xlu0 %4319
        %4321 = vrot.lane.b32.xlu0 %v4316, 126
        %v4322 = vpop.permute.xlu0 %4321
        %v4325 = vadd.f32 %v4269, %v4320
        %v4326 = vadd.f32 %v4270, %v4322
        %v4327 = vld [vmem:[#allocation7] sm:$0xff]
        %v4328 = vld [vmem:[#allocation7 + $0x8] sm:$0xff]
        %v4329 = vld [vmem:[#allocation8] sm:$0xff]
        %v4330 = vld [vmem:[#allocation8 + $0x8] sm:$0xff]
        %v4332 = vsel %vm2081, %v4297, 0
        %v4335 = vsel %vm2081, %v4298, 0
        %4337 = vmatprep.subr.mxu0 0.0
        %4338 = vmatpush1.msra.mxu0 0.0
        %4339 = vmatprep.subr.mxu0 0.0
        %4340 = vmatpush1.msra.mxu0 0.0
        %4341 = vmatprep.subr.mxu0 0.0
        %4342 = vmatpush1.msra.mxu0 0.0
        %4343 = vmatprep.subr.mxu0 0.0
        %4344 = vmatpush1.msra.mxu0 0.0
        %4345 = vmatprep.subr.mxu0 0.0
        %4346 = vmatpush1.msra.mxu0 0.0
        %4347 = vmatprep.subr.mxu0 0.0
        %4348 = vmatpush1.msra.mxu0 0.0
        %4349 = vmatprep.subr.mxu0 0.0
        %4350 = vmatpush1.msra.mxu0 0.0
        %4351 = vmatprep.subr.mxu0 0.0
        %4352 = vmatpush1.msra.mxu0 0.0
        %4353 = vmatprep.subr.mxu0 0.0
        %4354 = vmatpush1.msra.mxu0 0.0
        %4355 = vmatprep.subr.mxu0 0.0
        %4356 = vmatpush1.msra.mxu0 0.0
        %4357 = vmatprep.subr.mxu0 0.0
        %4358 = vmatpush1.msra.mxu0 0.0
        %4359 = vmatprep.subr.mxu0 0.0
        %4360 = vmatpush1.msra.mxu0 0.0
        %4361 = vmatprep.subr.mxu0 0.0
        %4362 = vmatpush1.msra.mxu0 0.0
        %4363 = vmatprep.subr.mxu0 0.0
        %4364 = vmatpush1.msra.mxu0 0.0
        %4365 = vmatprep.subr.mxu0 0.0
        %4366 = vmatpush1.msra.mxu0 %v4330
        %4367 = vmatprep.subr.mxu0 0.0
        %4368 = vmatpush1.msra.mxu0 %v4329
        %4369 = vmatprep.subr.mxu0 0.0
        %4370 = vmatpush2.msra.mxu0 0.0
        %4371 = vmatprep.subr.mxu0 0.0
        %4372 = vmatpush2.msra.mxu0 0.0
        %4373 = vmatprep.subr.mxu0 0.0
        %4374 = vmatpush2.msra.mxu0 0.0
        %4375 = vmatprep.subr.mxu0 0.0
        %4376 = vmatpush2.msra.mxu0 0.0
        %4377 = vmatprep.subr.mxu0 0.0
        %4378 = vmatpush2.msra.mxu0 0.0
        %4379 = vmatprep.subr.mxu0 0.0
        %4380 = vmatpush2.msra.mxu0 0.0
        %4381 = vmatprep.subr.mxu0 0.0
        %4382 = vmatpush2.msra.mxu0 0.0
        %4383 = vmatprep.subr.mxu0 0.0
        %4384 = vmatpush2.msra.mxu0 0.0
        %4385 = vmatprep.subr.mxu0 0.0
        %4386 = vmatpush2.msra.mxu0 0.0
        %4387 = vmatprep.subr.mxu0 0.0
        %4388 = vmatpush2.msra.mxu0 0.0
        %4389 = vmatprep.subr.mxu0 0.0
        %4390 = vmatpush2.msra.mxu0 0.0
        %4391 = vmatprep.subr.mxu0 0.0
        %4392 = vmatpush2.msra.mxu0 0.0
        %4393 = vmatprep.subr.mxu0 0.0
        %4394 = vmatpush2.msra.mxu0 0.0
        %4395 = vmatprep.subr.mxu0 0.0
        %4396 = vmatpush2.msra.mxu0 0.0
        %4397 = vmatprep.subr.mxu0 0.0
        %4398 = vmatpush2.msra.mxu0 0.0
        %4399 = vmatprep.subr.mxu0 0.0
        %4400 = vmatpush2.msra.mxu0 0.0
        %4401 = vmatprep.mubr.f32.mxu0 0.0
        %4402 = vmatmul.mubr.f32.gmra.mxu0 %v4332
        %v4403 = vpop.f32.mrf.mxu0
        %v4404 = vadd.f32 0.0, %v4403
        %v4405 = vpop.f32.mrf.mxu0
        %4406 = vmatprep.mubr.f32.mxu0 0.0
        %4407 = vmatmul.mubr.f32.gmra.mxu0 %v4335
        %v4408 = vpop.f32.mrf.mxu0
        %v4409 = vadd.f32 0.0, %v4408
        %v4410 = vpop.f32.mrf.mxu0
        %4411 = vdwg.mxu0
        %v4413 = vsel %vm2081, %v4283, 0
        %v4416 = vsel %vm2081, %v4284, 0
        %4418 = vmatprep.subr.mxu0 0.0
        %4419 = vmatpush1.msra.mxu0 0.0
        %4420 = vmatprep.subr.mxu0 0.0
        %4421 = vmatpush1.msra.mxu0 0.0
        %4422 = vmatprep.subr.mxu0 0.0
        %4423 = vmatpush1.msra.mxu0 0.0
        %4424 = vmatprep.subr.mxu0 0.0
        %4425 = vmatpush1.msra.mxu0 0.0
        %4426 = vmatprep.subr.mxu0 0.0
        %4427 = vmatpush1.msra.mxu0 0.0
        %4428 = vmatprep.subr.mxu0 0.0
        %4429 = vmatpush1.msra.mxu0 0.0
        %4430 = vmatprep.subr.mxu0 0.0
        %4431 = vmatpush1.msra.mxu0 0.0
        %4432 = vmatprep.subr.mxu0 0.0
        %4433 = vmatpush1.msra.mxu0 0.0
        %4434 = vmatprep.subr.mxu0 0.0
        %4435 = vmatpush1.msra.mxu0 0.0
        %4436 = vmatprep.subr.mxu0 0.0
        %4437 = vmatpush1.msra.mxu0 0.0
        %4438 = vmatprep.subr.mxu0 0.0
        %4439 = vmatpush1.msra.mxu0 0.0
        %4440 = vmatprep.subr.mxu0 0.0
        %4441 = vmatpush1.msra.mxu0 0.0
        %4442 = vmatprep.subr.mxu0 0.0
        %4443 = vmatpush1.msra.mxu0 0.0
        %4444 = vmatprep.subr.mxu0 0.0
        %4445 = vmatpush1.msra.mxu0 0.0
        %4446 = vmatprep.subr.mxu0 0.0
        %4447 = vmatpush1.msra.mxu0 %v4328
        %4448 = vmatprep.subr.mxu0 0.0
        %4449 = vmatpush1.msra.mxu0 %v4327
        %4450 = vmatprep.subr.mxu0 0.0
        %4451 = vmatpush2.msra.mxu0 0.0
        %4452 = vmatprep.subr.mxu0 0.0
        %4453 = vmatpush2.msra.mxu0 0.0
        %4454 = vmatprep.subr.mxu0 0.0
        %4455 = vmatpush2.msra.mxu0 0.0
        %4456 = vmatprep.subr.mxu0 0.0
        %4457 = vmatpush2.msra.mxu0 0.0
        %4458 = vmatprep.subr.mxu0 0.0
        %4459 = vmatpush2.msra.mxu0 0.0
        %4460 = vmatprep.subr.mxu0 0.0
        %4461 = vmatpush2.msra.mxu0 0.0
        %4462 = vmatprep.subr.mxu0 0.0
        %4463 = vmatpush2.msra.mxu0 0.0
        %4464 = vmatprep.subr.mxu0 0.0
        %4465 = vmatpush2.msra.mxu0 0.0
        %4466 = vmatprep.subr.mxu0 0.0
        %4467 = vmatpush2.msra.mxu0 0.0
        %4468 = vmatprep.subr.mxu0 0.0
        %4469 = vmatpush2.msra.mxu0 0.0
        %4470 = vmatprep.subr.mxu0 0.0
        %4471 = vmatpush2.msra.mxu0 0.0
        %4472 = vmatprep.subr.mxu0 0.0
        %4473 = vmatpush2.msra.mxu0 0.0
        %4474 = vmatprep.subr.mxu0 0.0
        %4475 = vmatpush2.msra.mxu0 0.0
        %4476 = vmatprep.subr.mxu0 0.0
        %4477 = vmatpush2.msra.mxu0 0.0
        %4478 = vmatprep.subr.mxu0 0.0
        %4479 = vmatpush2.msra.mxu0 0.0
        %4480 = vmatprep.subr.mxu0 0.0
        %4481 = vmatpush2.msra.mxu0 0.0
        %4482 = vmatprep.mubr.f32.mxu0 0.0
        %4483 = vmatmul.mubr.f32.gmra.mxu0 %v4413
        %v4484 = vpop.f32.mrf.mxu0
        %v4485 = vadd.f32 %v4404, %v4484
        %v4486 = vpop.f32.mrf.mxu0
        %4487 = vmatprep.mubr.f32.mxu0 0.0
        %4488 = vmatmul.mubr.f32.gmra.mxu0 %v4416
        %v4489 = vpop.f32.mrf.mxu0
        %v4490 = vadd.f32 %v4409, %v4489
        %v4491 = vpop.f32.mrf.mxu0
        %4492 = vdwg.mxu0
        %v4494 = vsel %vm2081, %v4325, 0
        %v4497 = vsel %vm2081, %v4326, 0
        %4499 = vmatprep.subr.mxu0 0.0
        %4500 = vmatpush1.msra.mxu0 0.0
        %4501 = vmatprep.subr.mxu0 0.0
        %4502 = vmatpush1.msra.mxu0 0.0
        %4503 = vmatprep.subr.mxu0 0.0
        %4504 = vmatpush1.msra.mxu0 0.0
        %4505 = vmatprep.subr.mxu0 0.0
        %4506 = vmatpush1.msra.mxu0 0.0
        %4507 = vmatprep.subr.mxu0 0.0
        %4508 = vmatpush1.msra.mxu0 0.0
        %4509 = vmatprep.subr.mxu0 0.0
        %4510 = vmatpush1.msra.mxu0 0.0
        %4511 = vmatprep.subr.mxu0 0.0
        %4512 = vmatpush1.msra.mxu0 0.0
        %4513 = vmatprep.subr.mxu0 0.0
        %4514 = vmatpush1.msra.mxu0 0.0
        %4515 = vmatprep.subr.mxu0 0.0
        %4516 = vmatpush1.msra.mxu0 0.0
        %4517 = vmatprep.subr.mxu0 0.0
        %4518 = vmatpush1.msra.mxu0 0.0
        %4519 = vmatprep.subr.mxu0 0.0
        %4520 = vmatpush1.msra.mxu0 0.0
        %4521 = vmatprep.subr.mxu0 0.0
        %4522 = vmatpush1.msra.mxu0 0.0
        %4523 = vmatprep.subr.mxu0 0.0
        %4524 = vmatpush1.msra.mxu0 0.0
        %4525 = vmatprep.subr.mxu0 0.0
        %4526 = vmatpush1.msra.mxu0 0.0
        %4527 = vmatprep.subr.mxu0 0.0
        %4528 = vmatpush1.msra.mxu0 %v4330
        %4529 = vmatprep.subr.mxu0 0.0
        %4530 = vmatpush1.msra.mxu0 %v4329
        %4531 = vmatprep.subr.mxu0 0.0
        %4532 = vmatpush2.msra.mxu0 0.0
        %4533 = vmatprep.subr.mxu0 0.0
        %4534 = vmatpush2.msra.mxu0 0.0
        %4535 = vmatprep.subr.mxu0 0.0
        %4536 = vmatpush2.msra.mxu0 0.0
        %4537 = vmatprep.subr.mxu0 0.0
        %4538 = vmatpush2.msra.mxu0 0.0
        %4539 = vmatprep.subr.mxu0 0.0
        %4540 = vmatpush2.msra.mxu0 0.0
        %4541 = vmatprep.subr.mxu0 0.0
        %4542 = vmatpush2.msra.mxu0 0.0
        %4543 = vmatprep.subr.mxu0 0.0
        %4544 = vmatpush2.msra.mxu0 0.0
        %4545 = vmatprep.subr.mxu0 0.0
        %4546 = vmatpush2.msra.mxu0 0.0
        %4547 = vmatprep.subr.mxu0 0.0
        %4548 = vmatpush2.msra.mxu0 0.0
        %4549 = vmatprep.subr.mxu0 0.0
        %4550 = vmatpush2.msra.mxu0 0.0
        %4551 = vmatprep.subr.mxu0 0.0
        %4552 = vmatpush2.msra.mxu0 0.0
        %4553 = vmatprep.subr.mxu0 0.0
        %4554 = vmatpush2.msra.mxu0 0.0
        %4555 = vmatprep.subr.mxu0 0.0
        %4556 = vmatpush2.msra.mxu0 0.0
        %4557 = vmatprep.subr.mxu0 0.0
        %4558 = vmatpush2.msra.mxu0 0.0
        %4559 = vmatprep.subr.mxu0 0.0
        %4560 = vmatpush2.msra.mxu0 0.0
        %4561 = vmatprep.subr.mxu0 0.0
        %4562 = vmatpush2.msra.mxu0 0.0
        %4563 = vmatprep.mubr.f32.mxu0 0.0
        %4564 = vmatmul.mubr.f32.gmra.mxu0 %v4494
        %v4565 = vpop.f32.mrf.mxu0
        %v4566 = vadd.f32 0.0, %v4565
        %v4567 = vpop.f32.mrf.mxu0
        %4568 = vmatprep.mubr.f32.mxu0 0.0
        %4569 = vmatmul.mubr.f32.gmra.mxu0 %v4497
        %v4570 = vpop.f32.mrf.mxu0
        %v4571 = vadd.f32 0.0, %v4570
        %v4572 = vpop.f32.mrf.mxu0
        %4573 = vdwg.mxu0
        %v4575 = vsel %vm2081, %v4311, 0
        %v4578 = vsel %vm2081, %v4312, 0
        %4580 = vmatprep.subr.mxu0 0.0
        %4581 = vmatpush1.msra.mxu0 0.0
        %4582 = vmatprep.subr.mxu0 0.0
        %4583 = vmatpush1.msra.mxu0 0.0
        %4584 = vmatprep.subr.mxu0 0.0
        %4585 = vmatpush1.msra.mxu0 0.0
        %4586 = vmatprep.subr.mxu0 0.0
        %4587 = vmatpush1.msra.mxu0 0.0
        %4588 = vmatprep.subr.mxu0 0.0
        %4589 = vmatpush1.msra.mxu0 0.0
        %4590 = vmatprep.subr.mxu0 0.0
        %4591 = vmatpush1.msra.mxu0 0.0
        %4592 = vmatprep.subr.mxu0 0.0
        %4593 = vmatpush1.msra.mxu0 0.0
        %4594 = vmatprep.subr.mxu0 0.0
        %4595 = vmatpush1.msra.mxu0 0.0
        %4596 = vmatprep.subr.mxu0 0.0
        %4597 = vmatpush1.msra.mxu0 0.0
        %4598 = vmatprep.subr.mxu0 0.0
        %4599 = vmatpush1.msra.mxu0 0.0
        %4600 = vmatprep.subr.mxu0 0.0
        %4601 = vmatpush1.msra.mxu0 0.0
        %4602 = vmatprep.subr.mxu0 0.0
        %4603 = vmatpush1.msra.mxu0 0.0
        %4604 = vmatprep.subr.mxu0 0.0
        %4605 = vmatpush1.msra.mxu0 0.0
        %4606 = vmatprep.subr.mxu0 0.0
        %4607 = vmatpush1.msra.mxu0 0.0
        %4608 = vmatprep.subr.mxu0 0.0
        %4609 = vmatpush1.msra.mxu0 %v4328
        %4610 = vmatprep.subr.mxu0 0.0
        %4611 = vmatpush1.msra.mxu0 %v4327
        %4612 = vmatprep.subr.mxu0 0.0
        %4613 = vmatpush2.msra.mxu0 0.0
        %4614 = vmatprep.subr.mxu0 0.0
        %4615 = vmatpush2.msra.mxu0 0.0
        %4616 = vmatprep.subr.mxu0 0.0
        %4617 = vmatpush2.msra.mxu0 0.0
        %4618 = vmatprep.subr.mxu0 0.0
        %4619 = vmatpush2.msra.mxu0 0.0
        %4620 = vmatprep.subr.mxu0 0.0
        %4621 = vmatpush2.msra.mxu0 0.0
        %4622 = vmatprep.subr.mxu0 0.0
        %4623 = vmatpush2.msra.mxu0 0.0
        %4624 = vmatprep.subr.mxu0 0.0
        %4625 = vmatpush2.msra.mxu0 0.0
        %4626 = vmatprep.subr.mxu0 0.0
        %4627 = vmatpush2.msra.mxu0 0.0
        %4628 = vmatprep.subr.mxu0 0.0
        %4629 = vmatpush2.msra.mxu0 0.0
        %4630 = vmatprep.subr.mxu0 0.0
        %4631 = vmatpush2.msra.mxu0 0.0
        %4632 = vmatprep.subr.mxu0 0.0
        %4633 = vmatpush2.msra.mxu0 0.0
        %4634 = vmatprep.subr.mxu0 0.0
        %4635 = vmatpush2.msra.mxu0 0.0
        %4636 = vmatprep.subr.mxu0 0.0
        %4637 = vmatpush2.msra.mxu0 0.0
        %4638 = vmatprep.subr.mxu0 0.0
        %4639 = vmatpush2.msra.mxu0 0.0
        %4640 = vmatprep.subr.mxu0 0.0
        %4641 = vmatpush2.msra.mxu0 0.0
        %4642 = vmatprep.subr.mxu0 0.0
        %4643 = vmatpush2.msra.mxu0 0.0
        %4644 = vmatprep.mubr.f32.mxu0 0.0
        %4645 = vmatmul.mubr.f32.gmra.mxu0 %v4575
        %v4646 = vpop.f32.mrf.mxu0
        %v4647 = vadd.f32 %v4566, %v4646
        %v4648 = vpop.f32.mrf.mxu0
        %4649 = vmatprep.mubr.f32.mxu0 0.0
        %4650 = vmatmul.mubr.f32.gmra.mxu0 %v4578
        %v4651 = vpop.f32.mrf.mxu0
        %v4652 = vadd.f32 %v4571, %v4651
        %v4653 = vpop.f32.mrf.mxu0
        %4654 = vdwg.mxu0
        %v4657 = vcombine.high %v4485, %v4485
        %v4659 = vunpack.c.l.s4 1966171168
        %v4660 = vunpack.c.0.s8 %v4659
        %v4661 = vlaneseq
        %v4662 = vshrl.u32 %v4661, 7
        %v4663 = vsub.s32 %v4660, %v4662
        %v4664 = vrot.slane %v4485, %v4663
        %v4666 = vunpack.c.l.s4 1966171168
        %v4667 = vunpack.c.0.s8 %v4666
        %v4668 = vlaneseq
        %v4669 = vshrl.u32 %v4668, 7
        %v4670 = vsub.s32 %v4667, %v4669
        %v4671 = vrot.slane %v4657, %v4670
        %v4672 = vcombine.high %v4664, %v4664
        %v4673 = vcombine.high %v4671, %v4671
        %v4675 = vunpack.c.l.s4 1966171168
        %v4676 = vunpack.c.0.s8 %v4675
        %v4677 = vlaneseq
        %v4678 = vshrl.u32 %v4677, 7
        %v4679 = vsub.s32 %v4676, %v4678
        %v4680 = vrot.slane %v4664, %v4679
        %v4682 = vunpack.c.l.s4 1966171168
        %v4683 = vunpack.c.0.s8 %v4682
        %v4684 = vlaneseq
        %v4685 = vshrl.u32 %v4684, 7
        %v4686 = vsub.s32 %v4683, %v4685
        %v4687 = vrot.slane %v4671, %v4686
        %v4689 = vunpack.c.l.s4 1966171168
        %v4690 = vunpack.c.0.s8 %v4689
        %v4691 = vlaneseq
        %v4692 = vshrl.u32 %v4691, 7
        %v4693 = vsub.s32 %v4690, %v4692
        %v4694 = vrot.slane %v4672, %v4693
        %v4696 = vunpack.c.l.s4 1966171168
        %v4697 = vunpack.c.0.s8 %v4696
        %v4698 = vlaneseq
        %v4699 = vshrl.u32 %v4698, 7
        %v4700 = vsub.s32 %v4697, %v4699
        %v4701 = vrot.slane %v4673, %v4700
        %v4702 = vcombine.high %v4680, %v4680
        %v4703 = vcombine.high %v4687, %v4687
        %v4704 = vcombine.high %v4694, %v4694
        %v4705 = vcombine.high %v4701, %v4701
        %v4706 = vcombine.high %v4490, %v4490
        %v4708 = vunpack.c.l.s4 1966171168
        %v4709 = vunpack.c.0.s8 %v4708
        %v4710 = vlaneseq
        %v4711 = vshrl.u32 %v4710, 7
        %v4712 = vsub.s32 %v4709, %v4711
        %v4713 = vrot.slane %v4490, %v4712
        %v4715 = vunpack.c.l.s4 1966171168
        %v4716 = vunpack.c.0.s8 %v4715
        %v4717 = vlaneseq
        %v4718 = vshrl.u32 %v4717, 7
        %v4719 = vsub.s32 %v4716, %v4718
        %v4720 = vrot.slane %v4706, %v4719
        %v4721 = vcombine.high %v4713, %v4713
        %v4722 = vcombine.high %v4720, %v4720
        %v4724 = vunpack.c.l.s4 1966171168
        %v4725 = vunpack.c.0.s8 %v4724
        %v4726 = vlaneseq
        %v4727 = vshrl.u32 %v4726, 7
        %v4728 = vsub.s32 %v4725, %v4727
        %v4729 = vrot.slane %v4713, %v4728
        %v4731 = vunpack.c.l.s4 1966171168
        %v4732 = vunpack.c.0.s8 %v4731
        %v4733 = vlaneseq
        %v4734 = vshrl.u32 %v4733, 7
        %v4735 = vsub.s32 %v4732, %v4734
        %v4736 = vrot.slane %v4720, %v4735
        %v4738 = vunpack.c.l.s4 1966171168
        %v4739 = vunpack.c.0.s8 %v4738
        %v4740 = vlaneseq
        %v4741 = vshrl.u32 %v4740, 7
        %v4742 = vsub.s32 %v4739, %v4741
        %v4743 = vrot.slane %v4721, %v4742
        %v4745 = vunpack.c.l.s4 1966171168
        %v4746 = vunpack.c.0.s8 %v4745
        %v4747 = vlaneseq
        %v4748 = vshrl.u32 %v4747, 7
        %v4749 = vsub.s32 %v4746, %v4748
        %v4750 = vrot.slane %v4722, %v4749
        %v4751 = vcombine.high %v4729, %v4729
        %v4752 = vcombine.high %v4736, %v4736
        %v4753 = vcombine.high %v4743, %v4743
        %v4754 = vcombine.high %v4750, %v4750
        %s4771 = scalar_lea.vmem %s268, 32 [#allocation11]
        %4772 = vst.msk [vmem:[%s4771] sm:$0x1] %vm2522, %v4680
        %4773 = vst.msk [vmem:[%s4771 + $0x2] sm:$0x1] %vm2522, %v4694
        %4774 = vst.msk [vmem:[%s4771 + $0x4] sm:$0x1] %vm2522, %v4702
        %4775 = vst.msk [vmem:[%s4771 + $0x6] sm:$0x1] %vm2522, %v4704
        %4776 = vst.msk [vmem:[%s4771 + $0x8] sm:$0x1] %vm2522, %v4687
        %4777 = vst.msk [vmem:[%s4771 + $0xa] sm:$0x1] %vm2522, %v4701
        %4778 = vst.msk [vmem:[%s4771 + $0xc] sm:$0x1] %vm2522, %v4703
        %4779 = vst.msk [vmem:[%s4771 + $0xe] sm:$0x1] %vm2522, %v4705
        %4780 = vst.msk [vmem:[%s4771 + $0x10] sm:$0x1] %vm2522, %v4729
        %4781 = vst.msk [vmem:[%s4771 + $0x12] sm:$0x1] %vm2522, %v4743
        %4782 = vst.msk [vmem:[%s4771 + $0x14] sm:$0x1] %vm2522, %v4751
        %4783 = vst.msk [vmem:[%s4771 + $0x16] sm:$0x1] %vm2522, %v4753
        %4784 = vst.msk [vmem:[%s4771 + $0x18] sm:$0x1] %vm2522, %v4736
        %4785 = vst.msk [vmem:[%s4771 + $0x1a] sm:$0x1] %vm2522, %v4750
        %4786 = vst.msk [vmem:[%s4771 + $0x1c] sm:$0x1] %vm2522, %v4752
        %4787 = vst.msk [vmem:[%s4771 + $0x1e] sm:$0x1] %vm2522, %v4754
        %v4790 = vcombine.high %v4647, %v4647
        %v4792 = vunpack.c.l.s4 1966171168
        %v4793 = vunpack.c.0.s8 %v4792
        %v4794 = vlaneseq
        %v4795 = vshrl.u32 %v4794, 7
        %v4796 = vsub.s32 %v4793, %v4795
        %v4797 = vrot.slane %v4647, %v4796
        %v4799 = vunpack.c.l.s4 1966171168
        %v4800 = vunpack.c.0.s8 %v4799
        %v4801 = vlaneseq
        %v4802 = vshrl.u32 %v4801, 7
        %v4803 = vsub.s32 %v4800, %v4802
        %v4804 = vrot.slane %v4790, %v4803
        %v4805 = vcombine.high %v4797, %v4797
        %v4806 = vcombine.high %v4804, %v4804
        %v4808 = vunpack.c.l.s4 1966171168
        %v4809 = vunpack.c.0.s8 %v4808
        %v4810 = vlaneseq
        %v4811 = vshrl.u32 %v4810, 7
        %v4812 = vsub.s32 %v4809, %v4811
        %v4813 = vrot.slane %v4797, %v4812
        %v4815 = vunpack.c.l.s4 1966171168
        %v4816 = vunpack.c.0.s8 %v4815
        %v4817 = vlaneseq
        %v4818 = vshrl.u32 %v4817, 7
        %v4819 = vsub.s32 %v4816, %v4818
        %v4820 = vrot.slane %v4804, %v4819
        %v4822 = vunpack.c.l.s4 1966171168
        %v4823 = vunpack.c.0.s8 %v4822
        %v4824 = vlaneseq
        %v4825 = vshrl.u32 %v4824, 7
        %v4826 = vsub.s32 %v4823, %v4825
        %v4827 = vrot.slane %v4805, %v4826
        %v4829 = vunpack.c.l.s4 1966171168
        %v4830 = vunpack.c.0.s8 %v4829
        %v4831 = vlaneseq
        %v4832 = vshrl.u32 %v4831, 7
        %v4833 = vsub.s32 %v4830, %v4832
        %v4834 = vrot.slane %v4806, %v4833
        %v4835 = vcombine.high %v4813, %v4813
        %v4836 = vcombine.high %v4820, %v4820
        %v4837 = vcombine.high %v4827, %v4827
        %v4838 = vcombine.high %v4834, %v4834
        %v4839 = vcombine.high %v4652, %v4652
        %v4841 = vunpack.c.l.s4 1966171168
        %v4842 = vunpack.c.0.s8 %v4841
        %v4843 = vlaneseq
        %v4844 = vshrl.u32 %v4843, 7
        %v4845 = vsub.s32 %v4842, %v4844
        %v4846 = vrot.slane %v4652, %v4845
        %v4848 = vunpack.c.l.s4 1966171168
        %v4849 = vunpack.c.0.s8 %v4848
        %v4850 = vlaneseq
        %v4851 = vshrl.u32 %v4850, 7
        %v4852 = vsub.s32 %v4849, %v4851
        %v4853 = vrot.slane %v4839, %v4852
        %v4854 = vcombine.high %v4846, %v4846
        %v4855 = vcombine.high %v4853, %v4853
        %v4857 = vunpack.c.l.s4 1966171168
        %v4858 = vunpack.c.0.s8 %v4857
        %v4859 = vlaneseq
        %v4860 = vshrl.u32 %v4859, 7
        %v4861 = vsub.s32 %v4858, %v4860
        %v4862 = vrot.slane %v4846, %v4861
        %v4864 = vunpack.c.l.s4 1966171168
        %v4865 = vunpack.c.0.s8 %v4864
        %v4866 = vlaneseq
        %v4867 = vshrl.u32 %v4866, 7
        %v4868 = vsub.s32 %v4865, %v4867
        %v4869 = vrot.slane %v4853, %v4868
        %v4871 = vunpack.c.l.s4 1966171168
        %v4872 = vunpack.c.0.s8 %v4871
        %v4873 = vlaneseq
        %v4874 = vshrl.u32 %v4873, 7
        %v4875 = vsub.s32 %v4872, %v4874
        %v4876 = vrot.slane %v4854, %v4875
        %v4878 = vunpack.c.l.s4 1966171168
        %v4879 = vunpack.c.0.s8 %v4878
        %v4880 = vlaneseq
        %v4881 = vshrl.u32 %v4880, 7
        %v4882 = vsub.s32 %v4879, %v4881
        %v4883 = vrot.slane %v4855, %v4882
        %v4884 = vcombine.high %v4862, %v4862
        %v4885 = vcombine.high %v4869, %v4869
        %v4886 = vcombine.high %v4876, %v4876
        %v4887 = vcombine.high %v4883, %v4883
        %4904 = vst.msk [vmem:[%s4771 + $0x1] sm:$0x1] %vm2522, %v4813
        %4905 = vst.msk [vmem:[%s4771 + $0x3] sm:$0x1] %vm2522, %v4827
        %4906 = vst.msk [vmem:[%s4771 + $0x5] sm:$0x1] %vm2522, %v4835
        %4907 = vst.msk [vmem:[%s4771 + $0x7] sm:$0x1] %vm2522, %v4837
        %4908 = vst.msk [vmem:[%s4771 + $0x9] sm:$0x1] %vm2522, %v4820
        %4909 = vst.msk [vmem:[%s4771 + $0xb] sm:$0x1] %vm2522, %v4834
        %4910 = vst.msk [vmem:[%s4771 + $0xd] sm:$0x1] %vm2522, %v4836
        %4911 = vst.msk [vmem:[%s4771 + $0xf] sm:$0x1] %vm2522, %v4838
        %4912 = vst.msk [vmem:[%s4771 + $0x11] sm:$0x1] %vm2522, %v4862
        %4913 = vst.msk [vmem:[%s4771 + $0x13] sm:$0x1] %vm2522, %v4876
        %4914 = vst.msk [vmem:[%s4771 + $0x15] sm:$0x1] %vm2522, %v4884
        %4915 = vst.msk [vmem:[%s4771 + $0x17] sm:$0x1] %vm2522, %v4886
        %4916 = vst.msk [vmem:[%s4771 + $0x19] sm:$0x1] %vm2522, %v4869
        %4917 = vst.msk [vmem:[%s4771 + $0x1b] sm:$0x1] %vm2522, %v4883
        %4918 = vst.msk [vmem:[%s4771 + $0x1d] sm:$0x1] %vm2522, %v4885
        %4919 = vst.msk [vmem:[%s4771 + $0x1f] sm:$0x1] %vm2522, %v4887
        %s4920 = sand.u32 %s132, 1
        %s4921 = scalar_lea.sflag [#allocation5], %s4920
        %s4922 = sand.u32 %s132, 1
        %s4923 = smul.addr %s4922, 64
        %s4924 = scalar_lea.vmem [#allocation11], %s4923
        // Predicated region
        $region53: #{tpu_custom_call.1} parent=35 // pred_check
          %p4925 = pneg %p142
        $region54: #{tpu_custom_call.1} parent=35 // pred_check_branch
          %4927 = sbr.rel (%p4925) target = $region56
        $region55: #{tpu_custom_call.1} parent=35 // pred_region
          %s4928 = smul.u32 16, %s26
          %s4930 = ssub.s32 1024, 1024
          %4931 = vsyncadd %s4921, %s4930
          %s4932 = smul.addr %s25, 32
          %s4933 = sadd.s32 %s4928, %s4932
          %s4934 = smul.addr %s4933, 32
          %s4935 = scalar_lea.hbm %s4, %s4934
          %s4936 = sshll.u32 %s4924, 4
          %s4937 = int_to_ptr.vmem [resolvable:$true] %s4936
          %4942 = dma.vmem_to_hbm [thread:$0]  %s4937, 1024, %s4935, %s4921, 32, 32, 2
        $region56: #{tpu_custom_call.1} parent=35 // pred_fallthru
          _
      $region36: #{tpu_custom_call.1} parent=5 // pred_fallthru
        _
      %p4943 = scmp.le.s32.totalorder 2, %s16
      // Predicated region
      $region57: #{tpu_custom_call.1} parent=5 // pred_check
        %p4944 = pneg %p4943
      $region58: #{tpu_custom_call.1} parent=5 // pred_check_branch
        %4946 = sbr.rel (%p4944) target = $region60
      $region59: #{tpu_custom_call.1} parent=5 // pred_region
        %s4947 = ssub.s32 %s16, 2
        // Predicated region
        $region61: #{tpu_custom_call.1} parent=59 // pred_check
          %p4948 = pneg %p148
        $region62: #{tpu_custom_call.1} parent=59 // pred_check_branch
          %4950 = sbr.rel (%p4948) target = $region64
        $region63: #{tpu_custom_call.1} parent=59 // pred_region
          %s4951 = sand.u32 %s133, 1
          %s4952 = scalar_lea.sflag [#allocation5], %s4951
          %s4953 = sand.u32 %s133, 1
          %s4954 = smul.addr %s4953, 64
          %s4955 = scalar_lea.vmem [#allocation11], %s4954
          %4956 = dma.done %s4952, 1024
        $region64: #{tpu_custom_call.1} parent=59 // pred_fallthru
          _
      $region60: #{tpu_custom_call.1} parent=5 // pred_fallthru
        _
    $region6: #{tpu_custom_call.1} parent=1 // loop_footer
      %s20 = sadd.s32 1, %s16
    $region7: #{tpu_custom_call.1} parent=1 // loop_footer_branch
      %15 = sbr.rel target = $region3
    $region8: #{tpu_custom_call.1} parent=1 // loop_exit
      _
    %4957 = vsyncpa [#allocation4], 1
    %s4958 = scalar_lea.sflag [#allocation4], 1
    %4959 = vsyncpa %s4958, 1
    %4960 = vsyncpa [#allocation9], 1
    %4961 = vsyncpa [#allocation5], 1
    %s4962 = scalar_lea.sflag [#allocation5], 1
    %4963 = vsyncpa %s4962, 1
    %4964 = vsyncpa [#allocation6], 1
    %s4965 = scalar_lea.sflag [#allocation6], 1
    %4966 = vsyncpa %s4965, 1

</llo_original>
